<compile_context>
chip_gen: v7x
topology: tpu7x:2x2x1
jax: 0.10.0
libtpu: 0.0.40
codegen_flags: <defaults>
</compile_context>

<pallas_src>
import functools

import jax
import jax.numpy as jnp
from jax.experimental import pallas as pl
from jax.experimental.pallas import tpu as pltpu

DNCNN_HIDDENS = 18
CHANNELS = 32          # complex hidden channels
BN_EPS = 1e-5


# ----------------------------------------------------------------------------
# Pallas kernel: one grid step == one layer of the 20-layer network
# ----------------------------------------------------------------------------
def _dncnn_stage_kernel(x_ref, w_ref, b_ref, bn_ref, out_ref, act_ref,
                        *, nbatch, height, width, chan, eps):
    """Per grid step refs:
      x_ref   : (N, H, W, 2)        raw input (real, imag); resident; read at step 0
                                    (prologue) and at the last step (residual)
      w_ref   : (1, 3, 3*2C, 2C)    bf16 block-complex conv weight, kx taps K-fused
      b_ref   : (1, 1, 2C)          conv bias [br | bi] (f32)
      bn_ref  : (1, 3, 2C)          rows: [Wrr|Wii], [Wri|Wri], [Br|Bi] (f32)
      out_ref : (N, H, W, 2)        final residual output x - net(x), written last step
      act_ref : VMEM f32 (N, H+2, W+2, 2C): zero halo, persists across grid steps
    """
    layer = pl.program_id(0)
    last = pl.num_programs(0) - 1
    c2 = 2 * chan
    rows = nbatch * height * width

    # --- step-0 prologue: stage the raw 2-channel input into the activation scratch.
    # Real -> channel 0, imag -> channel 1 (conv1's weight block has only these two
    # K rows non-zero), so no 32x-inflated input is ever materialised.
    @pl.when(layer == 0)
    def _():
        act_ref[...] = jnp.zeros_like(act_ref)
        act_ref[:, 1:height + 1, 1:width + 1, 0:2] = x_ref[...]

    # --- block-complex 3x3 conv -------------------------------------------------
    # Per kernel-row im2col: the 3 kx taps are concatenated on the lane axis giving a
    # (rows, 3*2C = 192) bf16 operand, so each layer is 3 MXU matmuls with K = 192
    # (instead of 9 with K = 64), accumulated in f32.
    # (conv1 / conv3 reuse this generic path via zero-padded weight blocks; the ~5%
    #  wasted MXU work on those 2 of 20 layers is accepted to keep one code path.)
    acc = jnp.zeros((rows, c2), jnp.float32)
    for ky in range(3):
        win = jnp.concatenate(
            [act_ref[:, ky:ky + height, kx:kx + width, :] for kx in range(3)],
            axis=-1).reshape(rows, 3 * c2)
        acc = acc + jnp.dot(win.astype(jnp.bfloat16), w_ref[0, ky],
                            preferred_element_type=jnp.float32)
    acc = acc + b_ref[0]                      # [br | bi]

    def swap(v):
        # Swap the [real | imag] halves along the lane axis.
        # TODO(synk): pltpu.roll(v, chan, axis=-1) would move this to the XLU; kept as a
        # lane concatenate for lowering robustness at the 64-lane (half-vreg) width.
        return jnp.concatenate([v[:, chan:], v[:, :chan]], axis=1)

    # --- layer 0 (conv1): complex ReLU only --------------------------------------
    @pl.when(layer == 0)
    def _():
        y = jnp.maximum(acc, 0.0)
        act_ref[:, 1:height + 1, 1:width + 1, :] = y.reshape(
            nbatch, height, width, c2)

    # --- hidden layers: ComplexBatchNorm2d (batch stats) + complex ReLU ----------
    @pl.when(jnp.logical_and(layer > 0, layer < last))
    def _():
        mean = jnp.mean(acc, axis=0, keepdims=True)            # [mr  | mi ]
        z = acc - mean
        z_sw = swap(z)                                         # [zi  | zr ]
        diag = jnp.mean(z * z, axis=0, keepdims=True) + eps    # [Crr | Cii]
        cross = jnp.mean(z * z_sw, axis=0, keepdims=True)      # [Cri | Cri]
        diag_sw = swap(diag)                                   # [Cii | Crr]
        det = diag * diag_sw - cross * cross
        s = jnp.sqrt(det)
        t = jnp.sqrt(diag + diag_sw + 2.0 * s)
        inv_st = 1.0 / (s * t)
        r_diag = (diag_sw + s) * inv_st                        # [Rrr | Rii]
        r_off = -cross * inv_st                                # [Rri | Rri]
        # fold whitening + affine into a single per-channel 2x2 map:
        #   y = a_coef * z + b_coef * swap(z) + bias
        bnp = bn_ref[0]                                        # (3, 2C)
        wd, wo, bb = bnp[0:1, :], bnp[1:2, :], bnp[2:3, :]
        a_coef = wd * r_diag + wo * r_off
        b_coef = wd * r_off + wo * swap(r_diag)
        y = jnp.maximum(a_coef * z + b_coef * z_sw + bb, 0.0)
        # TODO(synk): this interior store starts at sublane offset 1 (halo); an aligned
        # staging buffer + local DMA into the halo'd scratch would free the vst slot
        # on v5e.
        act_ref[:, 1:height + 1, 1:width + 1, :] = y.reshape(
            nbatch, height, width, c2)

    # --- last layer (conv3): fold the residual and emit x - net(x) ---------------
    # TODO(synk): output keeps the (N, H, W, 2) channel-minor layout (written once per
    # forward); a lane-dense (N, H, 2, W) emission needs an in-kernel minor-dim
    # transpose and is left out for lowering robustness.
    @pl.when(layer == last)
    def _():
        y = acc[:, 0:2].reshape(nbatch, height, width, 2)      # cols 0/1 = (yr, yi)
        out_ref[...] = (x_ref[...] - y).astype(out_ref.dtype)


# ----------------------------------------------------------------------------
# pallas_call wrapper
# ----------------------------------------------------------------------------
def _dncnn_pallas(x2, w_all, b_all, bn_all):
    n, h, w, _ = x2.shape
    c2 = w_all.shape[-1]
    chan = c2 // 2
    n_layers = w_all.shape[0]
    rows = n * h * w

    kern = functools.partial(_dncnn_stage_kernel, nbatch=n, height=h,
                             width=w, chan=chan, eps=BN_EPS)

    flops = 2 * n_layers * rows * 9 * c2 * c2
    bytes_accessed = (x2.size * 4 + w_all.size * 2 + b_all.size * 4
                      + bn_all.size * 4 + rows * 2 * 4)

    return pl.pallas_call(
        kern,
        out_shape=jax.ShapeDtypeStruct((n, h, w, 2), x2.dtype),
        grid=(n_layers,),
        in_specs=[
            # raw input: constant block index -> fetched once, stays resident in VMEM
            pl.BlockSpec((n, h, w, 2), lambda l: (0, 0, 0, 0)),
            # per-layer weights / biases / BN params, streamed & double-buffered
            pl.BlockSpec((1, 3, 3 * c2, c2), lambda l: (l, 0, 0, 0)),
            pl.BlockSpec((1, 1, c2), lambda l: (l, 0, 0)),
            pl.BlockSpec((1, 3, c2), lambda l: (l, 0, 0)),
        ],
        out_specs=pl.BlockSpec((n, h, w, 2), lambda l: (0, 0, 0, 0)),
        scratch_shapes=[pltpu.VMEM((n, h + 2, w + 2, c2), jnp.float32)],
        compiler_params=pltpu.CompilerParams(
            dimension_semantics=("arbitrary",),      # layers are strictly sequential
            vmem_limit_bytes=48 * 1024 * 1024,       # safe on v5e/v6e/v7x, > 32 MiB default
        ),
        cost_estimate=pl.CostEstimate(
            flops=flops,
            transcendentals=4 * n_layers * c2,
            bytes_accessed=bytes_accessed),
    )(x2, w_all, b_all, bn_all)


# ----------------------------------------------------------------------------
# Parameters (deterministic, synthetic) and one-time packing into block form
# ----------------------------------------------------------------------------
def init_params(key):
    def conv_params(k, cin, cout):
        k1, k2 = jax.random.split(k)
        std = 1.0 / (3.0 * float(cin) ** 0.5)
        return dict(
            wr=std * jax.random.normal(k1, (3, 3, cin, cout), jnp.float32),
            wi=std * jax.random.normal(k2, (3, 3, cin, cout), jnp.float32),
            br=jnp.zeros((1, cout), jnp.float32),
            bi=jnp.zeros((1, cout), jnp.float32),
        )

    keys = jax.random.split(key, 2 + DNCNN_HIDDENS)
    params = {
        "conv1": conv_params(keys[0], 1, CHANNELS),
        "conv3": conv_params(keys[1], CHANNELS, 1),
        "hidden": [conv_params(keys[2 + i], CHANNELS, CHANNELS)
                   for i in range(DNCNN_HIDDENS)],
    }
    # ComplexBatchNorm2d affine defaults: Wrr = Wii = 1/sqrt(2), Wri = 0, bias = 0.
    bn_w = jnp.concatenate(
        [jnp.full((2, CHANNELS), 1.0 / (2.0 ** 0.5), jnp.float32),
         jnp.zeros((1, CHANNELS), jnp.float32)], axis=0)   # rows: Wrr, Wii, Wri
    bn_b = jnp.zeros((2, CHANNELS), jnp.float32)            # rows: Br, Bi
    params["bn"] = [dict(w=bn_w, b=bn_b) for _ in range(DNCNN_HIDDENS)]
    return params


def pack_params(p):
    """Pack per-layer params into stacked, K-fused block-complex tensors (done ONCE)."""
    C = CHANNELS
    c2 = 2 * C

    def conv_block(wr, wi):          # (3,3,cin,cout) -> (3,3,2cin,2cout)
        return jnp.concatenate(
            [jnp.concatenate([wr, wi], axis=-1),
             jnp.concatenate([-wi, wr], axis=-1)], axis=2)

    def bias_block(br, bi):          # -> (1, 2cout) = [br | bi]
        return jnp.concatenate([br, bi], axis=-1)

    ws, bs, bns = [], [], []
    bn_dummy = jnp.zeros((3, c2), jnp.float32)

    # conv1 (1 complex input channel): its 2 non-zero K rows go to channels {0, 1}
    # so the kernel can stage the raw (real, imag) input directly into channels 0:2.
    wb1 = conv_block(p["conv1"]["wr"], p["conv1"]["wi"])       # (3,3,2,2C)
    w1 = jnp.zeros((3, 3, c2, c2), jnp.float32).at[:, :, 0:2, :].set(wb1)
    ws.append(w1)
    bs.append(bias_block(p["conv1"]["br"], p["conv1"]["bi"]))
    bns.append(bn_dummy)

    for i in range(DNCNN_HIDDENS):
        q = p["hidden"][i]
        ws.append(conv_block(q["wr"], q["wi"]))                # (3,3,2C,2C)
        bs.append(bias_block(q["br"], q["bi"]))
        w = p["bn"][i]["w"]     # (3, C): Wrr, Wii, Wri
        b = p["bn"][i]["b"]     # (2, C): Br, Bi
        wd = jnp.concatenate([w[0:1], w[1:2]], axis=-1)        # [Wrr | Wii]
        wo = jnp.concatenate([w[2:3], w[2:3]], axis=-1)        # [Wri | Wri]
        bb = jnp.concatenate([b[0:1], b[1:2]], axis=-1)        # [Br  | Bi ]
        bns.append(jnp.concatenate([wd, wo, bb], axis=0))      # (3, 2C)

    # conv3 (1 complex output channel): output columns 0 (yr) / 1 (yi), rest zero.
    wb3 = conv_block(p["conv3"]["wr"], p["conv3"]["wi"])       # (3,3,2C,2)
    w3 = jnp.zeros((3, 3, c2, c2), jnp.float32).at[:, :, :, 0:2].set(wb3)
    ws.append(w3)
    b3 = jnp.zeros((1, c2), jnp.float32).at[:, 0:2].set(
        bias_block(p["conv3"]["br"], p["conv3"]["bi"]))
    bs.append(b3)
    bns.append(bn_dummy)

    # K-fuse the kx taps: (3,3,2C,2C) -> (3, 3*2C, 2C), and store weights in bf16
    # (MXU-native).  Conv biases / BN params stay in f32.
    w_stack = jnp.stack(ws).reshape(len(ws), 3, 3 * c2, c2).astype(jnp.bfloat16)
    return dict(w=w_stack,                  # (20, 3, 192, 64) bf16
                b=jnp.stack(bs),            # (20, 1, 64) f32
                bn=jnp.stack(bns))          # (20, 3, 64) f32


# ----------------------------------------------------------------------------
# Full forward pass
# ----------------------------------------------------------------------------
@jax.jit
def dncnn_complex_forward(packed, x):
    """x: (N, 2, H, W) float32 (NCHW, channel 0 real / 1 imag)."""
    # Only a cheap 2-channel layout change; no 32x inflation.  The kernel already
    # folds the residual, so its output is the final x - net(x) in NHWC(2) layout.
    x_nhwc = jnp.transpose(x, (0, 2, 3, 1))                    # (N, H, W, 2)
    y = _dncnn_pallas(x_nhwc, packed["w"], packed["b"], packed["bn"])
    return jnp.transpose(y, (0, 3, 1, 2))                      # (N, 2, H, W)


if __name__ == "__main__":
    key = jax.random.PRNGKey(0)
    k_x, k_p = jax.random.split(key)
    x = jax.random.normal(k_x, (2, 2, 16, 16), jnp.float32)
    params = init_params(k_p)
    packed = pack_params(params)

    out = dncnn_complex_forward(packed, x)
    out = jax.block_until_ready(out)

    assert out.shape == (2, 2, 16, 16), out.shape
    assert bool(jnp.all(jnp.isfinite(out)))
    print("KERNEL_OK")
</pallas_src>

<mosaic_0001>
module attributes {stable_mosaic.version = 11 : i64} {
  func.func @_dncnn_stage_kernel(%arg0: i32, %arg1: memref<2x16x16x2xf32, #tpu.memory_space<vmem>>, %arg2: memref<1x3x192x64xbf16, #tpu.memory_space<vmem>>, %arg3: memref<1x1x64xf32, #tpu.memory_space<vmem>>, %arg4: memref<1x3x64xf32, #tpu.memory_space<vmem>>, %arg5: memref<2x16x16x2xf32, #tpu.memory_space<vmem>>, %arg6: memref<2x18x18x64xf32, #tpu.memory_space<vmem>>) attributes {dimension_semantics = [#tpu.dimension_semantics<arbitrary>], iteration_bounds = array<i64: 20>, scalar_prefetch = 0 : i64, scratch_operands = 1 : i64, tpu.core_type = #tpu.core_type<tc>, window_params = [{pipeline_mode = #tpu.pipeline_mode<synchronous>, transform_indices = @transform_0, window_bounds = array<i64: 2, 16, 16, 2>}, {transform_indices = @transform_1, window_bounds = array<i64: 1, 3, 192, 64>}, {transform_indices = @transform_2, window_bounds = array<i64: 1, 1, 64>}, {transform_indices = @transform_3, window_bounds = array<i64: 1, 3, 64>}, {pipeline_mode = #tpu.pipeline_mode<synchronous>, transform_indices = @transform_4, window_bounds = array<i64: 2, 16, 16, 2>}]} {
    %c0_i32 = arith.constant 0 : i32
    %0 = arith.cmpi eq, %arg0, %c0_i32 : i32
    %1 = arith.extui %0 : i1 to i32
    %c0_i32_0 = arith.constant 0 : i32
    %2 = arith.cmpi ne, %1, %c0_i32_0 : i32
    scf.if %2 {
      %cst_58 = arith.constant 0.000000e+00 : f32
      %49 = vector.broadcast %cst_58 : f32 to vector<2x18x18x64xf32>
      %c0_59 = arith.constant 0 : index
      %c0_60 = arith.constant 0 : index
      %c0_61 = arith.constant 0 : index
      %c0_62 = arith.constant 0 : index
      %50 = vector.load %arg6[%c0_59, %c0_60, %c0_61, %c0_62] : memref<2x18x18x64xf32, #tpu.memory_space<vmem>>, vector<2x18x18x64xf32>
      tpu.vector_store %arg6[%c0_59, %c0_60, %c0_61, %c0_62], %49 {strides = array<i32>} : memref<2x18x18x64xf32, #tpu.memory_space<vmem>>, vector<2x18x18x64xf32>,
      %c0_63 = arith.constant 0 : index
      %c0_64 = arith.constant 0 : index
      %c0_65 = arith.constant 0 : index
      %c0_66 = arith.constant 0 : index
      %51 = vector.load %arg1[%c0_63, %c0_64, %c0_65, %c0_66] : memref<2x16x16x2xf32, #tpu.memory_space<vmem>>, vector<2x16x16x2xf32>
      %c0_67 = arith.constant 0 : index
      %c1_68 = arith.constant 1 : index
      %c1_69 = arith.constant 1 : index
      %c0_70 = arith.constant 0 : index
      %52 = vector.load %arg6[%c0_67, %c1_68, %c1_69, %c0_70] : memref<2x18x18x64xf32, #tpu.memory_space<vmem>>, vector<2x16x16x2xf32>
      tpu.vector_store %arg6[%c0_67, %c1_68, %c1_69, %c0_70], %51 {strides = array<i32>} : memref<2x18x18x64xf32, #tpu.memory_space<vmem>>, vector<2x16x16x2xf32>,
    } else {
    }
    %cst = arith.constant 0.000000e+00 : f32
    %3 = vector.broadcast %cst : f32 to vector<512x64xf32>
    %c0 = arith.constant 0 : index
    %c0_1 = arith.constant 0 : index
    %c0_2 = arith.constant 0 : index
    %c0_3 = arith.constant 0 : index
    %4 = vector.load %arg6[%c0, %c0_1, %c0_2, %c0_3] : memref<2x18x18x64xf32, #tpu.memory_space<vmem>>, vector<2x16x16x64xf32>
    %c0_4 = arith.constant 0 : index
    %c0_5 = arith.constant 0 : index
    %c1 = arith.constant 1 : index
    %c0_6 = arith.constant 0 : index
    %5 = vector.load %arg6[%c0_4, %c0_5, %c1, %c0_6] : memref<2x18x18x64xf32, #tpu.memory_space<vmem>>, vector<2x16x16x64xf32>
    %c0_7 = arith.constant 0 : index
    %c0_8 = arith.constant 0 : index
    %c2 = arith.constant 2 : index
    %c0_9 = arith.constant 0 : index
    %6 = vector.load %arg6[%c0_7, %c0_8, %c2, %c0_9] : memref<2x18x18x64xf32, #tpu.memory_space<vmem>>, vector<2x16x16x64xf32>
    %7 = tpu.concatenate %4, %5, %6 in 3 : vector<2x16x16x64xf32>, vector<2x16x16x64xf32>, vector<2x16x16x64xf32> -> vector<2x16x16x192xf32>
    %8 = vector.shape_cast %7 : vector<2x16x16x192xf32> to vector<512x192xf32>
    %9 = arith.truncf %8 : vector<512x192xf32> to vector<512x192xbf16>
    %c0_10 = arith.constant 0 : index
    %c0_11 = arith.constant 0 : index
    %c0_12 = arith.constant 0 : index
    %c0_13 = arith.constant 0 : index
    %10 = vector.load %arg2[%c0_10, %c0_11, %c0_12, %c0_13] : memref<1x3x192x64xbf16, #tpu.memory_space<vmem>>, vector<1x1x192x64xbf16>
    %11 = vector.shape_cast %10 : vector<1x1x192x64xbf16> to vector<192x64xbf16>
    %cst_14 = arith.constant dense<0.000000e+00> : vector<512x64xf32>
    %12 = tpu.matmul %9, %11, %cst_14 {dimension_numbers = #tpu.dot_dimension_numbers<[1], [0], [0], [1], [0, 0, 1, 1], [], []>} : vector<512x192xbf16>, vector<192x64xbf16>, vector<512x64xf32> -> vector<512x64xf32>
    %13 = arith.addf %3, %12 : vector<512x64xf32>
    %c0_15 = arith.constant 0 : index
    %c1_16 = arith.constant 1 : index
    %c0_17 = arith.constant 0 : index
    %c0_18 = arith.constant 0 : index
    %14 = vector.load %arg6[%c0_15, %c1_16, %c0_17, %c0_18] : memref<2x18x18x64xf32, #tpu.memory_space<vmem>>, vector<2x16x16x64xf32>
    %c0_19 = arith.constant 0 : index
    %c1_20 = arith.constant 1 : index
    %c1_21 = arith.constant 1 : index
    %c0_22 = arith.constant 0 : index
    %15 = vector.load %arg6[%c0_19, %c1_20, %c1_21, %c0_22] : memref<2x18x18x64xf32, #tpu.memory_space<vmem>>, vector<2x16x16x64xf32>
    %c0_23 = arith.constant 0 : index
    %c1_24 = arith.constant 1 : index
    %c2_25 = arith.constant 2 : index
    %c0_26 = arith.constant 0 : index
    %16 = vector.load %arg6[%c0_23, %c1_24, %c2_25, %c0_26] : memref<2x18x18x64xf32, #tpu.memory_space<vmem>>, vector<2x16x16x64xf32>
    %17 = tpu.concatenate %14, %15, %16 in 3 : vector<2x16x16x64xf32>, vector<2x16x16x64xf32>, vector<2x16x16x64xf32> -> vector<2x16x16x192xf32>
    %18 = vector.shape_cast %17 : vector<2x16x16x192xf32> to vector<512x192xf32>
    %19 = arith.truncf %18 : vector<512x192xf32> to vector<512x192xbf16>
    %c0_27 = arith.constant 0 : index
    %c1_28 = arith.constant 1 : index
    %c0_29 = arith.constant 0 : index
    %c0_30 = arith.constant 0 : index
    %20 = vector.load %arg2[%c0_27, %c1_28, %c0_29, %c0_30] : memref<1x3x192x64xbf16, #tpu.memory_space<vmem>>, vector<1x1x192x64xbf16>
    %21 = vector.shape_cast %20 : vector<1x1x192x64xbf16> to vector<192x64xbf16>
    %cst_31 = arith.constant dense<0.000000e+00> : vector<512x64xf32>
    %22 = tpu.matmul %19, %21, %cst_31 {dimension_numbers = #tpu.dot_dimension_numbers<[1], [0], [0], [1], [0, 0, 1, 1], [], []>} : vector<512x192xbf16>, vector<192x64xbf16>, vector<512x64xf32> -> vector<512x64xf32>
    %23 = arith.addf %13, %22 : vector<512x64xf32>
    %c0_32 = arith.constant 0 : index
    %c2_33 = arith.constant 2 : index
    %c0_34 = arith.constant 0 : index
    %c0_35 = arith.constant 0 : index
    %24 = vector.load %arg6[%c0_32, %c2_33, %c0_34, %c0_35] : memref<2x18x18x64xf32, #tpu.memory_space<vmem>>, vector<2x16x16x64xf32>
    %c0_36 = arith.constant 0 : index
    %c2_37 = arith.constant 2 : index
    %c1_38 = arith.constant 1 : index
    %c0_39 = arith.constant 0 : index
    %25 = vector.load %arg6[%c0_36, %c2_37, %c1_38, %c0_39] : memref<2x18x18x64xf32, #tpu.memory_space<vmem>>, vector<2x16x16x64xf32>
    %c0_40 = arith.constant 0 : index
    %c2_41 = arith.constant 2 : index
    %c2_42 = arith.constant 2 : index
    %c0_43 = arith.constant 0 : index
    %26 = vector.load %arg6[%c0_40, %c2_41, %c2_42, %c0_43] : memref<2x18x18x64xf32, #tpu.memory_space<vmem>>, vector<2x16x16x64xf32>
    %27 = tpu.concatenate %24, %25, %26 in 3 : vector<2x16x16x64xf32>, vector<2x16x16x64xf32>, vector<2x16x16x64xf32> -> vector<2x16x16x192xf32>
    %28 = vector.shape_cast %27 : vector<2x16x16x192xf32> to vector<512x192xf32>
    %29 = arith.truncf %28 : vector<512x192xf32> to vector<512x192xbf16>
    %c0_44 = arith.constant 0 : index
    %c2_45 = arith.constant 2 : index
    %c0_46 = arith.constant 0 : index
    %c0_47 = arith.constant 0 : index
    %30 = vector.load %arg2[%c0_44, %c2_45, %c0_46, %c0_47] : memref<1x3x192x64xbf16, #tpu.memory_space<vmem>>, vector<1x1x192x64xbf16>
    %31 = vector.shape_cast %30 : vector<1x1x192x64xbf16> to vector<192x64xbf16>
    %cst_48 = arith.constant dense<0.000000e+00> : vector<512x64xf32>
    %32 = tpu.matmul %29, %31, %cst_48 {dimension_numbers = #tpu.dot_dimension_numbers<[1], [0], [0], [1], [0, 0, 1, 1], [], []>} : vector<512x192xbf16>, vector<192x64xbf16>, vector<512x64xf32> -> vector<512x64xf32>
    %33 = arith.addf %23, %32 : vector<512x64xf32>
    %c0_49 = arith.constant 0 : index
    %c0_50 = arith.constant 0 : index
    %c0_51 = arith.constant 0 : index
    %34 = vector.load %arg3[%c0_49, %c0_50, %c0_51] : memref<1x1x64xf32, #tpu.memory_space<vmem>>, vector<1x1x64xf32>
    %35 = vector.shape_cast %34 : vector<1x1x64xf32> to vector<1x64xf32>
    %36 = vector.broadcast %35 : vector<1x64xf32> to vector<512x64xf32>
    %37 = arith.addf %33, %36 : vector<512x64xf32>
    %c0_i32_52 = arith.constant 0 : i32
    %38 = arith.cmpi eq, %arg0, %c0_i32_52 : i32
    %39 = arith.extui %38 : i1 to i32
    %c0_i32_53 = arith.constant 0 : i32
    %40 = arith.cmpi ne, %39, %c0_i32_53 : i32
    scf.if %40 {
      %cst_58 = arith.constant 0.000000e+00 : f32
      %49 = vector.broadcast %cst_58 : f32 to vector<512x64xf32>
      %50 = arith.maximumf %37, %49 : vector<512x64xf32>
      %51 = vector.shape_cast %50 : vector<512x64xf32> to vector<2x16x16x64xf32>
      %c0_59 = arith.constant 0 : index
      %c1_60 = arith.constant 1 : index
      %c1_61 = arith.constant 1 : index
      %c0_62 = arith.constant 0 : index
      %52 = vector.load %arg6[%c0_59, %c1_60, %c1_61, %c0_62] : memref<2x18x18x64xf32, #tpu.memory_space<vmem>>, vector<2x16x16x64xf32>
      tpu.vector_store %arg6[%c0_59, %c1_60, %c1_61, %c0_62], %51 {strides = array<i32>} : memref<2x18x18x64xf32, #tpu.memory_space<vmem>>, vector<2x16x16x64xf32>,
    } else {
    }
    %c0_i32_54 = arith.constant 0 : i32
    %41 = arith.cmpi sgt, %arg0, %c0_i32_54 : i32
    %c19_i32 = arith.constant 19 : i32
    %42 = arith.cmpi slt, %arg0, %c19_i32 : i32
    %43 = arith.andi %41, %42 : i1
    %44 = arith.extui %43 : i1 to i32
    %c0_i32_55 = arith.constant 0 : i32
    %45 = arith.cmpi ne, %44, %c0_i32_55 : i32
    scf.if %45 {
      %cst_58 = arith.constant dense<0.000000e+00> : vector<64xf32>
      %49 = vector.multi_reduction <add>, %37, %cst_58 [0] : vector<512x64xf32> to vector<64xf32>
      %50 = vector.shape_cast %49 : vector<64xf32> to vector<1x64xf32>
      %cst_59 = arith.constant 5.120000e+02 : f32
      %51 = vector.broadcast %cst_59 : f32 to vector<1x64xf32>
      %52 = arith.divf %50, %51 : vector<1x64xf32>
      %53 = vector.broadcast %52 : vector<1x64xf32> to vector<512x64xf32>
      %54 = arith.subf %37, %53 : vector<512x64xf32>
      %55 = vector.extract_strided_slice %54 {offsets = [0, 32], sizes = [512, 32], strides = [1, 1]} : vector<512x64xf32> to vector<512x32xf32>
      %56 = vector.extract_strided_slice %54 {offsets = [0, 0], sizes = [512, 32], strides = [1, 1]} : vector<512x64xf32> to vector<512x32xf32>
      %57 = tpu.concatenate %55, %56 in 1 : vector<512x32xf32>, vector<512x32xf32> -> vector<512x64xf32>
      %58 = arith.mulf %54, %54 : vector<512x64xf32>
      %cst_60 = arith.constant dense<0.000000e+00> : vector<64xf32>
      %59 = vector.multi_reduction <add>, %58, %cst_60 [0] : vector<512x64xf32> to vector<64xf32>
      %60 = vector.shape_cast %59 : vector<64xf32> to vector<1x64xf32>
      %cst_61 = arith.constant 5.120000e+02 : f32
      %61 = vector.broadcast %cst_61 : f32 to vector<1x64xf32>
      %62 = arith.divf %60, %61 : vector<1x64xf32>
      %cst_62 = arith.constant 9.99999974E-6 : f32
      %63 = vector.broadcast %cst_62 : f32 to vector<1x64xf32>
      %64 = arith.addf %62, %63 : vector<1x64xf32>
      %65 = arith.mulf %54, %57 : vector<512x64xf32>
      %cst_63 = arith.constant dense<0.000000e+00> : vector<64xf32>
      %66 = vector.multi_reduction <add>, %65, %cst_63 [0] : vector<512x64xf32> to vector<64xf32>
      %67 = vector.shape_cast %66 : vector<64xf32> to vector<1x64xf32>
      %cst_64 = arith.constant 5.120000e+02 : f32
      %68 = vector.broadcast %cst_64 : f32 to vector<1x64xf32>
      %69 = arith.divf %67, %68 : vector<1x64xf32>
      %70 = vector.extract_strided_slice %64 {offsets = [0, 32], sizes = [1, 32], strides = [1, 1]} : vector<1x64xf32> to vector<1x32xf32>
      %71 = vector.extract_strided_slice %64 {offsets = [0, 0], sizes = [1, 32], strides = [1, 1]} : vector<1x64xf32> to vector<1x32xf32>
      %72 = tpu.concatenate %70, %71 in 1 : vector<1x32xf32>, vector<1x32xf32> -> vector<1x64xf32>
      %73 = arith.mulf %64, %72 : vector<1x64xf32>
      %74 = arith.mulf %69, %69 : vector<1x64xf32>
      %75 = arith.subf %73, %74 : vector<1x64xf32>
      %76 = math.sqrt %75 : vector<1x64xf32>
      %77 = arith.addf %64, %72 : vector<1x64xf32>
      %cst_65 = arith.constant 2.000000e+00 : f32
      %78 = vector.broadcast %cst_65 : f32 to vector<1x64xf32>
      %79 = arith.mulf %78, %76 : vector<1x64xf32>
      %80 = arith.addf %77, %79 : vector<1x64xf32>
      %81 = math.sqrt %80 : vector<1x64xf32>
      %82 = arith.mulf %76, %81 : vector<1x64xf32>
      %cst_66 = arith.constant 1.000000e+00 : f32
      %83 = vector.broadcast %cst_66 : f32 to vector<1x64xf32>
      %84 = arith.divf %83, %82 : vector<1x64xf32>
      %85 = arith.addf %72, %76 : vector<1x64xf32>
      %86 = arith.mulf %85, %84 : vector<1x64xf32>
      %cst_67 = arith.constant 0.000000e+00 : f32
      %87 = vector.broadcast %cst_67 : f32 to vector<1x64xf32>
      %88 = arith.subf %87, %69 : vector<1x64xf32>
      %89 = arith.mulf %88, %84 : vector<1x64xf32>
      %c0_68 = arith.constant 0 : index
      %c0_69 = arith.constant 0 : index
      %c0_70 = arith.constant 0 : index
      %90 = vector.load %arg4[%c0_68, %c0_69, %c0_70] : memref<1x3x64xf32, #tpu.memory_space<vmem>>, vector<1x3x64xf32>
      %91 = vector.shape_cast %90 : vector<1x3x64xf32> to vector<3x64xf32>
      %92 = vector.extract_strided_slice %91 {offsets = [0, 0], sizes = [1, 64], strides = [1, 1]} : vector<3x64xf32> to vector<1x64xf32>
      %93 = vector.extract_strided_slice %91 {offsets = [1, 0], sizes = [1, 64], strides = [1, 1]} : vector<3x64xf32> to vector<1x64xf32>
      %94 = vector.extract_strided_slice %91 {offsets = [2, 0], sizes = [1, 64], strides = [1, 1]} : vector<3x64xf32> to vector<1x64xf32>
      %95 = arith.mulf %92, %86 : vector<1x64xf32>
      %96 = arith.mulf %93, %89 : vector<1x64xf32>
      %97 = arith.addf %95, %96 : vector<1x64xf32>
      %98 = arith.mulf %92, %89 : vector<1x64xf32>
      %99 = vector.extract_strided_slice %86 {offsets = [0, 32], sizes = [1, 32], strides = [1, 1]} : vector<1x64xf32> to vector<1x32xf32>
      %100 = vector.extract_strided_slice %86 {offsets = [0, 0], sizes = [1, 32], strides = [1, 1]} : vector<1x64xf32> to vector<1x32xf32>
      %101 = tpu.concatenate %99, %100 in 1 : vector<1x32xf32>, vector<1x32xf32> -> vector<1x64xf32>
      %102 = arith.mulf %93, %101 : vector<1x64xf32>
      %103 = arith.addf %98, %102 : vector<1x64xf32>
      %104 = vector.broadcast %97 : vector<1x64xf32> to vector<512x64xf32>
      %105 = arith.mulf %104, %54 : vector<512x64xf32>
      %106 = vector.broadcast %103 : vector<1x64xf32> to vector<512x64xf32>
      %107 = arith.mulf %106, %57 : vector<512x64xf32>
      %108 = arith.addf %105, %107 : vector<512x64xf32>
      %109 = vector.broadcast %94 : vector<1x64xf32> to vector<512x64xf32>
      %110 = arith.addf %108, %109 : vector<512x64xf32>
      %cst_71 = arith.constant 0.000000e+00 : f32
      %111 = vector.broadcast %cst_71 : f32 to vector<512x64xf32>
      %112 = arith.maximumf %110, %111 : vector<512x64xf32>
      %113 = vector.shape_cast %112 : vector<512x64xf32> to vector<2x16x16x64xf32>
      %c0_72 = arith.constant 0 : index
      %c1_73 = arith.constant 1 : index
      %c1_74 = arith.constant 1 : index
      %c0_75 = arith.constant 0 : index
      %114 = vector.load %arg6[%c0_72, %c1_73, %c1_74, %c0_75] : memref<2x18x18x64xf32, #tpu.memory_space<vmem>>, vector<2x16x16x64xf32>
      tpu.vector_store %arg6[%c0_72, %c1_73, %c1_74, %c0_75], %113 {strides = array<i32>} : memref<2x18x18x64xf32, #tpu.memory_space<vmem>>, vector<2x16x16x64xf32>,
    } else {
    }
    %c19_i32_56 = arith.constant 19 : i32
    %46 = arith.cmpi eq, %arg0, %c19_i32_56 : i32
    %47 = arith.extui %46 : i1 to i32
    %c0_i32_57 = arith.constant 0 : i32
    %48 = arith.cmpi ne, %47, %c0_i32_57 : i32
    scf.if %48 {
      %49 = vector.extract_strided_slice %37 {offsets = [0, 0], sizes = [512, 2], strides = [1, 1]} : vector<512x64xf32> to vector<512x2xf32>
      %50 = vector.shape_cast %49 : vector<512x2xf32> to vector<2x16x16x2xf32>
      %c0_58 = arith.constant 0 : index
      %c0_59 = arith.constant 0 : index
      %c0_60 = arith.constant 0 : index
      %c0_61 = arith.constant 0 : index
      %51 = vector.load %arg1[%c0_58, %c0_59, %c0_60, %c0_61] : memref<2x16x16x2xf32, #tpu.memory_space<vmem>>, vector<2x16x16x2xf32>
      %52 = arith.subf %51, %50 : vector<2x16x16x2xf32>
      %c0_62 = arith.constant 0 : index
      %c0_63 = arith.constant 0 : index
      %c0_64 = arith.constant 0 : index
      %c0_65 = arith.constant 0 : index
      %53 = vector.load %arg5[%c0_62, %c0_63, %c0_64, %c0_65] : memref<2x16x16x2xf32, #tpu.memory_space<vmem>>, vector<2x16x16x2xf32>
      tpu.vector_store %arg5[%c0_62, %c0_63, %c0_64, %c0_65], %52 {strides = array<i32>} : memref<2x16x16x2xf32, #tpu.memory_space<vmem>>, vector<2x16x16x2xf32>,
    } else {
    }
    return
  }
  func.func @transform_0(%arg0: i32) -> (i32, i32, i32, i32) {
    %c0_i32 = arith.constant 0 : i32
    %c0_i32_0 = arith.constant 0 : i32
    %c0_i32_1 = arith.constant 0 : i32
    %c0_i32_2 = arith.constant 0 : i32
    %c0_i32_3 = arith.constant 0 : i32
    return %c0_i32, %c0_i32_0, %c0_i32_1, %c0_i32_2 : i32, i32, i32, i32
  }
  func.func @transform_1(%arg0: i32) -> (i32, i32, i32, i32) {
    %c0_i32 = arith.constant 0 : i32
    %c0_i32_0 = arith.constant 0 : i32
    %c0_i32_1 = arith.constant 0 : i32
    %c0_i32_2 = arith.constant 0 : i32
    return %arg0, %c0_i32, %c0_i32_0, %c0_i32_1 : i32, i32, i32, i32
  }
  func.func @transform_2(%arg0: i32) -> (i32, i32, i32) {
    %c0_i32 = arith.constant 0 : i32
    %c0_i32_0 = arith.constant 0 : i32
    %c0_i32_1 = arith.constant 0 : i32
    return %arg0, %c0_i32, %c0_i32_0 : i32, i32, i32
  }
  func.func @transform_3(%arg0: i32) -> (i32, i32, i32) {
    %c0_i32 = arith.constant 0 : i32
    %c0_i32_0 = arith.constant 0 : i32
    %c0_i32_1 = arith.constant 0 : i32
    return %arg0, %c0_i32, %c0_i32_0 : i32, i32, i32
  }
  func.func @transform_4(%arg0: i32) -> (i32, i32, i32, i32) {
    %c0_i32 = arith.constant 0 : i32
    %c0_i32_0 = arith.constant 0 : i32
    %c0_i32_1 = arith.constant 0 : i32
    %c0_i32_2 = arith.constant 0 : i32
    %c0_i32_3 = arith.constant 0 : i32
    return %c0_i32, %c0_i32_0, %c0_i32_1, %c0_i32_2 : i32, i32, i32, i32
  }
}

</mosaic_0001>

<llo_original>
// kernel: dncnn_complex_forward.1
$region0: #{dncnn_complex_forward.1}
  #allocation0 [shape = 'u32[]', space=smem, size = 0x4, offset = 0x4, fixed_abs, tag = 'smem constant byte address 0x4 - core index']
  #allocation1 [shape = 'u32[144,128]{1,0:T(1,128)}', space=vmem, size = 0x12000, scoped, tag = 'internal scratch']
  #allocation2 [shape = 'f32[2,18,18,64]{3,2,1,0:T(8,128)}', space=vmem, size = 0x6c000, scoped, tag = 'scratch operand']
  %s0 = inlined_call_operand.vmem [shape: f32[2,16,16,2], index: 0, kind: input, shape index: {}]
  %s1 = inlined_call_operand.vmem [shape: bf16[20,3,192,64], index: 1, kind: input, shape index: {}]
  %s2 = inlined_call_operand.vmem [shape: f32[20,1,64], index: 2, kind: input, shape index: {}]
  %s3 = inlined_call_operand.vmem [shape: f32[20,3,64], index: 3, kind: input, shape index: {}]
  %s4 = inlined_call_operand.vmem [shape: f32[2,16,16,2], index: 4, kind: output, shape index: {}]
  %s5 = sld [smem:[#allocation0]]
  $region65: #{dncnn_complex_forward.1} parent=0
    _
  %s7 = ssub.s32 1, %s5
  %s8 = scalar_select 0, %s7, %s5
  loop: start=0, step=1, limit=22
  $region2: #{dncnn_complex_forward.1} parent=0 // loop_pre_header
    _
  $region3: #{dncnn_complex_forward.1} parent=0 // loop_header
    %s10 = sphi 0, %s14
    %p11 = scmp.ge.s32.totalorder %s10, 22
    %s18 = sphi 0, %s18
    %s20 = sphi 0, %s18
    %s21 = sphi 0, %s20
    %s35 = sphi 0, %s21
    %s41 = sphi 0, %s43
    %s44 = sphi 0, %s41
    %s45 = sphi 0, %s44
    %s61 = sphi 0, %s45
    %s67 = sphi 0, %s69
    %s70 = sphi 0, %s67
    %s71 = sphi 0, %s70
    %s87 = sphi 0, %s71
    %s93 = sphi 0, %s95
    %s96 = sphi 0, %s93
    %s97 = sphi 0, %s96
    %s113 = sphi 0, %s97
    %s117 = sphi 0, %s117
    %s119 = sphi 0, %s117
    %s120 = sphi 0, %s119
    %s134 = sphi 0, %s120
  $region4: #{dncnn_complex_forward.1} parent=0 // loop_header_branch
    %13 = sbr.rel (%p11) target = $region8
  $region5: #{dncnn_complex_forward.1} parent=0 // loop_body
    %s15 = ssub.s32 %s10, 1
    %s16 = ssub.s32 %s10, 2
    %s17 = sadd.s32 %s10, 1
    %s19 = sadd.s32 %s18, 1
    %p22 = scmp.eq.s32.totalorder %s10, 19
    %p23 = scmp.ne.s32.totalorder %s18, %s20
    %p24 = scmp.eq.s32.totalorder %s10, 0
    %p25 = por %p23, %p24
    %p26 = scmp.ne.s32.totalorder %s18, %s20
    %p27 = scmp.eq.s32.totalorder %s15, 19
    %p28 = por %p26, %p27
    %p29 = scmp.ne.s32.totalorder %s20, %s21
    %p30 = scmp.eq.s32.totalorder %s15, 0
    %p31 = por %p29, %p30
    %p32 = scmp.ne.s32.totalorder %s20, %s21
    %p33 = scmp.eq.s32.totalorder %s16, 19
    %p34 = por %p32, %p33
    %p36 = scmp.ne.s32.totalorder %s21, %s35
    %p37 = scmp.eq.s32.totalorder %s16, 0
    %p38 = por %p36, %p37
    %s39 = ssub.s32 %s10, %s17
    %p40 = scmp.eq.s32.totalorder %s39, 0
    %s42 = sadd.s32 %s41, 1
    %s43 = scalar_select %p40, %s41, %s42
    %p46 = pneg %p40
    %p47 = scmp.eq.s32.totalorder %s10, 19
    %p48 = por %p46, %p47
    %p49 = scmp.ne.s32.totalorder %s41, %s44
    %p50 = scmp.eq.s32.totalorder %s10, 0
    %p51 = por %p49, %p50
    %p52 = scmp.ne.s32.totalorder %s41, %s44
    %p53 = scmp.eq.s32.totalorder %s15, 19
    %p54 = por %p52, %p53
    %p55 = scmp.ne.s32.totalorder %s44, %s45
    %p56 = scmp.eq.s32.totalorder %s15, 0
    %p57 = por %p55, %p56
    %p58 = scmp.ne.s32.totalorder %s44, %s45
    %p59 = scmp.eq.s32.totalorder %s16, 19
    %p60 = por %p58, %p59
    %p62 = scmp.ne.s32.totalorder %s45, %s61
    %p63 = scmp.eq.s32.totalorder %s16, 0
    %p64 = por %p62, %p63
    %s65 = ssub.s32 %s10, %s17
    %p66 = scmp.eq.s32.totalorder %s65, 0
    %s68 = sadd.s32 %s67, 1
    %s69 = scalar_select %p66, %s67, %s68
    %p72 = pneg %p66
    %p73 = scmp.eq.s32.totalorder %s10, 19
    %p74 = por %p72, %p73
    %p75 = scmp.ne.s32.totalorder %s67, %s70
    %p76 = scmp.eq.s32.totalorder %s10, 0
    %p77 = por %p75, %p76
    %p78 = scmp.ne.s32.totalorder %s67, %s70
    %p79 = scmp.eq.s32.totalorder %s15, 19
    %p80 = por %p78, %p79
    %p81 = scmp.ne.s32.totalorder %s70, %s71
    %p82 = scmp.eq.s32.totalorder %s15, 0
    %p83 = por %p81, %p82
    %p84 = scmp.ne.s32.totalorder %s70, %s71
    %p85 = scmp.eq.s32.totalorder %s16, 19
    %p86 = por %p84, %p85
    %p88 = scmp.ne.s32.totalorder %s71, %s87
    %p89 = scmp.eq.s32.totalorder %s16, 0
    %p90 = por %p88, %p89
    %s91 = ssub.s32 %s10, %s17
    %p92 = scmp.eq.s32.totalorder %s91, 0
    %s94 = sadd.s32 %s93, 1
    %s95 = scalar_select %p92, %s93, %s94
    %p98 = pneg %p92
    %p99 = scmp.eq.s32.totalorder %s10, 19
    %p100 = por %p98, %p99
    %p101 = scmp.ne.s32.totalorder %s93, %s96
    %p102 = scmp.eq.s32.totalorder %s10, 0
    %p103 = por %p101, %p102
    %p104 = scmp.ne.s32.totalorder %s93, %s96
    %p105 = scmp.eq.s32.totalorder %s15, 19
    %p106 = por %p104, %p105
    %p107 = scmp.ne.s32.totalorder %s96, %s97
    %p108 = scmp.eq.s32.totalorder %s15, 0
    %p109 = por %p107, %p108
    %p110 = scmp.ne.s32.totalorder %s96, %s97
    %p111 = scmp.eq.s32.totalorder %s16, 19
    %p112 = por %p110, %p111
    %p114 = scmp.ne.s32.totalorder %s97, %s113
    %p115 = scmp.eq.s32.totalorder %s16, 0
    %p116 = por %p114, %p115
    %s118 = sadd.s32 %s117, 1
    %p121 = scmp.eq.s32.totalorder %s10, 19
    %p122 = scmp.ne.s32.totalorder %s117, %s119
    %p123 = scmp.eq.s32.totalorder %s10, 0
    %p124 = por %p122, %p123
    %p125 = scmp.ne.s32.totalorder %s117, %s119
    %p126 = scmp.eq.s32.totalorder %s15, 19
    %p127 = por %p125, %p126
    %p128 = scmp.ne.s32.totalorder %s119, %s120
    %p129 = scmp.eq.s32.totalorder %s15, 0
    %p130 = por %p128, %p129
    %p131 = scmp.ne.s32.totalorder %s119, %s120
    %p132 = scmp.eq.s32.totalorder %s16, 19
    %p133 = por %p131, %p132
    %p135 = scmp.ne.s32.totalorder %s120, %s134
    %p136 = scmp.eq.s32.totalorder %s16, 0
    %p137 = por %p135, %p136
    %p138 = scmp.le.s32.totalorder 1, %s10
    %p139 = scmp.lt.s32.totalorder %s10, 21
    %p140 = pnand %p138, %p139
    %p141 = pneg %p140
    // Predicated region
    $region9: #{dncnn_complex_forward.1} parent=5 // pred_check
      _
    $region10: #{dncnn_complex_forward.1} parent=5 // pred_check_branch
      %143 = sbr.rel (%p140) target = $region12
    $region11: #{dncnn_complex_forward.1} parent=5 // pred_region
      %s144 = ssub.s32 %s10, 1
      // Predicated region
      $region13: #{dncnn_complex_forward.1} parent=11 // pred_check
        %p145 = pneg %p31
      $region14: #{dncnn_complex_forward.1} parent=11 // pred_check_branch
        %147 = sbr.rel (%p145) target = $region16
      $region15: #{dncnn_complex_forward.1} parent=11 // pred_region
        _
      $region16: #{dncnn_complex_forward.1} parent=11 // pred_fallthru
        _
    $region12: #{dncnn_complex_forward.1} parent=5 // pred_fallthru
      _
    %p148 = scmp.lt.s32.totalorder %s10, 20
    // Predicated region
    $region17: #{dncnn_complex_forward.1} parent=5 // pred_check
      %p149 = pneg %p148
    $region18: #{dncnn_complex_forward.1} parent=5 // pred_check_branch
      %151 = sbr.rel (%p149) target = $region20
    $region19: #{dncnn_complex_forward.1} parent=5 // pred_region
      // Predicated region
      $region21: #{dncnn_complex_forward.1} parent=19 // pred_check
        %p152 = pneg %p51
      $region22: #{dncnn_complex_forward.1} parent=19 // pred_check_branch
        %154 = sbr.rel (%p152) target = $region24
      $region23: #{dncnn_complex_forward.1} parent=19 // pred_region
        %p155 = scmp.lt.s32.totalorder %s10, 19
        %s156 = scalar_select %p155, %s10, 19
        %s157 = smul.addr %s156, 72
        %s158 = smul.addr %s157, 4
        %s159 = scalar_lea.vmem %s1, %s158
      $region24: #{dncnn_complex_forward.1} parent=19 // pred_fallthru
        _
      // Predicated region
      $region25: #{dncnn_complex_forward.1} parent=19 // pred_check
        %p160 = pneg %p77
      $region26: #{dncnn_complex_forward.1} parent=19 // pred_check_branch
        %162 = sbr.rel (%p160) target = $region28
      $region27: #{dncnn_complex_forward.1} parent=19 // pred_region
        %p163 = scmp.lt.s32.totalorder %s10, 19
        %s164 = scalar_select %p163, %s10, 19
        %s165 = scalar_lea.vmem %s2, %s164
      $region28: #{dncnn_complex_forward.1} parent=19 // pred_fallthru
        _
      // Predicated region
      $region29: #{dncnn_complex_forward.1} parent=19 // pred_check
        %p166 = pneg %p103
      $region30: #{dncnn_complex_forward.1} parent=19 // pred_check_branch
        %168 = sbr.rel (%p166) target = $region32
      $region31: #{dncnn_complex_forward.1} parent=19 // pred_region
        %p169 = scmp.lt.s32.totalorder %s10, 19
        %s170 = scalar_select %p169, %s10, 19
        %s171 = smul.addr %s170, 4
        %s172 = scalar_lea.vmem %s3, %s171
      $region32: #{dncnn_complex_forward.1} parent=19 // pred_fallthru
        _
    $region20: #{dncnn_complex_forward.1} parent=5 // pred_fallthru
      _
    %p173 = scmp.le.s32.totalorder 1, %s10
    %p174 = scmp.lt.s32.totalorder %s10, 21
    %p175 = pnand %p173, %p174
    %p176 = pneg %p175
    // Predicated region
    $region33: #{dncnn_complex_forward.1} parent=5 // pred_check
      _
    $region34: #{dncnn_complex_forward.1} parent=5 // pred_check_branch
      %178 = sbr.rel (%p175) target = $region36
    $region35: #{dncnn_complex_forward.1} parent=5 // pred_region
      %s179 = ssub.s32 %s10, 1
      %p180 = pneg %p31
      %p181 = pneg %p28
      %p182 = scmp.lt.s32.totalorder %s15, 19
      %s183 = scalar_select %p182, %s15, 19
      %s184 = smul.addr %s183, 72
      %s185 = smul.addr %s184, 4
      %s186 = scalar_lea.vmem %s1, %s185
      %p187 = pneg %p57
      %p188 = pneg %p54
      %p189 = scmp.lt.s32.totalorder %s15, 19
      %s190 = scalar_select %p189, %s15, 19
      %s191 = scalar_lea.vmem %s2, %s190
      %p192 = pneg %p83
      %p193 = pneg %p80
      %p194 = scmp.lt.s32.totalorder %s15, 19
      %s195 = scalar_select %p194, %s15, 19
      %s196 = smul.addr %s195, 4
      %s197 = scalar_lea.vmem %s3, %s196
      %p198 = pneg %p109
      %p199 = pneg %p106
      %p200 = pneg %p130
      %p201 = pneg %p127
      %p202 = scmp.lt.s32.totalorder %s15, 19
      %s203 = scalar_select %p202, %s15, 19
      %s204 = smul.addr %s203, 72
      %s205 = smul.addr %s204, 4
      %s206 = scalar_lea.vmem %s1, %s205
      %p207 = scmp.lt.s32.totalorder %s15, 19
      %s208 = scalar_select %p207, %s15, 19
      %s209 = scalar_lea.vmem %s2, %s208
      %p210 = scmp.lt.s32.totalorder %s15, 19
      %s211 = scalar_select %p210, %s15, 19
      %s212 = smul.addr %s211, 4
      %s213 = scalar_lea.vmem %s3, %s212
      %p215 = scmp.eq.s32.totalorder %s15, 0
      // Predicated region
      $region37: #{dncnn_complex_forward.1} parent=35 // pred_check
        %p216 = pneg %p215
      $region38: #{dncnn_complex_forward.1} parent=35 // pred_check_branch
        %218 = sbr.rel (%p216) target = $region40
      $region39: #{dncnn_complex_forward.1} parent=35 // pred_region
        %vm219 = vcmask 523264
        %220 = vst.msk [vmem:[#allocation2] sm:$0xff] %vm219, 0.0
        %221 = vst.msk [vmem:[#allocation2 + $0x8] sm:$0xff] %vm219, 0.0
        %vm222 = vcmask 517120
        %223 = vst.msk [vmem:[#allocation2 + $0x10] sm:$0x3] %vm222, 0.0
        %224 = vst.msk [vmem:[#allocation2 + $0x18] sm:$0xff] %vm219, 0.0
        %225 = vst.msk [vmem:[#allocation2 + $0x20] sm:$0xff] %vm219, 0.0
        %226 = vst.msk [vmem:[#allocation2 + $0x28] sm:$0x3] %vm222, 0.0
        %227 = vst.msk [vmem:[#allocation2 + $0x30] sm:$0xff] %vm219, 0.0
        %228 = vst.msk [vmem:[#allocation2 + $0x38] sm:$0xff] %vm219, 0.0
        %229 = vst.msk [vmem:[#allocation2 + $0x40] sm:$0x3] %vm222, 0.0
        %230 = vst.msk [vmem:[#allocation2 + $0x48] sm:$0xff] %vm219, 0.0
        %231 = vst.msk [vmem:[#allocation2 + $0x50] sm:$0xff] %vm219, 0.0
        %232 = vst.msk [vmem:[#allocation2 + $0x58] sm:$0x3] %vm222, 0.0
        %233 = vst.msk [vmem:[#allocation2 + $0x60] sm:$0xff] %vm219, 0.0
        %234 = vst.msk [vmem:[#allocation2 + $0x68] sm:$0xff] %vm219, 0.0
        %235 = vst.msk [vmem:[#allocation2 + $0x70] sm:$0x3] %vm222, 0.0
        %236 = vst.msk [vmem:[#allocation2 + $0x78] sm:$0xff] %vm219, 0.0
        %237 = vst.msk [vmem:[#allocation2 + $0x80] sm:$0xff] %vm219, 0.0
        %238 = vst.msk [vmem:[#allocation2 + $0x88] sm:$0x3] %vm222, 0.0
        %239 = vst.msk [vmem:[#allocation2 + $0x90] sm:$0xff] %vm219, 0.0
        %240 = vst.msk [vmem:[#allocation2 + $0x98] sm:$0xff] %vm219, 0.0
        %241 = vst.msk [vmem:[#allocation2 + $0xa0] sm:$0x3] %vm222, 0.0
        %242 = vst.msk [vmem:[#allocation2 + $0xa8] sm:$0xff] %vm219, 0.0
        %243 = vst.msk [vmem:[#allocation2 + $0xb0] sm:$0xff] %vm219, 0.0
        %244 = vst.msk [vmem:[#allocation2 + $0xb8] sm:$0x3] %vm222, 0.0
        %245 = vst.msk [vmem:[#allocation2 + $0xc0] sm:$0xff] %vm219, 0.0
        %246 = vst.msk [vmem:[#allocation2 + $0xc8] sm:$0xff] %vm219, 0.0
        %247 = vst.msk [vmem:[#allocation2 + $0xd0] sm:$0x3] %vm222, 0.0
        %248 = vst.msk [vmem:[#allocation2 + $0xd8] sm:$0xff] %vm219, 0.0
        %249 = vst.msk [vmem:[#allocation2 + $0xe0] sm:$0xff] %vm219, 0.0
        %250 = vst.msk [vmem:[#allocation2 + $0xe8] sm:$0x3] %vm222, 0.0
        %251 = vst.msk [vmem:[#allocation2 + $0xf0] sm:$0xff] %vm219, 0.0
        %252 = vst.msk [vmem:[#allocation2 + $0xf8] sm:$0xff] %vm219, 0.0
        %253 = vst.msk [vmem:[#allocation2 + $0x100] sm:$0x3] %vm222, 0.0
        %254 = vst.msk [vmem:[#allocation2 + $0x108] sm:$0xff] %vm219, 0.0
        %255 = vst.msk [vmem:[#allocation2 + $0x110] sm:$0xff] %vm219, 0.0
        %256 = vst.msk [vmem:[#allocation2 + $0x118] sm:$0x3] %vm222, 0.0
        %257 = vst.msk [vmem:[#allocation2 + $0x120] sm:$0xff] %vm219, 0.0
        %258 = vst.msk [vmem:[#allocation2 + $0x128] sm:$0xff] %vm219, 0.0
        %259 = vst.msk [vmem:[#allocation2 + $0x130] sm:$0x3] %vm222, 0.0
        %260 = vst.msk [vmem:[#allocation2 + $0x138] sm:$0xff] %vm219, 0.0
        %261 = vst.msk [vmem:[#allocation2 + $0x140] sm:$0xff] %vm219, 0.0
        %262 = vst.msk [vmem:[#allocation2 + $0x148] sm:$0x3] %vm222, 0.0
        %263 = vst.msk [vmem:[#allocation2 + $0x150] sm:$0xff] %vm219, 0.0
        %264 = vst.msk [vmem:[#allocation2 + $0x158] sm:$0xff] %vm219, 0.0
        %265 = vst.msk [vmem:[#allocation2 + $0x160] sm:$0x3] %vm222, 0.0
        %266 = vst.msk [vmem:[#allocation2 + $0x168] sm:$0xff] %vm219, 0.0
        %267 = vst.msk [vmem:[#allocation2 + $0x170] sm:$0xff] %vm219, 0.0
        %268 = vst.msk [vmem:[#allocation2 + $0x178] sm:$0x3] %vm222, 0.0
        %269 = vst.msk [vmem:[#allocation2 + $0x180] sm:$0xff] %vm219, 0.0
        %270 = vst.msk [vmem:[#allocation2 + $0x188] sm:$0xff] %vm219, 0.0
        %271 = vst.msk [vmem:[#allocation2 + $0x190] sm:$0x3] %vm222, 0.0
        %272 = vst.msk [vmem:[#allocation2 + $0x198] sm:$0xff] %vm219, 0.0
        %273 = vst.msk [vmem:[#allocation2 + $0x1a0] sm:$0xff] %vm219, 0.0
        %274 = vst.msk [vmem:[#allocation2 + $0x1a8] sm:$0x3] %vm222, 0.0
        %275 = vst.msk [vmem:[#allocation2 + $0x1b0] sm:$0xff] %vm219, 0.0
        %276 = vst.msk [vmem:[#allocation2 + $0x1b8] sm:$0xff] %vm219, 0.0
        %277 = vst.msk [vmem:[#allocation2 + $0x1c0] sm:$0x3] %vm222, 0.0
        %278 = vst.msk [vmem:[#allocation2 + $0x1c8] sm:$0xff] %vm219, 0.0
        %279 = vst.msk [vmem:[#allocation2 + $0x1d0] sm:$0xff] %vm219, 0.0
        %280 = vst.msk [vmem:[#allocation2 + $0x1d8] sm:$0x3] %vm222, 0.0
        %281 = vst.msk [vmem:[#allocation2 + $0x1e0] sm:$0xff] %vm219, 0.0
        %282 = vst.msk [vmem:[#allocation2 + $0x1e8] sm:$0xff] %vm219, 0.0
        %283 = vst.msk [vmem:[#allocation2 + $0x1f0] sm:$0x3] %vm222, 0.0
        %284 = vst.msk [vmem:[#allocation2 + $0x1f8] sm:$0xff] %vm219, 0.0
        %285 = vst.msk [vmem:[#allocation2 + $0x200] sm:$0xff] %vm219, 0.0
        %286 = vst.msk [vmem:[#allocation2 + $0x208] sm:$0x3] %vm222, 0.0
        %287 = vst.msk [vmem:[#allocation2 + $0x210] sm:$0xff] %vm219, 0.0
        %288 = vst.msk [vmem:[#allocation2 + $0x218] sm:$0xff] %vm219, 0.0
        %289 = vst.msk [vmem:[#allocation2 + $0x220] sm:$0x3] %vm222, 0.0
        %290 = vst.msk [vmem:[#allocation2 + $0x228] sm:$0xff] %vm219, 0.0
        %291 = vst.msk [vmem:[#allocation2 + $0x230] sm:$0xff] %vm219, 0.0
        %292 = vst.msk [vmem:[#allocation2 + $0x238] sm:$0x3] %vm222, 0.0
        %293 = vst.msk [vmem:[#allocation2 + $0x240] sm:$0xff] %vm219, 0.0
        %294 = vst.msk [vmem:[#allocation2 + $0x248] sm:$0xff] %vm219, 0.0
        %295 = vst.msk [vmem:[#allocation2 + $0x250] sm:$0x3] %vm222, 0.0
        %296 = vst.msk [vmem:[#allocation2 + $0x258] sm:$0xff] %vm219, 0.0
        %297 = vst.msk [vmem:[#allocation2 + $0x260] sm:$0xff] %vm219, 0.0
        %298 = vst.msk [vmem:[#allocation2 + $0x268] sm:$0x3] %vm222, 0.0
        %299 = vst.msk [vmem:[#allocation2 + $0x270] sm:$0xff] %vm219, 0.0
        %300 = vst.msk [vmem:[#allocation2 + $0x278] sm:$0xff] %vm219, 0.0
        %301 = vst.msk [vmem:[#allocation2 + $0x280] sm:$0x3] %vm222, 0.0
        %302 = vst.msk [vmem:[#allocation2 + $0x288] sm:$0xff] %vm219, 0.0
        %303 = vst.msk [vmem:[#allocation2 + $0x290] sm:$0xff] %vm219, 0.0
        %304 = vst.msk [vmem:[#allocation2 + $0x298] sm:$0x3] %vm222, 0.0
        %305 = vst.msk [vmem:[#allocation2 + $0x2a0] sm:$0xff] %vm219, 0.0
        %306 = vst.msk [vmem:[#allocation2 + $0x2a8] sm:$0xff] %vm219, 0.0
        %307 = vst.msk [vmem:[#allocation2 + $0x2b0] sm:$0x3] %vm222, 0.0
        %308 = vst.msk [vmem:[#allocation2 + $0x2b8] sm:$0xff] %vm219, 0.0
        %309 = vst.msk [vmem:[#allocation2 + $0x2c0] sm:$0xff] %vm219, 0.0
        %310 = vst.msk [vmem:[#allocation2 + $0x2c8] sm:$0x3] %vm222, 0.0
        %311 = vst.msk [vmem:[#allocation2 + $0x2d0] sm:$0xff] %vm219, 0.0
        %312 = vst.msk [vmem:[#allocation2 + $0x2d8] sm:$0xff] %vm219, 0.0
        %313 = vst.msk [vmem:[#allocation2 + $0x2e0] sm:$0x3] %vm222, 0.0
        %314 = vst.msk [vmem:[#allocation2 + $0x2e8] sm:$0xff] %vm219, 0.0
        %315 = vst.msk [vmem:[#allocation2 + $0x2f0] sm:$0xff] %vm219, 0.0
        %316 = vst.msk [vmem:[#allocation2 + $0x2f8] sm:$0x3] %vm222, 0.0
        %317 = vst.msk [vmem:[#allocation2 + $0x300] sm:$0xff] %vm219, 0.0
        %318 = vst.msk [vmem:[#allocation2 + $0x308] sm:$0xff] %vm219, 0.0
        %319 = vst.msk [vmem:[#allocation2 + $0x310] sm:$0x3] %vm222, 0.0
        %320 = vst.msk [vmem:[#allocation2 + $0x318] sm:$0xff] %vm219, 0.0
        %321 = vst.msk [vmem:[#allocation2 + $0x320] sm:$0xff] %vm219, 0.0
        %322 = vst.msk [vmem:[#allocation2 + $0x328] sm:$0x3] %vm222, 0.0
        %323 = vst.msk [vmem:[#allocation2 + $0x330] sm:$0xff] %vm219, 0.0
        %324 = vst.msk [vmem:[#allocation2 + $0x338] sm:$0xff] %vm219, 0.0
        %325 = vst.msk [vmem:[#allocation2 + $0x340] sm:$0x3] %vm222, 0.0
        %326 = vst.msk [vmem:[#allocation2 + $0x348] sm:$0xff] %vm219, 0.0
        %327 = vst.msk [vmem:[#allocation2 + $0x350] sm:$0xff] %vm219, 0.0
        %328 = vst.msk [vmem:[#allocation2 + $0x358] sm:$0x3] %vm222, 0.0
        %v329 = vld [vmem:[%s0] sm:$0xff]
        %v330 = vld [vmem:[%s0 + $0x8] sm:$0xff]
        %v331 = vld [vmem:[%s0 + $0x10] sm:$0xff]
        %v332 = vld [vmem:[%s0 + $0x18] sm:$0xff]
        %v333 = vld [vmem:[%s0 + $0x20] sm:$0xff]
        %v334 = vld [vmem:[%s0 + $0x28] sm:$0xff]
        %v335 = vld [vmem:[%s0 + $0x30] sm:$0xff]
        %v336 = vld [vmem:[%s0 + $0x38] sm:$0xff]
        %v337 = vld [vmem:[%s0 + $0x40] sm:$0xff]
        %v338 = vld [vmem:[%s0 + $0x48] sm:$0xff]
        %v339 = vld [vmem:[%s0 + $0x50] sm:$0xff]
        %v340 = vld [vmem:[%s0 + $0x58] sm:$0xff]
        %v341 = vld [vmem:[%s0 + $0x60] sm:$0xff]
        %v342 = vld [vmem:[%s0 + $0x68] sm:$0xff]
        %v343 = vld [vmem:[%s0 + $0x70] sm:$0xff]
        %v344 = vld [vmem:[%s0 + $0x78] sm:$0xff]
        %v345 = vld [vmem:[%s0 + $0x80] sm:$0xff]
        %v346 = vld [vmem:[%s0 + $0x88] sm:$0xff]
        %v347 = vld [vmem:[%s0 + $0x90] sm:$0xff]
        %v348 = vld [vmem:[%s0 + $0x98] sm:$0xff]
        %v349 = vld [vmem:[%s0 + $0xa0] sm:$0xff]
        %v350 = vld [vmem:[%s0 + $0xa8] sm:$0xff]
        %v351 = vld [vmem:[%s0 + $0xb0] sm:$0xff]
        %v352 = vld [vmem:[%s0 + $0xb8] sm:$0xff]
        %v353 = vld [vmem:[%s0 + $0xc0] sm:$0xff]
        %v354 = vld [vmem:[%s0 + $0xc8] sm:$0xff]
        %v355 = vld [vmem:[%s0 + $0xd0] sm:$0xff]
        %v356 = vld [vmem:[%s0 + $0xd8] sm:$0xff]
        %v357 = vld [vmem:[%s0 + $0xe0] sm:$0xff]
        %v358 = vld [vmem:[%s0 + $0xe8] sm:$0xff]
        %v359 = vld [vmem:[%s0 + $0xf0] sm:$0xff]
        %v360 = vld [vmem:[%s0 + $0xf8] sm:$0xff]
        %v361 = vld [vmem:[%s0 + $0x100] sm:$0xff]
        %v362 = vld [vmem:[%s0 + $0x108] sm:$0xff]
        %v363 = vld [vmem:[%s0 + $0x110] sm:$0xff]
        %v364 = vld [vmem:[%s0 + $0x118] sm:$0xff]
        %v365 = vld [vmem:[%s0 + $0x120] sm:$0xff]
        %v366 = vld [vmem:[%s0 + $0x128] sm:$0xff]
        %v367 = vld [vmem:[%s0 + $0x130] sm:$0xff]
        %v368 = vld [vmem:[%s0 + $0x138] sm:$0xff]
        %v369 = vld [vmem:[%s0 + $0x140] sm:$0xff]
        %v370 = vld [vmem:[%s0 + $0x148] sm:$0xff]
        %v371 = vld [vmem:[%s0 + $0x150] sm:$0xff]
        %v372 = vld [vmem:[%s0 + $0x158] sm:$0xff]
        %v373 = vld [vmem:[%s0 + $0x160] sm:$0xff]
        %v374 = vld [vmem:[%s0 + $0x168] sm:$0xff]
        %v375 = vld [vmem:[%s0 + $0x170] sm:$0xff]
        %v376 = vld [vmem:[%s0 + $0x178] sm:$0xff]
        %v377 = vld [vmem:[%s0 + $0x180] sm:$0xff]
        %v378 = vld [vmem:[%s0 + $0x188] sm:$0xff]
        %v379 = vld [vmem:[%s0 + $0x190] sm:$0xff]
        %v380 = vld [vmem:[%s0 + $0x198] sm:$0xff]
        %v381 = vld [vmem:[%s0 + $0x1a0] sm:$0xff]
        %v382 = vld [vmem:[%s0 + $0x1a8] sm:$0xff]
        %v383 = vld [vmem:[%s0 + $0x1b0] sm:$0xff]
        %v384 = vld [vmem:[%s0 + $0x1b8] sm:$0xff]
        %v385 = vld [vmem:[%s0 + $0x1c0] sm:$0xff]
        %v386 = vld [vmem:[%s0 + $0x1c8] sm:$0xff]
        %v387 = vld [vmem:[%s0 + $0x1d0] sm:$0xff]
        %v388 = vld [vmem:[%s0 + $0x1d8] sm:$0xff]
        %v389 = vld [vmem:[%s0 + $0x1e0] sm:$0xff]
        %v390 = vld [vmem:[%s0 + $0x1e8] sm:$0xff]
        %v391 = vld [vmem:[%s0 + $0x1f0] sm:$0xff]
        %v392 = vld [vmem:[%s0 + $0x1f8] sm:$0xff]
        %s393 = scalar_lea.vmem [#allocation2], 24
        %vm394 = vcmask 15360
        %395 = vst.msk [vmem:[%s393 + $0x1] sm:$0xff] %vm394, %v329
        %396 = vst.msk [vmem:[%s393 + $0x9] sm:$0xff] %vm394, %v330
        %397 = vst.msk [vmem:[%s393 + $0x19] sm:$0xff] %vm394, %v331
        %398 = vst.msk [vmem:[%s393 + $0x21] sm:$0xff] %vm394, %v332
        %399 = vst.msk [vmem:[%s393 + $0x31] sm:$0xff] %vm394, %v333
        %400 = vst.msk [vmem:[%s393 + $0x39] sm:$0xff] %vm394, %v334
        %401 = vst.msk [vmem:[%s393 + $0x49] sm:$0xff] %vm394, %v335
        %402 = vst.msk [vmem:[%s393 + $0x51] sm:$0xff] %vm394, %v336
        %403 = vst.msk [vmem:[%s393 + $0x61] sm:$0xff] %vm394, %v337
        %404 = vst.msk [vmem:[%s393 + $0x69] sm:$0xff] %vm394, %v338
        %405 = vst.msk [vmem:[%s393 + $0x79] sm:$0xff] %vm394, %v339
        %406 = vst.msk [vmem:[%s393 + $0x81] sm:$0xff] %vm394, %v340
        %407 = vst.msk [vmem:[%s393 + $0x91] sm:$0xff] %vm394, %v341
        %408 = vst.msk [vmem:[%s393 + $0x99] sm:$0xff] %vm394, %v342
        %409 = vst.msk [vmem:[%s393 + $0xa9] sm:$0xff] %vm394, %v343
        %410 = vst.msk [vmem:[%s393 + $0xb1] sm:$0xff] %vm394, %v344
        %411 = vst.msk [vmem:[%s393 + $0xc1] sm:$0xff] %vm394, %v345
        %412 = vst.msk [vmem:[%s393 + $0xc9] sm:$0xff] %vm394, %v346
        %413 = vst.msk [vmem:[%s393 + $0xd9] sm:$0xff] %vm394, %v347
        %414 = vst.msk [vmem:[%s393 + $0xe1] sm:$0xff] %vm394, %v348
        %415 = vst.msk [vmem:[%s393 + $0xf1] sm:$0xff] %vm394, %v349
        %416 = vst.msk [vmem:[%s393 + $0xf9] sm:$0xff] %vm394, %v350
        %417 = vst.msk [vmem:[%s393 + $0x109] sm:$0xff] %vm394, %v351
        %418 = vst.msk [vmem:[%s393 + $0x111] sm:$0xff] %vm394, %v352
        %419 = vst.msk [vmem:[%s393 + $0x121] sm:$0xff] %vm394, %v353
        %420 = vst.msk [vmem:[%s393 + $0x129] sm:$0xff] %vm394, %v354
        %421 = vst.msk [vmem:[%s393 + $0x139] sm:$0xff] %vm394, %v355
        %422 = vst.msk [vmem:[%s393 + $0x141] sm:$0xff] %vm394, %v356
        %423 = vst.msk [vmem:[%s393 + $0x151] sm:$0xff] %vm394, %v357
        %424 = vst.msk [vmem:[%s393 + $0x159] sm:$0xff] %vm394, %v358
        %425 = vst.msk [vmem:[%s393 + $0x169] sm:$0xff] %vm394, %v359
        %426 = vst.msk [vmem:[%s393 + $0x171] sm:$0xff] %vm394, %v360
        %427 = vst.msk [vmem:[%s393 + $0x1b1] sm:$0xff] %vm394, %v361
        %428 = vst.msk [vmem:[%s393 + $0x1b9] sm:$0xff] %vm394, %v362
        %429 = vst.msk [vmem:[%s393 + $0x1c9] sm:$0xff] %vm394, %v363
        %430 = vst.msk [vmem:[%s393 + $0x1d1] sm:$0xff] %vm394, %v364
        %431 = vst.msk [vmem:[%s393 + $0x1e1] sm:$0xff] %vm394, %v365
        %432 = vst.msk [vmem:[%s393 + $0x1e9] sm:$0xff] %vm394, %v366
        %433 = vst.msk [vmem:[%s393 + $0x1f9] sm:$0xff] %vm394, %v367
        %434 = vst.msk [vmem:[%s393 + $0x201] sm:$0xff] %vm394, %v368
        %435 = vst.msk [vmem:[%s393 + $0x211] sm:$0xff] %vm394, %v369
        %436 = vst.msk [vmem:[%s393 + $0x219] sm:$0xff] %vm394, %v370
        %437 = vst.msk [vmem:[%s393 + $0x229] sm:$0xff] %vm394, %v371
        %438 = vst.msk [vmem:[%s393 + $0x231] sm:$0xff] %vm394, %v372
        %439 = vst.msk [vmem:[%s393 + $0x241] sm:$0xff] %vm394, %v373
        %440 = vst.msk [vmem:[%s393 + $0x249] sm:$0xff] %vm394, %v374
        %441 = vst.msk [vmem:[%s393 + $0x259] sm:$0xff] %vm394, %v375
        %442 = vst.msk [vmem:[%s393 + $0x261] sm:$0xff] %vm394, %v376
        %443 = vst.msk [vmem:[%s393 + $0x271] sm:$0xff] %vm394, %v377
        %444 = vst.msk [vmem:[%s393 + $0x279] sm:$0xff] %vm394, %v378
        %445 = vst.msk [vmem:[%s393 + $0x289] sm:$0xff] %vm394, %v379
        %446 = vst.msk [vmem:[%s393 + $0x291] sm:$0xff] %vm394, %v380
        %447 = vst.msk [vmem:[%s393 + $0x2a1] sm:$0xff] %vm394, %v381
        %448 = vst.msk [vmem:[%s393 + $0x2a9] sm:$0xff] %vm394, %v382
        %449 = vst.msk [vmem:[%s393 + $0x2b9] sm:$0xff] %vm394, %v383
        %450 = vst.msk [vmem:[%s393 + $0x2c1] sm:$0xff] %vm394, %v384
        %451 = vst.msk [vmem:[%s393 + $0x2d1] sm:$0xff] %vm394, %v385
        %452 = vst.msk [vmem:[%s393 + $0x2d9] sm:$0xff] %vm394, %v386
        %453 = vst.msk [vmem:[%s393 + $0x2e9] sm:$0xff] %vm394, %v387
        %454 = vst.msk [vmem:[%s393 + $0x2f1] sm:$0xff] %vm394, %v388
        %455 = vst.msk [vmem:[%s393 + $0x301] sm:$0xff] %vm394, %v389
        %456 = vst.msk [vmem:[%s393 + $0x309] sm:$0xff] %vm394, %v390
        %457 = vst.msk [vmem:[%s393 + $0x319] sm:$0xff] %vm394, %v391
        %458 = vst.msk [vmem:[%s393 + $0x321] sm:$0xff] %vm394, %v392
      $region40: #{dncnn_complex_forward.1} parent=35 // pred_fallthru
        _
      %v459 = vld [vmem:[#allocation2] sm:$0xff]
      %v460 = vld [vmem:[#allocation2 + $0x8] sm:$0xff]
      %v461 = vld [vmem:[#allocation2 + $0x18] sm:$0xff]
      %v462 = vld [vmem:[#allocation2 + $0x20] sm:$0xff]
      %v463 = vld [vmem:[#allocation2 + $0x30] sm:$0xff]
      %v464 = vld [vmem:[#allocation2 + $0x38] sm:$0xff]
      %v465 = vld [vmem:[#allocation2 + $0x48] sm:$0xff]
      %v466 = vld [vmem:[#allocation2 + $0x50] sm:$0xff]
      %v467 = vld [vmem:[#allocation2 + $0x60] sm:$0xff]
      %v468 = vld [vmem:[#allocation2 + $0x68] sm:$0xff]
      %v469 = vld [vmem:[#allocation2 + $0x78] sm:$0xff]
      %v470 = vld [vmem:[#allocation2 + $0x80] sm:$0xff]
      %v471 = vld [vmem:[#allocation2 + $0x90] sm:$0xff]
      %v472 = vld [vmem:[#allocation2 + $0x98] sm:$0xff]
      %v473 = vld [vmem:[#allocation2 + $0xa8] sm:$0xff]
      %v474 = vld [vmem:[#allocation2 + $0xb0] sm:$0xff]
      %v475 = vld [vmem:[#allocation2 + $0xc0] sm:$0xff]
      %v476 = vld [vmem:[#allocation2 + $0xc8] sm:$0xff]
      %v477 = vld [vmem:[#allocation2 + $0xd8] sm:$0xff]
      %v478 = vld [vmem:[#allocation2 + $0xe0] sm:$0xff]
      %v479 = vld [vmem:[#allocation2 + $0xf0] sm:$0xff]
      %v480 = vld [vmem:[#allocation2 + $0xf8] sm:$0xff]
      %v481 = vld [vmem:[#allocation2 + $0x108] sm:$0xff]
      %v482 = vld [vmem:[#allocation2 + $0x110] sm:$0xff]
      %v483 = vld [vmem:[#allocation2 + $0x120] sm:$0xff]
      %v484 = vld [vmem:[#allocation2 + $0x128] sm:$0xff]
      %v485 = vld [vmem:[#allocation2 + $0x138] sm:$0xff]
      %v486 = vld [vmem:[#allocation2 + $0x140] sm:$0xff]
      %v487 = vld [vmem:[#allocation2 + $0x150] sm:$0xff]
      %v488 = vld [vmem:[#allocation2 + $0x158] sm:$0xff]
      %v489 = vld [vmem:[#allocation2 + $0x168] sm:$0xff]
      %v490 = vld [vmem:[#allocation2 + $0x170] sm:$0xff]
      %v491 = vld [vmem:[#allocation2 + $0x1b0] sm:$0xff]
      %v492 = vld [vmem:[#allocation2 + $0x1b8] sm:$0xff]
      %v493 = vld [vmem:[#allocation2 + $0x1c8] sm:$0xff]
      %v494 = vld [vmem:[#allocation2 + $0x1d0] sm:$0xff]
      %v495 = vld [vmem:[#allocation2 + $0x1e0] sm:$0xff]
      %v496 = vld [vmem:[#allocation2 + $0x1e8] sm:$0xff]
      %v497 = vld [vmem:[#allocation2 + $0x1f8] sm:$0xff]
      %v498 = vld [vmem:[#allocation2 + $0x200] sm:$0xff]
      %v499 = vld [vmem:[#allocation2 + $0x210] sm:$0xff]
      %v500 = vld [vmem:[#allocation2 + $0x218] sm:$0xff]
      %v501 = vld [vmem:[#allocation2 + $0x228] sm:$0xff]
      %v502 = vld [vmem:[#allocation2 + $0x230] sm:$0xff]
      %v503 = vld [vmem:[#allocation2 + $0x240] sm:$0xff]
      %v504 = vld [vmem:[#allocation2 + $0x248] sm:$0xff]
      %v505 = vld [vmem:[#allocation2 + $0x258] sm:$0xff]
      %v506 = vld [vmem:[#allocation2 + $0x260] sm:$0xff]
      %v507 = vld [vmem:[#allocation2 + $0x270] sm:$0xff]
      %v508 = vld [vmem:[#allocation2 + $0x278] sm:$0xff]
      %v509 = vld [vmem:[#allocation2 + $0x288] sm:$0xff]
      %v510 = vld [vmem:[#allocation2 + $0x290] sm:$0xff]
      %v511 = vld [vmem:[#allocation2 + $0x2a0] sm:$0xff]
      %v512 = vld [vmem:[#allocation2 + $0x2a8] sm:$0xff]
      %v513 = vld [vmem:[#allocation2 + $0x2b8] sm:$0xff]
      %v514 = vld [vmem:[#allocation2 + $0x2c0] sm:$0xff]
      %v515 = vld [vmem:[#allocation2 + $0x2d0] sm:$0xff]
      %v516 = vld [vmem:[#allocation2 + $0x2d8] sm:$0xff]
      %v517 = vld [vmem:[#allocation2 + $0x2e8] sm:$0xff]
      %v518 = vld [vmem:[#allocation2 + $0x2f0] sm:$0xff]
      %v519 = vld [vmem:[#allocation2 + $0x300] sm:$0xff]
      %v520 = vld [vmem:[#allocation2 + $0x308] sm:$0xff]
      %v521 = vld [vmem:[#allocation2 + $0x318] sm:$0xff]
      %v522 = vld [vmem:[#allocation2 + $0x320] sm:$0xff]
      %v523 = vld [vmem:[#allocation2 + $0x1] sm:$0xff]
      %v524 = vld [vmem:[#allocation2 + $0x9] sm:$0xff]
      %v525 = vld [vmem:[#allocation2 + $0x19] sm:$0xff]
      %v526 = vld [vmem:[#allocation2 + $0x21] sm:$0xff]
      %v527 = vld [vmem:[#allocation2 + $0x31] sm:$0xff]
      %v528 = vld [vmem:[#allocation2 + $0x39] sm:$0xff]
      %v529 = vld [vmem:[#allocation2 + $0x49] sm:$0xff]
      %v530 = vld [vmem:[#allocation2 + $0x51] sm:$0xff]
      %v531 = vld [vmem:[#allocation2 + $0x61] sm:$0xff]
      %v532 = vld [vmem:[#allocation2 + $0x69] sm:$0xff]
      %v533 = vld [vmem:[#allocation2 + $0x79] sm:$0xff]
      %v534 = vld [vmem:[#allocation2 + $0x81] sm:$0xff]
      %v535 = vld [vmem:[#allocation2 + $0x91] sm:$0xff]
      %v536 = vld [vmem:[#allocation2 + $0x99] sm:$0xff]
      %v537 = vld [vmem:[#allocation2 + $0xa9] sm:$0xff]
      %v538 = vld [vmem:[#allocation2 + $0xb1] sm:$0xff]
      %v539 = vld [vmem:[#allocation2 + $0xc1] sm:$0xff]
      %v540 = vld [vmem:[#allocation2 + $0xc9] sm:$0xff]
      %v541 = vld [vmem:[#allocation2 + $0xd9] sm:$0xff]
      %v542 = vld [vmem:[#allocation2 + $0xe1] sm:$0xff]
      %v543 = vld [vmem:[#allocation2 + $0xf1] sm:$0xff]
      %v544 = vld [vmem:[#allocation2 + $0xf9] sm:$0xff]
      %v545 = vld [vmem:[#allocation2 + $0x109] sm:$0xff]
      %v546 = vld [vmem:[#allocation2 + $0x111] sm:$0xff]
      %v547 = vld [vmem:[#allocation2 + $0x121] sm:$0xff]
      %v548 = vld [vmem:[#allocation2 + $0x129] sm:$0xff]
      %v549 = vld [vmem:[#allocation2 + $0x139] sm:$0xff]
      %v550 = vld [vmem:[#allocation2 + $0x141] sm:$0xff]
      %v551 = vld [vmem:[#allocation2 + $0x151] sm:$0xff]
      %v552 = vld [vmem:[#allocation2 + $0x159] sm:$0xff]
      %v553 = vld [vmem:[#allocation2 + $0x169] sm:$0xff]
      %v554 = vld [vmem:[#allocation2 + $0x171] sm:$0xff]
      %v555 = vld [vmem:[#allocation2 + $0x1b1] sm:$0xff]
      %v556 = vld [vmem:[#allocation2 + $0x1b9] sm:$0xff]
      %v557 = vld [vmem:[#allocation2 + $0x1c9] sm:$0xff]
      %v558 = vld [vmem:[#allocation2 + $0x1d1] sm:$0xff]
      %v559 = vld [vmem:[#allocation2 + $0x1e1] sm:$0xff]
      %v560 = vld [vmem:[#allocation2 + $0x1e9] sm:$0xff]
      %v561 = vld [vmem:[#allocation2 + $0x1f9] sm:$0xff]
      %v562 = vld [vmem:[#allocation2 + $0x201] sm:$0xff]
      %v563 = vld [vmem:[#allocation2 + $0x211] sm:$0xff]
      %v564 = vld [vmem:[#allocation2 + $0x219] sm:$0xff]
      %v565 = vld [vmem:[#allocation2 + $0x229] sm:$0xff]
      %v566 = vld [vmem:[#allocation2 + $0x231] sm:$0xff]
      %v567 = vld [vmem:[#allocation2 + $0x241] sm:$0xff]
      %v568 = vld [vmem:[#allocation2 + $0x249] sm:$0xff]
      %v569 = vld [vmem:[#allocation2 + $0x259] sm:$0xff]
      %v570 = vld [vmem:[#allocation2 + $0x261] sm:$0xff]
      %v571 = vld [vmem:[#allocation2 + $0x271] sm:$0xff]
      %v572 = vld [vmem:[#allocation2 + $0x279] sm:$0xff]
      %v573 = vld [vmem:[#allocation2 + $0x289] sm:$0xff]
      %v574 = vld [vmem:[#allocation2 + $0x291] sm:$0xff]
      %v575 = vld [vmem:[#allocation2 + $0x2a1] sm:$0xff]
      %v576 = vld [vmem:[#allocation2 + $0x2a9] sm:$0xff]
      %v577 = vld [vmem:[#allocation2 + $0x2b9] sm:$0xff]
      %v578 = vld [vmem:[#allocation2 + $0x2c1] sm:$0xff]
      %v579 = vld [vmem:[#allocation2 + $0x2d1] sm:$0xff]
      %v580 = vld [vmem:[#allocation2 + $0x2d9] sm:$0xff]
      %v581 = vld [vmem:[#allocation2 + $0x2e9] sm:$0xff]
      %v582 = vld [vmem:[#allocation2 + $0x2f1] sm:$0xff]
      %v583 = vld [vmem:[#allocation2 + $0x301] sm:$0xff]
      %v584 = vld [vmem:[#allocation2 + $0x309] sm:$0xff]
      %v585 = vld [vmem:[#allocation2 + $0x319] sm:$0xff]
      %v586 = vld [vmem:[#allocation2 + $0x321] sm:$0xff]
      %v587 = vld [vmem:[#allocation2 + $0x2] sm:$0xff]
      %v588 = vld [vmem:[#allocation2 + $0xa] sm:$0xff]
      %v589 = vld [vmem:[#allocation2 + $0x1a] sm:$0xff]
      %v590 = vld [vmem:[#allocation2 + $0x22] sm:$0xff]
      %v591 = vld [vmem:[#allocation2 + $0x32] sm:$0xff]
      %v592 = vld [vmem:[#allocation2 + $0x3a] sm:$0xff]
      %v593 = vld [vmem:[#allocation2 + $0x4a] sm:$0xff]
      %v594 = vld [vmem:[#allocation2 + $0x52] sm:$0xff]
      %v595 = vld [vmem:[#allocation2 + $0x62] sm:$0xff]
      %v596 = vld [vmem:[#allocation2 + $0x6a] sm:$0xff]
      %v597 = vld [vmem:[#allocation2 + $0x7a] sm:$0xff]
      %v598 = vld [vmem:[#allocation2 + $0x82] sm:$0xff]
      %v599 = vld [vmem:[#allocation2 + $0x92] sm:$0xff]
      %v600 = vld [vmem:[#allocation2 + $0x9a] sm:$0xff]
      %v601 = vld [vmem:[#allocation2 + $0xaa] sm:$0xff]
      %v602 = vld [vmem:[#allocation2 + $0xb2] sm:$0xff]
      %v603 = vld [vmem:[#allocation2 + $0xc2] sm:$0xff]
      %v604 = vld [vmem:[#allocation2 + $0xca] sm:$0xff]
      %v605 = vld [vmem:[#allocation2 + $0xda] sm:$0xff]
      %v606 = vld [vmem:[#allocation2 + $0xe2] sm:$0xff]
      %v607 = vld [vmem:[#allocation2 + $0xf2] sm:$0xff]
      %v608 = vld [vmem:[#allocation2 + $0xfa] sm:$0xff]
      %v609 = vld [vmem:[#allocation2 + $0x10a] sm:$0xff]
      %v610 = vld [vmem:[#allocation2 + $0x112] sm:$0xff]
      %v611 = vld [vmem:[#allocation2 + $0x122] sm:$0xff]
      %v612 = vld [vmem:[#allocation2 + $0x12a] sm:$0xff]
      %v613 = vld [vmem:[#allocation2 + $0x13a] sm:$0xff]
      %v614 = vld [vmem:[#allocation2 + $0x142] sm:$0xff]
      %v615 = vld [vmem:[#allocation2 + $0x152] sm:$0xff]
      %v616 = vld [vmem:[#allocation2 + $0x15a] sm:$0xff]
      %v617 = vld [vmem:[#allocation2 + $0x16a] sm:$0xff]
      %v618 = vld [vmem:[#allocation2 + $0x172] sm:$0xff]
      %v619 = vld [vmem:[#allocation2 + $0x1b2] sm:$0xff]
      %v620 = vld [vmem:[#allocation2 + $0x1ba] sm:$0xff]
      %v621 = vld [vmem:[#allocation2 + $0x1ca] sm:$0xff]
      %v622 = vld [vmem:[#allocation2 + $0x1d2] sm:$0xff]
      %v623 = vld [vmem:[#allocation2 + $0x1e2] sm:$0xff]
      %v624 = vld [vmem:[#allocation2 + $0x1ea] sm:$0xff]
      %v625 = vld [vmem:[#allocation2 + $0x1fa] sm:$0xff]
      %v626 = vld [vmem:[#allocation2 + $0x202] sm:$0xff]
      %v627 = vld [vmem:[#allocation2 + $0x212] sm:$0xff]
      %v628 = vld [vmem:[#allocation2 + $0x21a] sm:$0xff]
      %v629 = vld [vmem:[#allocation2 + $0x22a] sm:$0xff]
      %v630 = vld [vmem:[#allocation2 + $0x232] sm:$0xff]
      %v631 = vld [vmem:[#allocation2 + $0x242] sm:$0xff]
      %v632 = vld [vmem:[#allocation2 + $0x24a] sm:$0xff]
      %v633 = vld [vmem:[#allocation2 + $0x25a] sm:$0xff]
      %v634 = vld [vmem:[#allocation2 + $0x262] sm:$0xff]
      %v635 = vld [vmem:[#allocation2 + $0x272] sm:$0xff]
      %v636 = vld [vmem:[#allocation2 + $0x27a] sm:$0xff]
      %v637 = vld [vmem:[#allocation2 + $0x28a] sm:$0xff]
      %v638 = vld [vmem:[#allocation2 + $0x292] sm:$0xff]
      %v639 = vld [vmem:[#allocation2 + $0x2a2] sm:$0xff]
      %v640 = vld [vmem:[#allocation2 + $0x2aa] sm:$0xff]
      %v641 = vld [vmem:[#allocation2 + $0x2ba] sm:$0xff]
      %v642 = vld [vmem:[#allocation2 + $0x2c2] sm:$0xff]
      %v643 = vld [vmem:[#allocation2 + $0x2d2] sm:$0xff]
      %v644 = vld [vmem:[#allocation2 + $0x2da] sm:$0xff]
      %v645 = vld [vmem:[#allocation2 + $0x2ea] sm:$0xff]
      %v646 = vld [vmem:[#allocation2 + $0x2f2] sm:$0xff]
      %v647 = vld [vmem:[#allocation2 + $0x302] sm:$0xff]
      %v648 = vld [vmem:[#allocation2 + $0x30a] sm:$0xff]
      %v649 = vld [vmem:[#allocation2 + $0x31a] sm:$0xff]
      %v650 = vld [vmem:[#allocation2 + $0x322] sm:$0xff]
      %715 = vrot.lane.b32.xlu0 %v523, 64
      %v716 = vpop.permute.xlu0 %715
      %717 = vrot.lane.b32.xlu0 %v524, 64
      %v718 = vpop.permute.xlu0 %717
      %719 = vrot.lane.b32.xlu0 %v525, 64
      %v720 = vpop.permute.xlu0 %719
      %721 = vrot.lane.b32.xlu0 %v526, 64
      %v722 = vpop.permute.xlu0 %721
      %723 = vrot.lane.b32.xlu0 %v527, 64
      %v724 = vpop.permute.xlu0 %723
      %725 = vrot.lane.b32.xlu0 %v528, 64
      %v726 = vpop.permute.xlu0 %725
      %727 = vrot.lane.b32.xlu0 %v529, 64
      %v728 = vpop.permute.xlu0 %727
      %729 = vrot.lane.b32.xlu0 %v530, 64
      %v730 = vpop.permute.xlu0 %729
      %731 = vrot.lane.b32.xlu0 %v531, 64
      %v732 = vpop.permute.xlu0 %731
      %733 = vrot.lane.b32.xlu0 %v532, 64
      %v734 = vpop.permute.xlu0 %733
      %735 = vrot.lane.b32.xlu0 %v533, 64
      %v736 = vpop.permute.xlu0 %735
      %737 = vrot.lane.b32.xlu0 %v534, 64
      %v738 = vpop.permute.xlu0 %737
      %739 = vrot.lane.b32.xlu0 %v535, 64
      %v740 = vpop.permute.xlu0 %739
      %741 = vrot.lane.b32.xlu0 %v536, 64
      %v742 = vpop.permute.xlu0 %741
      %743 = vrot.lane.b32.xlu0 %v537, 64
      %v744 = vpop.permute.xlu0 %743
      %745 = vrot.lane.b32.xlu0 %v538, 64
      %v746 = vpop.permute.xlu0 %745
      %747 = vrot.lane.b32.xlu0 %v539, 64
      %v748 = vpop.permute.xlu0 %747
      %749 = vrot.lane.b32.xlu0 %v540, 64
      %v750 = vpop.permute.xlu0 %749
      %751 = vrot.lane.b32.xlu0 %v541, 64
      %v752 = vpop.permute.xlu0 %751
      %753 = vrot.lane.b32.xlu0 %v542, 64
      %v754 = vpop.permute.xlu0 %753
      %755 = vrot.lane.b32.xlu0 %v543, 64
      %v756 = vpop.permute.xlu0 %755
      %757 = vrot.lane.b32.xlu0 %v544, 64
      %v758 = vpop.permute.xlu0 %757
      %759 = vrot.lane.b32.xlu0 %v545, 64
      %v760 = vpop.permute.xlu0 %759
      %761 = vrot.lane.b32.xlu0 %v546, 64
      %v762 = vpop.permute.xlu0 %761
      %763 = vrot.lane.b32.xlu0 %v547, 64
      %v764 = vpop.permute.xlu0 %763
      %765 = vrot.lane.b32.xlu0 %v548, 64
      %v766 = vpop.permute.xlu0 %765
      %767 = vrot.lane.b32.xlu0 %v549, 64
      %v768 = vpop.permute.xlu0 %767
      %769 = vrot.lane.b32.xlu0 %v550, 64
      %v770 = vpop.permute.xlu0 %769
      %771 = vrot.lane.b32.xlu0 %v551, 64
      %v772 = vpop.permute.xlu0 %771
      %773 = vrot.lane.b32.xlu0 %v552, 64
      %v774 = vpop.permute.xlu0 %773
      %775 = vrot.lane.b32.xlu0 %v553, 64
      %v776 = vpop.permute.xlu0 %775
      %777 = vrot.lane.b32.xlu0 %v554, 64
      %v778 = vpop.permute.xlu0 %777
      %779 = vrot.lane.b32.xlu0 %v555, 64
      %v780 = vpop.permute.xlu0 %779
      %781 = vrot.lane.b32.xlu0 %v556, 64
      %v782 = vpop.permute.xlu0 %781
      %783 = vrot.lane.b32.xlu0 %v557, 64
      %v784 = vpop.permute.xlu0 %783
      %785 = vrot.lane.b32.xlu0 %v558, 64
      %v786 = vpop.permute.xlu0 %785
      %787 = vrot.lane.b32.xlu0 %v559, 64
      %v788 = vpop.permute.xlu0 %787
      %789 = vrot.lane.b32.xlu0 %v560, 64
      %v790 = vpop.permute.xlu0 %789
      %791 = vrot.lane.b32.xlu0 %v561, 64
      %v792 = vpop.permute.xlu0 %791
      %793 = vrot.lane.b32.xlu0 %v562, 64
      %v794 = vpop.permute.xlu0 %793
      %795 = vrot.lane.b32.xlu0 %v563, 64
      %v796 = vpop.permute.xlu0 %795
      %797 = vrot.lane.b32.xlu0 %v564, 64
      %v798 = vpop.permute.xlu0 %797
      %799 = vrot.lane.b32.xlu0 %v565, 64
      %v800 = vpop.permute.xlu0 %799
      %801 = vrot.lane.b32.xlu0 %v566, 64
      %v802 = vpop.permute.xlu0 %801
      %803 = vrot.lane.b32.xlu0 %v567, 64
      %v804 = vpop.permute.xlu0 %803
      %805 = vrot.lane.b32.xlu0 %v568, 64
      %v806 = vpop.permute.xlu0 %805
      %807 = vrot.lane.b32.xlu0 %v569, 64
      %v808 = vpop.permute.xlu0 %807
      %809 = vrot.lane.b32.xlu0 %v570, 64
      %v810 = vpop.permute.xlu0 %809
      %811 = vrot.lane.b32.xlu0 %v571, 64
      %v812 = vpop.permute.xlu0 %811
      %813 = vrot.lane.b32.xlu0 %v572, 64
      %v814 = vpop.permute.xlu0 %813
      %815 = vrot.lane.b32.xlu0 %v573, 64
      %v816 = vpop.permute.xlu0 %815
      %817 = vrot.lane.b32.xlu0 %v574, 64
      %v818 = vpop.permute.xlu0 %817
      %819 = vrot.lane.b32.xlu0 %v575, 64
      %v820 = vpop.permute.xlu0 %819
      %821 = vrot.lane.b32.xlu0 %v576, 64
      %v822 = vpop.permute.xlu0 %821
      %823 = vrot.lane.b32.xlu0 %v577, 64
      %v824 = vpop.permute.xlu0 %823
      %825 = vrot.lane.b32.xlu0 %v578, 64
      %v826 = vpop.permute.xlu0 %825
      %827 = vrot.lane.b32.xlu0 %v579, 64
      %v828 = vpop.permute.xlu0 %827
      %829 = vrot.lane.b32.xlu0 %v580, 64
      %v830 = vpop.permute.xlu0 %829
      %831 = vrot.lane.b32.xlu0 %v581, 64
      %v832 = vpop.permute.xlu0 %831
      %833 = vrot.lane.b32.xlu0 %v582, 64
      %v834 = vpop.permute.xlu0 %833
      %835 = vrot.lane.b32.xlu0 %v583, 64
      %v836 = vpop.permute.xlu0 %835
      %837 = vrot.lane.b32.xlu0 %v584, 64
      %v838 = vpop.permute.xlu0 %837
      %839 = vrot.lane.b32.xlu0 %v585, 64
      %v840 = vpop.permute.xlu0 %839
      %841 = vrot.lane.b32.xlu0 %v586, 64
      %v842 = vpop.permute.xlu0 %841
      %vm907 = vcmask 523264
      %v908 = vsel %vm907, %v459, %v716
      %v909 = vsel %vm907, %v460, %v718
      %v910 = vsel %vm907, %v461, %v720
      %v911 = vsel %vm907, %v462, %v722
      %v912 = vsel %vm907, %v463, %v724
      %v913 = vsel %vm907, %v464, %v726
      %v914 = vsel %vm907, %v465, %v728
      %v915 = vsel %vm907, %v466, %v730
      %v916 = vsel %vm907, %v467, %v732
      %v917 = vsel %vm907, %v468, %v734
      %v918 = vsel %vm907, %v469, %v736
      %v919 = vsel %vm907, %v470, %v738
      %v920 = vsel %vm907, %v471, %v740
      %v921 = vsel %vm907, %v472, %v742
      %v922 = vsel %vm907, %v473, %v744
      %v923 = vsel %vm907, %v474, %v746
      %v924 = vsel %vm907, %v475, %v748
      %v925 = vsel %vm907, %v476, %v750
      %v926 = vsel %vm907, %v477, %v752
      %v927 = vsel %vm907, %v478, %v754
      %v928 = vsel %vm907, %v479, %v756
      %v929 = vsel %vm907, %v480, %v758
      %v930 = vsel %vm907, %v481, %v760
      %v931 = vsel %vm907, %v482, %v762
      %v932 = vsel %vm907, %v483, %v764
      %v933 = vsel %vm907, %v484, %v766
      %v934 = vsel %vm907, %v485, %v768
      %v935 = vsel %vm907, %v486, %v770
      %v936 = vsel %vm907, %v487, %v772
      %v937 = vsel %vm907, %v488, %v774
      %v938 = vsel %vm907, %v489, %v776
      %v939 = vsel %vm907, %v490, %v778
      %v940 = vsel %vm907, %v491, %v780
      %v941 = vsel %vm907, %v492, %v782
      %v942 = vsel %vm907, %v493, %v784
      %v943 = vsel %vm907, %v494, %v786
      %v944 = vsel %vm907, %v495, %v788
      %v945 = vsel %vm907, %v496, %v790
      %v946 = vsel %vm907, %v497, %v792
      %v947 = vsel %vm907, %v498, %v794
      %v948 = vsel %vm907, %v499, %v796
      %v949 = vsel %vm907, %v500, %v798
      %v950 = vsel %vm907, %v501, %v800
      %v951 = vsel %vm907, %v502, %v802
      %v952 = vsel %vm907, %v503, %v804
      %v953 = vsel %vm907, %v504, %v806
      %v954 = vsel %vm907, %v505, %v808
      %v955 = vsel %vm907, %v506, %v810
      %v956 = vsel %vm907, %v507, %v812
      %v957 = vsel %vm907, %v508, %v814
      %v958 = vsel %vm907, %v509, %v816
      %v959 = vsel %vm907, %v510, %v818
      %v960 = vsel %vm907, %v511, %v820
      %v961 = vsel %vm907, %v512, %v822
      %v962 = vsel %vm907, %v513, %v824
      %v963 = vsel %vm907, %v514, %v826
      %v964 = vsel %vm907, %v515, %v828
      %v965 = vsel %vm907, %v516, %v830
      %v966 = vsel %vm907, %v517, %v832
      %v967 = vsel %vm907, %v518, %v834
      %v968 = vsel %vm907, %v519, %v836
      %v969 = vsel %vm907, %v520, %v838
      %v970 = vsel %vm907, %v521, %v840
      %v971 = vsel %vm907, %v522, %v842
      %v972 = vpack.c.bf16 %v909, %v908
      %v973 = vpack.c.bf16 %v588, %v587
      %v974 = vpack.c.bf16 %v911, %v910
      %v975 = vpack.c.bf16 %v590, %v589
      %v976 = vpack.c.bf16 %v913, %v912
      %v977 = vpack.c.bf16 %v592, %v591
      %v978 = vpack.c.bf16 %v915, %v914
      %v979 = vpack.c.bf16 %v594, %v593
      %v980 = vpack.c.bf16 %v917, %v916
      %v981 = vpack.c.bf16 %v596, %v595
      %v982 = vpack.c.bf16 %v919, %v918
      %v983 = vpack.c.bf16 %v598, %v597
      %v984 = vpack.c.bf16 %v921, %v920
      %v985 = vpack.c.bf16 %v600, %v599
      %v986 = vpack.c.bf16 %v923, %v922
      %v987 = vpack.c.bf16 %v602, %v601
      %v988 = vpack.c.bf16 %v925, %v924
      %v989 = vpack.c.bf16 %v604, %v603
      %v990 = vpack.c.bf16 %v927, %v926
      %v991 = vpack.c.bf16 %v606, %v605
      %v992 = vpack.c.bf16 %v929, %v928
      %v993 = vpack.c.bf16 %v608, %v607
      %v994 = vpack.c.bf16 %v931, %v930
      %v995 = vpack.c.bf16 %v610, %v609
      %v996 = vpack.c.bf16 %v933, %v932
      %v997 = vpack.c.bf16 %v612, %v611
      %v998 = vpack.c.bf16 %v935, %v934
      %v999 = vpack.c.bf16 %v614, %v613
      %v1000 = vpack.c.bf16 %v937, %v936
      %v1001 = vpack.c.bf16 %v616, %v615
      %v1002 = vpack.c.bf16 %v939, %v938
      %v1003 = vpack.c.bf16 %v618, %v617
      %v1004 = vpack.c.bf16 %v941, %v940
      %v1005 = vpack.c.bf16 %v620, %v619
      %v1006 = vpack.c.bf16 %v943, %v942
      %v1007 = vpack.c.bf16 %v622, %v621
      %v1008 = vpack.c.bf16 %v945, %v944
      %v1009 = vpack.c.bf16 %v624, %v623
      %v1010 = vpack.c.bf16 %v947, %v946
      %v1011 = vpack.c.bf16 %v626, %v625
      %v1012 = vpack.c.bf16 %v949, %v948
      %v1013 = vpack.c.bf16 %v628, %v627
      %v1014 = vpack.c.bf16 %v951, %v950
      %v1015 = vpack.c.bf16 %v630, %v629
      %v1016 = vpack.c.bf16 %v953, %v952
      %v1017 = vpack.c.bf16 %v632, %v631
      %v1018 = vpack.c.bf16 %v955, %v954
      %v1019 = vpack.c.bf16 %v634, %v633
      %v1020 = vpack.c.bf16 %v957, %v956
      %v1021 = vpack.c.bf16 %v636, %v635
      %v1022 = vpack.c.bf16 %v959, %v958
      %v1023 = vpack.c.bf16 %v638, %v637
      %v1024 = vpack.c.bf16 %v961, %v960
      %v1025 = vpack.c.bf16 %v640, %v639
      %v1026 = vpack.c.bf16 %v963, %v962
      %v1027 = vpack.c.bf16 %v642, %v641
      %v1028 = vpack.c.bf16 %v965, %v964
      %v1029 = vpack.c.bf16 %v644, %v643
      %v1030 = vpack.c.bf16 %v967, %v966
      %v1031 = vpack.c.bf16 %v646, %v645
      %v1032 = vpack.c.bf16 %v969, %v968
      %v1033 = vpack.c.bf16 %v648, %v647
      %v1034 = vpack.c.bf16 %v971, %v970
      %v1035 = vpack.c.bf16 %v650, %v649
      %v1036 = vld [vmem:[%s206] sm:$0xf]
      %v1037 = vld [vmem:[%s206 + $0x4] sm:$0xf]
      %v1038 = vld [vmem:[%s206 + $0x8] sm:$0xf]
      %v1039 = vld [vmem:[%s206 + $0xc] sm:$0xf]
      %v1040 = vld [vmem:[%s206 + $0x10] sm:$0xf]
      %v1041 = vld [vmem:[%s206 + $0x14] sm:$0xf]
      %v1042 = vld [vmem:[%s206 + $0x18] sm:$0xf]
      %v1043 = vld [vmem:[%s206 + $0x1c] sm:$0xf]
      %v1044 = vld [vmem:[%s206 + $0x20] sm:$0xf]
      %v1045 = vld [vmem:[%s206 + $0x24] sm:$0xf]
      %v1046 = vld [vmem:[%s206 + $0x28] sm:$0xf]
      %v1047 = vld [vmem:[%s206 + $0x2c] sm:$0xf]
      %v1048 = vld [vmem:[%s206 + $0x30] sm:$0xf]
      %v1049 = vld [vmem:[%s206 + $0x34] sm:$0xf]
      %v1050 = vld [vmem:[%s206 + $0x38] sm:$0xf]
      %v1051 = vld [vmem:[%s206 + $0x3c] sm:$0xf]
      %v1052 = vld [vmem:[%s206 + $0x40] sm:$0xf]
      %v1053 = vld [vmem:[%s206 + $0x44] sm:$0xf]
      %v1054 = vld [vmem:[%s206 + $0x48] sm:$0xf]
      %v1055 = vld [vmem:[%s206 + $0x4c] sm:$0xf]
      %v1056 = vld [vmem:[%s206 + $0x50] sm:$0xf]
      %v1057 = vld [vmem:[%s206 + $0x54] sm:$0xf]
      %v1058 = vld [vmem:[%s206 + $0x58] sm:$0xf]
      %v1059 = vld [vmem:[%s206 + $0x5c] sm:$0xf]
      %s1060 = scalar_lea.vmem [#allocation2], 24
      %v1061 = vld [vmem:[%s1060] sm:$0xff]
      %v1062 = vld [vmem:[%s1060 + $0x8] sm:$0xff]
      %v1063 = vld [vmem:[%s1060 + $0x18] sm:$0xff]
      %v1064 = vld [vmem:[%s1060 + $0x20] sm:$0xff]
      %v1065 = vld [vmem:[%s1060 + $0x30] sm:$0xff]
      %v1066 = vld [vmem:[%s1060 + $0x38] sm:$0xff]
      %v1067 = vld [vmem:[%s1060 + $0x48] sm:$0xff]
      %v1068 = vld [vmem:[%s1060 + $0x50] sm:$0xff]
      %v1069 = vld [vmem:[%s1060 + $0x60] sm:$0xff]
      %v1070 = vld [vmem:[%s1060 + $0x68] sm:$0xff]
      %v1071 = vld [vmem:[%s1060 + $0x78] sm:$0xff]
      %v1072 = vld [vmem:[%s1060 + $0x80] sm:$0xff]
      %v1073 = vld [vmem:[%s1060 + $0x90] sm:$0xff]
      %v1074 = vld [vmem:[%s1060 + $0x98] sm:$0xff]
      %v1075 = vld [vmem:[%s1060 + $0xa8] sm:$0xff]
      %v1076 = vld [vmem:[%s1060 + $0xb0] sm:$0xff]
      %v1077 = vld [vmem:[%s1060 + $0xc0] sm:$0xff]
      %v1078 = vld [vmem:[%s1060 + $0xc8] sm:$0xff]
      %v1079 = vld [vmem:[%s1060 + $0xd8] sm:$0xff]
      %v1080 = vld [vmem:[%s1060 + $0xe0] sm:$0xff]
      %v1081 = vld [vmem:[%s1060 + $0xf0] sm:$0xff]
      %v1082 = vld [vmem:[%s1060 + $0xf8] sm:$0xff]
      %v1083 = vld [vmem:[%s1060 + $0x108] sm:$0xff]
      %v1084 = vld [vmem:[%s1060 + $0x110] sm:$0xff]
      %v1085 = vld [vmem:[%s1060 + $0x120] sm:$0xff]
      %v1086 = vld [vmem:[%s1060 + $0x128] sm:$0xff]
      %v1087 = vld [vmem:[%s1060 + $0x138] sm:$0xff]
      %v1088 = vld [vmem:[%s1060 + $0x140] sm:$0xff]
      %v1089 = vld [vmem:[%s1060 + $0x150] sm:$0xff]
      %v1090 = vld [vmem:[%s1060 + $0x158] sm:$0xff]
      %v1091 = vld [vmem:[%s1060 + $0x168] sm:$0xff]
      %v1092 = vld [vmem:[%s1060 + $0x170] sm:$0xff]
      %v1093 = vld [vmem:[%s1060 + $0x1b0] sm:$0xff]
      %v1094 = vld [vmem:[%s1060 + $0x1b8] sm:$0xff]
      %v1095 = vld [vmem:[%s1060 + $0x1c8] sm:$0xff]
      %v1096 = vld [vmem:[%s1060 + $0x1d0] sm:$0xff]
      %v1097 = vld [vmem:[%s1060 + $0x1e0] sm:$0xff]
      %v1098 = vld [vmem:[%s1060 + $0x1e8] sm:$0xff]
      %v1099 = vld [vmem:[%s1060 + $0x1f8] sm:$0xff]
      %v1100 = vld [vmem:[%s1060 + $0x200] sm:$0xff]
      %v1101 = vld [vmem:[%s1060 + $0x210] sm:$0xff]
      %v1102 = vld [vmem:[%s1060 + $0x218] sm:$0xff]
      %v1103 = vld [vmem:[%s1060 + $0x228] sm:$0xff]
      %v1104 = vld [vmem:[%s1060 + $0x230] sm:$0xff]
      %v1105 = vld [vmem:[%s1060 + $0x240] sm:$0xff]
      %v1106 = vld [vmem:[%s1060 + $0x248] sm:$0xff]
      %v1107 = vld [vmem:[%s1060 + $0x258] sm:$0xff]
      %v1108 = vld [vmem:[%s1060 + $0x260] sm:$0xff]
      %v1109 = vld [vmem:[%s1060 + $0x270] sm:$0xff]
      %v1110 = vld [vmem:[%s1060 + $0x278] sm:$0xff]
      %v1111 = vld [vmem:[%s1060 + $0x288] sm:$0xff]
      %v1112 = vld [vmem:[%s1060 + $0x290] sm:$0xff]
      %v1113 = vld [vmem:[%s1060 + $0x2a0] sm:$0xff]
      %v1114 = vld [vmem:[%s1060 + $0x2a8] sm:$0xff]
      %v1115 = vld [vmem:[%s1060 + $0x2b8] sm:$0xff]
      %v1116 = vld [vmem:[%s1060 + $0x2c0] sm:$0xff]
      %v1117 = vld [vmem:[%s1060 + $0x2d0] sm:$0xff]
      %v1118 = vld [vmem:[%s1060 + $0x2d8] sm:$0xff]
      %v1119 = vld [vmem:[%s1060 + $0x2e8] sm:$0xff]
      %v1120 = vld [vmem:[%s1060 + $0x2f0] sm:$0xff]
      %v1121 = vld [vmem:[%s1060 + $0x300] sm:$0xff]
      %v1122 = vld [vmem:[%s1060 + $0x308] sm:$0xff]
      %v1123 = vld [vmem:[%s1060 + $0x318] sm:$0xff]
      %v1124 = vld [vmem:[%s1060 + $0x320] sm:$0xff]
      %v1125 = vld [vmem:[%s1060 + $0x1] sm:$0xff]
      %v1126 = vld [vmem:[%s1060 + $0x9] sm:$0xff]
      %v1127 = vld [vmem:[%s1060 + $0x19] sm:$0xff]
      %v1128 = vld [vmem:[%s1060 + $0x21] sm:$0xff]
      %v1129 = vld [vmem:[%s1060 + $0x31] sm:$0xff]
      %v1130 = vld [vmem:[%s1060 + $0x39] sm:$0xff]
      %v1131 = vld [vmem:[%s1060 + $0x49] sm:$0xff]
      %v1132 = vld [vmem:[%s1060 + $0x51] sm:$0xff]
      %v1133 = vld [vmem:[%s1060 + $0x61] sm:$0xff]
      %v1134 = vld [vmem:[%s1060 + $0x69] sm:$0xff]
      %v1135 = vld [vmem:[%s1060 + $0x79] sm:$0xff]
      %v1136 = vld [vmem:[%s1060 + $0x81] sm:$0xff]
      %v1137 = vld [vmem:[%s1060 + $0x91] sm:$0xff]
      %v1138 = vld [vmem:[%s1060 + $0x99] sm:$0xff]
      %v1139 = vld [vmem:[%s1060 + $0xa9] sm:$0xff]
      %v1140 = vld [vmem:[%s1060 + $0xb1] sm:$0xff]
      %v1141 = vld [vmem:[%s1060 + $0xc1] sm:$0xff]
      %v1142 = vld [vmem:[%s1060 + $0xc9] sm:$0xff]
      %v1143 = vld [vmem:[%s1060 + $0xd9] sm:$0xff]
      %v1144 = vld [vmem:[%s1060 + $0xe1] sm:$0xff]
      %v1145 = vld [vmem:[%s1060 + $0xf1] sm:$0xff]
      %v1146 = vld [vmem:[%s1060 + $0xf9] sm:$0xff]
      %v1147 = vld [vmem:[%s1060 + $0x109] sm:$0xff]
      %v1148 = vld [vmem:[%s1060 + $0x111] sm:$0xff]
      %v1149 = vld [vmem:[%s1060 + $0x121] sm:$0xff]
      %v1150 = vld [vmem:[%s1060 + $0x129] sm:$0xff]
      %v1151 = vld [vmem:[%s1060 + $0x139] sm:$0xff]
      %v1152 = vld [vmem:[%s1060 + $0x141] sm:$0xff]
      %v1153 = vld [vmem:[%s1060 + $0x151] sm:$0xff]
      %v1154 = vld [vmem:[%s1060 + $0x159] sm:$0xff]
      %v1155 = vld [vmem:[%s1060 + $0x169] sm:$0xff]
      %v1156 = vld [vmem:[%s1060 + $0x171] sm:$0xff]
      %v1157 = vld [vmem:[%s1060 + $0x1b1] sm:$0xff]
      %v1158 = vld [vmem:[%s1060 + $0x1b9] sm:$0xff]
      %v1159 = vld [vmem:[%s1060 + $0x1c9] sm:$0xff]
      %v1160 = vld [vmem:[%s1060 + $0x1d1] sm:$0xff]
      %v1161 = vld [vmem:[%s1060 + $0x1e1] sm:$0xff]
      %v1162 = vld [vmem:[%s1060 + $0x1e9] sm:$0xff]
      %v1163 = vld [vmem:[%s1060 + $0x1f9] sm:$0xff]
      %v1164 = vld [vmem:[%s1060 + $0x201] sm:$0xff]
      %v1165 = vld [vmem:[%s1060 + $0x211] sm:$0xff]
      %v1166 = vld [vmem:[%s1060 + $0x219] sm:$0xff]
      %v1167 = vld [vmem:[%s1060 + $0x229] sm:$0xff]
      %v1168 = vld [vmem:[%s1060 + $0x231] sm:$0xff]
      %v1169 = vld [vmem:[%s1060 + $0x241] sm:$0xff]
      %v1170 = vld [vmem:[%s1060 + $0x249] sm:$0xff]
      %v1171 = vld [vmem:[%s1060 + $0x259] sm:$0xff]
      %v1172 = vld [vmem:[%s1060 + $0x261] sm:$0xff]
      %v1173 = vld [vmem:[%s1060 + $0x271] sm:$0xff]
      %v1174 = vld [vmem:[%s1060 + $0x279] sm:$0xff]
      %v1175 = vld [vmem:[%s1060 + $0x289] sm:$0xff]
      %v1176 = vld [vmem:[%s1060 + $0x291] sm:$0xff]
      %v1177 = vld [vmem:[%s1060 + $0x2a1] sm:$0xff]
      %v1178 = vld [vmem:[%s1060 + $0x2a9] sm:$0xff]
      %v1179 = vld [vmem:[%s1060 + $0x2b9] sm:$0xff]
      %v1180 = vld [vmem:[%s1060 + $0x2c1] sm:$0xff]
      %v1181 = vld [vmem:[%s1060 + $0x2d1] sm:$0xff]
      %v1182 = vld [vmem:[%s1060 + $0x2d9] sm:$0xff]
      %v1183 = vld [vmem:[%s1060 + $0x2e9] sm:$0xff]
      %v1184 = vld [vmem:[%s1060 + $0x2f1] sm:$0xff]
      %v1185 = vld [vmem:[%s1060 + $0x301] sm:$0xff]
      %v1186 = vld [vmem:[%s1060 + $0x309] sm:$0xff]
      %v1187 = vld [vmem:[%s1060 + $0x319] sm:$0xff]
      %v1188 = vld [vmem:[%s1060 + $0x321] sm:$0xff]
      %v1189 = vld [vmem:[%s1060 + $0x2] sm:$0xff]
      %v1190 = vld [vmem:[%s1060 + $0xa] sm:$0xff]
      %v1191 = vld [vmem:[%s1060 + $0x1a] sm:$0xff]
      %v1192 = vld [vmem:[%s1060 + $0x22] sm:$0xff]
      %v1193 = vld [vmem:[%s1060 + $0x32] sm:$0xff]
      %v1194 = vld [vmem:[%s1060 + $0x3a] sm:$0xff]
      %v1195 = vld [vmem:[%s1060 + $0x4a] sm:$0xff]
      %v1196 = vld [vmem:[%s1060 + $0x52] sm:$0xff]
      %v1197 = vld [vmem:[%s1060 + $0x62] sm:$0xff]
      %v1198 = vld [vmem:[%s1060 + $0x6a] sm:$0xff]
      %v1199 = vld [vmem:[%s1060 + $0x7a] sm:$0xff]
      %v1200 = vld [vmem:[%s1060 + $0x82] sm:$0xff]
      %v1201 = vld [vmem:[%s1060 + $0x92] sm:$0xff]
      %v1202 = vld [vmem:[%s1060 + $0x9a] sm:$0xff]
      %v1203 = vld [vmem:[%s1060 + $0xaa] sm:$0xff]
      %v1204 = vld [vmem:[%s1060 + $0xb2] sm:$0xff]
      %v1205 = vld [vmem:[%s1060 + $0xc2] sm:$0xff]
      %v1206 = vld [vmem:[%s1060 + $0xca] sm:$0xff]
      %v1207 = vld [vmem:[%s1060 + $0xda] sm:$0xff]
      %v1208 = vld [vmem:[%s1060 + $0xe2] sm:$0xff]
      %v1209 = vld [vmem:[%s1060 + $0xf2] sm:$0xff]
      %v1210 = vld [vmem:[%s1060 + $0xfa] sm:$0xff]
      %v1211 = vld [vmem:[%s1060 + $0x10a] sm:$0xff]
      %v1212 = vld [vmem:[%s1060 + $0x112] sm:$0xff]
      %v1213 = vld [vmem:[%s1060 + $0x122] sm:$0xff]
      %v1214 = vld [vmem:[%s1060 + $0x12a] sm:$0xff]
      %v1215 = vld [vmem:[%s1060 + $0x13a] sm:$0xff]
      %v1216 = vld [vmem:[%s1060 + $0x142] sm:$0xff]
      %v1217 = vld [vmem:[%s1060 + $0x152] sm:$0xff]
      %v1218 = vld [vmem:[%s1060 + $0x15a] sm:$0xff]
      %v1219 = vld [vmem:[%s1060 + $0x16a] sm:$0xff]
      %v1220 = vld [vmem:[%s1060 + $0x172] sm:$0xff]
      %v1221 = vld [vmem:[%s1060 + $0x1b2] sm:$0xff]
      %v1222 = vld [vmem:[%s1060 + $0x1ba] sm:$0xff]
      %v1223 = vld [vmem:[%s1060 + $0x1ca] sm:$0xff]
      %v1224 = vld [vmem:[%s1060 + $0x1d2] sm:$0xff]
      %v1225 = vld [vmem:[%s1060 + $0x1e2] sm:$0xff]
      %v1226 = vld [vmem:[%s1060 + $0x1ea] sm:$0xff]
      %v1227 = vld [vmem:[%s1060 + $0x1fa] sm:$0xff]
      %v1228 = vld [vmem:[%s1060 + $0x202] sm:$0xff]
      %v1229 = vld [vmem:[%s1060 + $0x212] sm:$0xff]
      %v1230 = vld [vmem:[%s1060 + $0x21a] sm:$0xff]
      %v1231 = vld [vmem:[%s1060 + $0x22a] sm:$0xff]
      %v1232 = vld [vmem:[%s1060 + $0x232] sm:$0xff]
      %v1233 = vld [vmem:[%s1060 + $0x242] sm:$0xff]
      %v1234 = vld [vmem:[%s1060 + $0x24a] sm:$0xff]
      %v1235 = vld [vmem:[%s1060 + $0x25a] sm:$0xff]
      %v1236 = vld [vmem:[%s1060 + $0x262] sm:$0xff]
      %v1237 = vld [vmem:[%s1060 + $0x272] sm:$0xff]
      %v1238 = vld [vmem:[%s1060 + $0x27a] sm:$0xff]
      %v1239 = vld [vmem:[%s1060 + $0x28a] sm:$0xff]
      %v1240 = vld [vmem:[%s1060 + $0x292] sm:$0xff]
      %v1241 = vld [vmem:[%s1060 + $0x2a2] sm:$0xff]
      %v1242 = vld [vmem:[%s1060 + $0x2aa] sm:$0xff]
      %v1243 = vld [vmem:[%s1060 + $0x2ba] sm:$0xff]
      %v1244 = vld [vmem:[%s1060 + $0x2c2] sm:$0xff]
      %v1245 = vld [vmem:[%s1060 + $0x2d2] sm:$0xff]
      %v1246 = vld [vmem:[%s1060 + $0x2da] sm:$0xff]
      %v1247 = vld [vmem:[%s1060 + $0x2ea] sm:$0xff]
      %v1248 = vld [vmem:[%s1060 + $0x2f2] sm:$0xff]
      %v1249 = vld [vmem:[%s1060 + $0x302] sm:$0xff]
      %v1250 = vld [vmem:[%s1060 + $0x30a] sm:$0xff]
      %v1251 = vld [vmem:[%s1060 + $0x31a] sm:$0xff]
      %v1252 = vld [vmem:[%s1060 + $0x322] sm:$0xff]
      %1317 = vrot.lane.b32.xlu0 %v1125, 64
      %v1318 = vpop.permute.xlu0 %1317
      %1319 = vrot.lane.b32.xlu0 %v1126, 64
      %v1320 = vpop.permute.xlu0 %1319
      %1321 = vrot.lane.b32.xlu0 %v1127, 64
      %v1322 = vpop.permute.xlu0 %1321
      %1323 = vrot.lane.b32.xlu0 %v1128, 64
      %v1324 = vpop.permute.xlu0 %1323
      %1325 = vrot.lane.b32.xlu0 %v1129, 64
      %v1326 = vpop.permute.xlu0 %1325
      %1327 = vrot.lane.b32.xlu0 %v1130, 64
      %v1328 = vpop.permute.xlu0 %1327
      %1329 = vrot.lane.b32.xlu0 %v1131, 64
      %v1330 = vpop.permute.xlu0 %1329
      %1331 = vrot.lane.b32.xlu0 %v1132, 64
      %v1332 = vpop.permute.xlu0 %1331
      %1333 = vrot.lane.b32.xlu0 %v1133, 64
      %v1334 = vpop.permute.xlu0 %1333
      %1335 = vrot.lane.b32.xlu0 %v1134, 64
      %v1336 = vpop.permute.xlu0 %1335
      %1337 = vrot.lane.b32.xlu0 %v1135, 64
      %v1338 = vpop.permute.xlu0 %1337
      %1339 = vrot.lane.b32.xlu0 %v1136, 64
      %v1340 = vpop.permute.xlu0 %1339
      %1341 = vrot.lane.b32.xlu0 %v1137, 64
      %v1342 = vpop.permute.xlu0 %1341
      %1343 = vrot.lane.b32.xlu0 %v1138, 64
      %v1344 = vpop.permute.xlu0 %1343
      %1345 = vrot.lane.b32.xlu0 %v1139, 64
      %v1346 = vpop.permute.xlu0 %1345
      %1347 = vrot.lane.b32.xlu0 %v1140, 64
      %v1348 = vpop.permute.xlu0 %1347
      %1349 = vrot.lane.b32.xlu0 %v1141, 64
      %v1350 = vpop.permute.xlu0 %1349
      %1351 = vrot.lane.b32.xlu0 %v1142, 64
      %v1352 = vpop.permute.xlu0 %1351
      %1353 = vrot.lane.b32.xlu0 %v1143, 64
      %v1354 = vpop.permute.xlu0 %1353
      %1355 = vrot.lane.b32.xlu0 %v1144, 64
      %v1356 = vpop.permute.xlu0 %1355
      %1357 = vrot.lane.b32.xlu0 %v1145, 64
      %v1358 = vpop.permute.xlu0 %1357
      %1359 = vrot.lane.b32.xlu0 %v1146, 64
      %v1360 = vpop.permute.xlu0 %1359
      %1361 = vrot.lane.b32.xlu0 %v1147, 64
      %v1362 = vpop.permute.xlu0 %1361
      %1363 = vrot.lane.b32.xlu0 %v1148, 64
      %v1364 = vpop.permute.xlu0 %1363
      %1365 = vrot.lane.b32.xlu0 %v1149, 64
      %v1366 = vpop.permute.xlu0 %1365
      %1367 = vrot.lane.b32.xlu0 %v1150, 64
      %v1368 = vpop.permute.xlu0 %1367
      %1369 = vrot.lane.b32.xlu0 %v1151, 64
      %v1370 = vpop.permute.xlu0 %1369
      %1371 = vrot.lane.b32.xlu0 %v1152, 64
      %v1372 = vpop.permute.xlu0 %1371
      %1373 = vrot.lane.b32.xlu0 %v1153, 64
      %v1374 = vpop.permute.xlu0 %1373
      %1375 = vrot.lane.b32.xlu0 %v1154, 64
      %v1376 = vpop.permute.xlu0 %1375
      %1377 = vrot.lane.b32.xlu0 %v1155, 64
      %v1378 = vpop.permute.xlu0 %1377
      %1379 = vrot.lane.b32.xlu0 %v1156, 64
      %v1380 = vpop.permute.xlu0 %1379
      %1381 = vrot.lane.b32.xlu0 %v1157, 64
      %v1382 = vpop.permute.xlu0 %1381
      %1383 = vrot.lane.b32.xlu0 %v1158, 64
      %v1384 = vpop.permute.xlu0 %1383
      %1385 = vrot.lane.b32.xlu0 %v1159, 64
      %v1386 = vpop.permute.xlu0 %1385
      %1387 = vrot.lane.b32.xlu0 %v1160, 64
      %v1388 = vpop.permute.xlu0 %1387
      %1389 = vrot.lane.b32.xlu0 %v1161, 64
      %v1390 = vpop.permute.xlu0 %1389
      %1391 = vrot.lane.b32.xlu0 %v1162, 64
      %v1392 = vpop.permute.xlu0 %1391
      %1393 = vrot.lane.b32.xlu0 %v1163, 64
      %v1394 = vpop.permute.xlu0 %1393
      %1395 = vrot.lane.b32.xlu0 %v1164, 64
      %v1396 = vpop.permute.xlu0 %1395
      %1397 = vrot.lane.b32.xlu0 %v1165, 64
      %v1398 = vpop.permute.xlu0 %1397
      %1399 = vrot.lane.b32.xlu0 %v1166, 64
      %v1400 = vpop.permute.xlu0 %1399
      %1401 = vrot.lane.b32.xlu0 %v1167, 64
      %v1402 = vpop.permute.xlu0 %1401
      %1403 = vrot.lane.b32.xlu0 %v1168, 64
      %v1404 = vpop.permute.xlu0 %1403
      %1405 = vrot.lane.b32.xlu0 %v1169, 64
      %v1406 = vpop.permute.xlu0 %1405
      %1407 = vrot.lane.b32.xlu0 %v1170, 64
      %v1408 = vpop.permute.xlu0 %1407
      %1409 = vrot.lane.b32.xlu0 %v1171, 64
      %v1410 = vpop.permute.xlu0 %1409
      %1411 = vrot.lane.b32.xlu0 %v1172, 64
      %v1412 = vpop.permute.xlu0 %1411
      %1413 = vrot.lane.b32.xlu0 %v1173, 64
      %v1414 = vpop.permute.xlu0 %1413
      %1415 = vrot.lane.b32.xlu0 %v1174, 64
      %v1416 = vpop.permute.xlu0 %1415
      %1417 = vrot.lane.b32.xlu0 %v1175, 64
      %v1418 = vpop.permute.xlu0 %1417
      %1419 = vrot.lane.b32.xlu0 %v1176, 64
      %v1420 = vpop.permute.xlu0 %1419
      %1421 = vrot.lane.b32.xlu0 %v1177, 64
      %v1422 = vpop.permute.xlu0 %1421
      %1423 = vrot.lane.b32.xlu0 %v1178, 64
      %v1424 = vpop.permute.xlu0 %1423
      %1425 = vrot.lane.b32.xlu0 %v1179, 64
      %v1426 = vpop.permute.xlu0 %1425
      %1427 = vrot.lane.b32.xlu0 %v1180, 64
      %v1428 = vpop.permute.xlu0 %1427
      %1429 = vrot.lane.b32.xlu0 %v1181, 64
      %v1430 = vpop.permute.xlu0 %1429
      %1431 = vrot.lane.b32.xlu0 %v1182, 64
      %v1432 = vpop.permute.xlu0 %1431
      %1433 = vrot.lane.b32.xlu0 %v1183, 64
      %v1434 = vpop.permute.xlu0 %1433
      %1435 = vrot.lane.b32.xlu0 %v1184, 64
      %v1436 = vpop.permute.xlu0 %1435
      %1437 = vrot.lane.b32.xlu0 %v1185, 64
      %v1438 = vpop.permute.xlu0 %1437
      %1439 = vrot.lane.b32.xlu0 %v1186, 64
      %v1440 = vpop.permute.xlu0 %1439
      %1441 = vrot.lane.b32.xlu0 %v1187, 64
      %v1442 = vpop.permute.xlu0 %1441
      %1443 = vrot.lane.b32.xlu0 %v1188, 64
      %v1444 = vpop.permute.xlu0 %1443
      %v1509 = vsel %vm907, %v1061, %v1318
      %v1510 = vsel %vm907, %v1062, %v1320
      %v1511 = vsel %vm907, %v1063, %v1322
      %v1512 = vsel %vm907, %v1064, %v1324
      %v1513 = vsel %vm907, %v1065, %v1326
      %v1514 = vsel %vm907, %v1066, %v1328
      %v1515 = vsel %vm907, %v1067, %v1330
      %v1516 = vsel %vm907, %v1068, %v1332
      %v1517 = vsel %vm907, %v1069, %v1334
      %v1518 = vsel %vm907, %v1070, %v1336
      %v1519 = vsel %vm907, %v1071, %v1338
      %v1520 = vsel %vm907, %v1072, %v1340
      %v1521 = vsel %vm907, %v1073, %v1342
      %v1522 = vsel %vm907, %v1074, %v1344
      %v1523 = vsel %vm907, %v1075, %v1346
      %v1524 = vsel %vm907, %v1076, %v1348
      %v1525 = vsel %vm907, %v1077, %v1350
      %v1526 = vsel %vm907, %v1078, %v1352
      %v1527 = vsel %vm907, %v1079, %v1354
      %v1528 = vsel %vm907, %v1080, %v1356
      %v1529 = vsel %vm907, %v1081, %v1358
      %v1530 = vsel %vm907, %v1082, %v1360
      %v1531 = vsel %vm907, %v1083, %v1362
      %v1532 = vsel %vm907, %v1084, %v1364
      %v1533 = vsel %vm907, %v1085, %v1366
      %v1534 = vsel %vm907, %v1086, %v1368
      %v1535 = vsel %vm907, %v1087, %v1370
      %v1536 = vsel %vm907, %v1088, %v1372
      %v1537 = vsel %vm907, %v1089, %v1374
      %v1538 = vsel %vm907, %v1090, %v1376
      %v1539 = vsel %vm907, %v1091, %v1378
      %v1540 = vsel %vm907, %v1092, %v1380
      %v1541 = vsel %vm907, %v1093, %v1382
      %v1542 = vsel %vm907, %v1094, %v1384
      %v1543 = vsel %vm907, %v1095, %v1386
      %v1544 = vsel %vm907, %v1096, %v1388
      %v1545 = vsel %vm907, %v1097, %v1390
      %v1546 = vsel %vm907, %v1098, %v1392
      %v1547 = vsel %vm907, %v1099, %v1394
      %v1548 = vsel %vm907, %v1100, %v1396
      %v1549 = vsel %vm907, %v1101, %v1398
      %v1550 = vsel %vm907, %v1102, %v1400
      %v1551 = vsel %vm907, %v1103, %v1402
      %v1552 = vsel %vm907, %v1104, %v1404
      %v1553 = vsel %vm907, %v1105, %v1406
      %v1554 = vsel %vm907, %v1106, %v1408
      %v1555 = vsel %vm907, %v1107, %v1410
      %v1556 = vsel %vm907, %v1108, %v1412
      %v1557 = vsel %vm907, %v1109, %v1414
      %v1558 = vsel %vm907, %v1110, %v1416
      %v1559 = vsel %vm907, %v1111, %v1418
      %v1560 = vsel %vm907, %v1112, %v1420
      %v1561 = vsel %vm907, %v1113, %v1422
      %v1562 = vsel %vm907, %v1114, %v1424
      %v1563 = vsel %vm907, %v1115, %v1426
      %v1564 = vsel %vm907, %v1116, %v1428
      %v1565 = vsel %vm907, %v1117, %v1430
      %v1566 = vsel %vm907, %v1118, %v1432
      %v1567 = vsel %vm907, %v1119, %v1434
      %v1568 = vsel %vm907, %v1120, %v1436
      %v1569 = vsel %vm907, %v1121, %v1438
      %v1570 = vsel %vm907, %v1122, %v1440
      %v1571 = vsel %vm907, %v1123, %v1442
      %v1572 = vsel %vm907, %v1124, %v1444
      %v1573 = vpack.c.bf16 %v1510, %v1509
      %v1574 = vpack.c.bf16 %v1190, %v1189
      %v1575 = vpack.c.bf16 %v1512, %v1511
      %v1576 = vpack.c.bf16 %v1192, %v1191
      %v1577 = vpack.c.bf16 %v1514, %v1513
      %v1578 = vpack.c.bf16 %v1194, %v1193
      %v1579 = vpack.c.bf16 %v1516, %v1515
      %v1580 = vpack.c.bf16 %v1196, %v1195
      %v1581 = vpack.c.bf16 %v1518, %v1517
      %v1582 = vpack.c.bf16 %v1198, %v1197
      %v1583 = vpack.c.bf16 %v1520, %v1519
      %v1584 = vpack.c.bf16 %v1200, %v1199
      %v1585 = vpack.c.bf16 %v1522, %v1521
      %v1586 = vpack.c.bf16 %v1202, %v1201
      %v1587 = vpack.c.bf16 %v1524, %v1523
      %v1588 = vpack.c.bf16 %v1204, %v1203
      %v1589 = vpack.c.bf16 %v1526, %v1525
      %v1590 = vpack.c.bf16 %v1206, %v1205
      %v1591 = vpack.c.bf16 %v1528, %v1527
      %v1592 = vpack.c.bf16 %v1208, %v1207
      %v1593 = vpack.c.bf16 %v1530, %v1529
      %v1594 = vpack.c.bf16 %v1210, %v1209
      %v1595 = vpack.c.bf16 %v1532, %v1531
      %v1596 = vpack.c.bf16 %v1212, %v1211
      %v1597 = vpack.c.bf16 %v1534, %v1533
      %v1598 = vpack.c.bf16 %v1214, %v1213
      %v1599 = vpack.c.bf16 %v1536, %v1535
      %v1600 = vpack.c.bf16 %v1216, %v1215
      %v1601 = vpack.c.bf16 %v1538, %v1537
      %v1602 = vpack.c.bf16 %v1218, %v1217
      %v1603 = vpack.c.bf16 %v1540, %v1539
      %v1604 = vpack.c.bf16 %v1220, %v1219
      %v1605 = vpack.c.bf16 %v1542, %v1541
      %v1606 = vpack.c.bf16 %v1222, %v1221
      %v1607 = vpack.c.bf16 %v1544, %v1543
      %v1608 = vpack.c.bf16 %v1224, %v1223
      %v1609 = vpack.c.bf16 %v1546, %v1545
      %v1610 = vpack.c.bf16 %v1226, %v1225
      %v1611 = vpack.c.bf16 %v1548, %v1547
      %v1612 = vpack.c.bf16 %v1228, %v1227
      %v1613 = vpack.c.bf16 %v1550, %v1549
      %v1614 = vpack.c.bf16 %v1230, %v1229
      %v1615 = vpack.c.bf16 %v1552, %v1551
      %v1616 = vpack.c.bf16 %v1232, %v1231
      %v1617 = vpack.c.bf16 %v1554, %v1553
      %v1618 = vpack.c.bf16 %v1234, %v1233
      %v1619 = vpack.c.bf16 %v1556, %v1555
      %v1620 = vpack.c.bf16 %v1236, %v1235
      %v1621 = vpack.c.bf16 %v1558, %v1557
      %v1622 = vpack.c.bf16 %v1238, %v1237
      %v1623 = vpack.c.bf16 %v1560, %v1559
      %v1624 = vpack.c.bf16 %v1240, %v1239
      %v1625 = vpack.c.bf16 %v1562, %v1561
      %v1626 = vpack.c.bf16 %v1242, %v1241
      %v1627 = vpack.c.bf16 %v1564, %v1563
      %v1628 = vpack.c.bf16 %v1244, %v1243
      %v1629 = vpack.c.bf16 %v1566, %v1565
      %v1630 = vpack.c.bf16 %v1246, %v1245
      %v1631 = vpack.c.bf16 %v1568, %v1567
      %v1632 = vpack.c.bf16 %v1248, %v1247
      %v1633 = vpack.c.bf16 %v1570, %v1569
      %v1634 = vpack.c.bf16 %v1250, %v1249
      %v1635 = vpack.c.bf16 %v1572, %v1571
      %v1636 = vpack.c.bf16 %v1252, %v1251
      %s1637 = scalar_lea.vmem %s206, 96
      %v1638 = vld [vmem:[%s1637] sm:$0xf]
      %v1639 = vld [vmem:[%s1637 + $0x4] sm:$0xf]
      %v1640 = vld [vmem:[%s1637 + $0x8] sm:$0xf]
      %v1641 = vld [vmem:[%s1637 + $0xc] sm:$0xf]
      %v1642 = vld [vmem:[%s1637 + $0x10] sm:$0xf]
      %v1643 = vld [vmem:[%s1637 + $0x14] sm:$0xf]
      %v1644 = vld [vmem:[%s1637 + $0x18] sm:$0xf]
      %v1645 = vld [vmem:[%s1637 + $0x1c] sm:$0xf]
      %v1646 = vld [vmem:[%s1637 + $0x20] sm:$0xf]
      %v1647 = vld [vmem:[%s1637 + $0x24] sm:$0xf]
      %v1648 = vld [vmem:[%s1637 + $0x28] sm:$0xf]
      %v1649 = vld [vmem:[%s1637 + $0x2c] sm:$0xf]
      %v1650 = vld [vmem:[%s1637 + $0x30] sm:$0xf]
      %v1651 = vld [vmem:[%s1637 + $0x34] sm:$0xf]
      %v1652 = vld [vmem:[%s1637 + $0x38] sm:$0xf]
      %v1653 = vld [vmem:[%s1637 + $0x3c] sm:$0xf]
      %v1654 = vld [vmem:[%s1637 + $0x40] sm:$0xf]
      %v1655 = vld [vmem:[%s1637 + $0x44] sm:$0xf]
      %v1656 = vld [vmem:[%s1637 + $0x48] sm:$0xf]
      %v1657 = vld [vmem:[%s1637 + $0x4c] sm:$0xf]
      %v1658 = vld [vmem:[%s1637 + $0x50] sm:$0xf]
      %v1659 = vld [vmem:[%s1637 + $0x54] sm:$0xf]
      %v1660 = vld [vmem:[%s1637 + $0x58] sm:$0xf]
      %v1661 = vld [vmem:[%s1637 + $0x5c] sm:$0xf]
      %v1686 = vunpack.c.l.b16 %v1638
      %v1687 = vunpack.c.l.b16 %v1639
      %v1688 = vunpack.c.l.b16 %v1640
      %v1689 = vunpack.c.l.b16 %v1641
      %v1690 = vunpack.c.l.b16 %v1642
      %v1691 = vunpack.c.l.b16 %v1643
      %v1692 = vunpack.c.l.b16 %v1644
      %v1693 = vunpack.c.l.b16 %v1645
      %v1694 = vunpack.c.l.b16 %v1646
      %v1695 = vunpack.c.l.b16 %v1647
      %v1696 = vunpack.c.l.b16 %v1648
      %v1697 = vunpack.c.l.b16 %v1649
      %v1698 = vunpack.c.l.b16 %v1650
      %v1699 = vunpack.c.l.b16 %v1651
      %v1700 = vunpack.c.l.b16 %v1652
      %v1701 = vunpack.c.l.b16 %v1653
      %v1702 = vunpack.c.l.b16 %v1654
      %v1703 = vunpack.c.l.b16 %v1655
      %v1704 = vunpack.c.l.b16 %v1656
      %v1705 = vunpack.c.l.b16 %v1657
      %v1706 = vunpack.c.l.b16 %v1658
      %v1707 = vunpack.c.l.b16 %v1659
      %v1708 = vunpack.c.l.b16 %v1660
      %v1709 = vunpack.c.l.b16 %v1661
      %v1710 = vpack.c.b16 %v1687, %v1686
      %v1711 = vpack.c.b16 %v1689, %v1688
      %v1712 = vpack.c.b16 %v1691, %v1690
      %v1713 = vpack.c.b16 %v1693, %v1692
      %v1714 = vpack.c.b16 %v1695, %v1694
      %v1715 = vpack.c.b16 %v1697, %v1696
      %v1716 = vpack.c.b16 %v1699, %v1698
      %v1717 = vpack.c.b16 %v1701, %v1700
      %v1718 = vpack.c.b16 %v1703, %v1702
      %v1719 = vpack.c.b16 %v1705, %v1704
      %v1720 = vpack.c.b16 %v1707, %v1706
      %v1721 = vpack.c.b16 %v1709, %v1708
      %v1735 = vsel %vm907, %v1574, 0
      %v1738 = vsel %vm907, %v1576, 0
      %v1741 = vsel %vm907, %v1578, 0
      %v1744 = vsel %vm907, %v1580, 0
      %v1747 = vsel %vm907, %v1582, 0
      %v1750 = vsel %vm907, %v1584, 0
      %v1753 = vsel %vm907, %v1586, 0
      %v1756 = vsel %vm907, %v1588, 0
      %v1759 = vsel %vm907, %v1590, 0
      %v1762 = vsel %vm907, %v1592, 0
      %v1765 = vsel %vm907, %v1594, 0
      %v1768 = vsel %vm907, %v1596, 0
      %v1771 = vsel %vm907, %v1598, 0
      %v1774 = vsel %vm907, %v1600, 0
      %v1777 = vsel %vm907, %v1602, 0
      %v1780 = vsel %vm907, %v1604, 0
      %v1783 = vsel %vm907, %v1606, 0
      %v1786 = vsel %vm907, %v1608, 0
      %v1789 = vsel %vm907, %v1610, 0
      %v1792 = vsel %vm907, %v1612, 0
      %v1795 = vsel %vm907, %v1614, 0
      %v1798 = vsel %vm907, %v1616, 0
      %v1801 = vsel %vm907, %v1618, 0
      %v1804 = vsel %vm907, %v1620, 0
      %v1807 = vsel %vm907, %v1622, 0
      %v1810 = vsel %vm907, %v1624, 0
      %v1813 = vsel %vm907, %v1626, 0
      %v1816 = vsel %vm907, %v1628, 0
      %v1819 = vsel %vm907, %v1630, 0
      %v1822 = vsel %vm907, %v1632, 0
      %v1825 = vsel %vm907, %v1634, 0
      %v1828 = vsel %vm907, %v1636, 0
      %1830 = vmatprep.subr.bf16.mxu0 0
      %1831 = vmatpush1.bf16.msra.mxu0 %v1710
      %1832 = vmatprep.subr.bf16.mxu0 0
      %1833 = vmatpush1.bf16.msra.mxu0 %v1711
      %1834 = vmatprep.subr.bf16.mxu0 0
      %1835 = vmatpush1.bf16.msra.mxu0 %v1712
      %1836 = vmatprep.subr.bf16.mxu0 0
      %1837 = vmatpush1.bf16.msra.mxu0 %v1713
      %1838 = vmatprep.subr.bf16.mxu0 0
      %1839 = vmatpush1.bf16.msra.mxu0 %v1714
      %1840 = vmatprep.subr.bf16.mxu0 0
      %1841 = vmatpush1.bf16.msra.mxu0 %v1715
      %1842 = vmatprep.subr.bf16.mxu0 0
      %1843 = vmatpush1.bf16.msra.mxu0 %v1716
      %1844 = vmatprep.subr.bf16.mxu0 0
      %1845 = vmatpush1.bf16.msra.mxu0 %v1717
      %1846 = vmatprep.subr.bf16.mxu0 0
      %1847 = vmatpush1.bf16.msra.mxu0 %v1718
      %1848 = vmatprep.subr.bf16.mxu0 0
      %1849 = vmatpush1.bf16.msra.mxu0 %v1719
      %1850 = vmatprep.subr.bf16.mxu0 0
      %1851 = vmatpush1.bf16.msra.mxu0 %v1720
      %1852 = vmatprep.subr.bf16.mxu0 0
      %1853 = vmatpush1.bf16.msra.mxu0 %v1721
      %1854 = vmatprep.subr.bf16.mxu0 0
      %1855 = vmatpush1.bf16.msra.mxu0 0
      %1856 = vmatprep.subr.bf16.mxu0 0
      %1857 = vmatpush1.bf16.msra.mxu0 0
      %1858 = vmatprep.subr.bf16.mxu0 0
      %1859 = vmatpush1.bf16.msra.mxu0 0
      %1860 = vmatprep.subr.bf16.mxu0 0
      %1861 = vmatpush1.bf16.msra.mxu0 0
      %1862 = vmatprep.mubr.bf16.mxu0 %v1735
      %1863 = vmatmul.mubr.bf16.gmra.mrb[0].mxu0 %v1573
      %v1864 = vpop.f32.mrb[0].mxu0
      %v1865 = vadd.f32 0.0, %v1864
      %v1866 = vpop.f32.mrb[0].mxu0
      %v1867 = vpop.f32.mrb[0].mxu0
      %v1868 = vadd.f32 0.0, %v1867
      %v1869 = vpop.f32.mrb[0].mxu0
      %1870 = vmatprep.mubr.bf16.mxu0 %v1738
      %1871 = vmatmul.mubr.bf16.gmra.mrb[0].mxu0 %v1575
      %v1872 = vpop.f32.mrb[0].mxu0
      %v1873 = vadd.f32 0.0, %v1872
      %v1874 = vpop.f32.mrb[0].mxu0
      %v1875 = vpop.f32.mrb[0].mxu0
      %v1876 = vadd.f32 0.0, %v1875
      %v1877 = vpop.f32.mrb[0].mxu0
      %1878 = vmatprep.mubr.bf16.mxu0 %v1741
      %1879 = vmatmul.mubr.bf16.gmra.mrb[0].mxu0 %v1577
      %v1880 = vpop.f32.mrb[0].mxu0
      %v1881 = vadd.f32 0.0, %v1880
      %v1882 = vpop.f32.mrb[0].mxu0
      %v1883 = vpop.f32.mrb[0].mxu0
      %v1884 = vadd.f32 0.0, %v1883
      %v1885 = vpop.f32.mrb[0].mxu0
      %1886 = vmatprep.mubr.bf16.mxu0 %v1744
      %1887 = vmatmul.mubr.bf16.gmra.mrb[0].mxu0 %v1579
      %v1888 = vpop.f32.mrb[0].mxu0
      %v1889 = vadd.f32 0.0, %v1888
      %v1890 = vpop.f32.mrb[0].mxu0
      %v1891 = vpop.f32.mrb[0].mxu0
      %v1892 = vadd.f32 0.0, %v1891
      %v1893 = vpop.f32.mrb[0].mxu0
      %1894 = vmatprep.mubr.bf16.mxu0 %v1747
      %1895 = vmatmul.mubr.bf16.gmra.mrb[0].mxu0 %v1581
      %v1896 = vpop.f32.mrb[0].mxu0
      %v1897 = vadd.f32 0.0, %v1896
      %v1898 = vpop.f32.mrb[0].mxu0
      %v1899 = vpop.f32.mrb[0].mxu0
      %v1900 = vadd.f32 0.0, %v1899
      %v1901 = vpop.f32.mrb[0].mxu0
      %1902 = vmatprep.mubr.bf16.mxu0 %v1750
      %1903 = vmatmul.mubr.bf16.gmra.mrb[0].mxu0 %v1583
      %v1904 = vpop.f32.mrb[0].mxu0
      %v1905 = vadd.f32 0.0, %v1904
      %v1906 = vpop.f32.mrb[0].mxu0
      %v1907 = vpop.f32.mrb[0].mxu0
      %v1908 = vadd.f32 0.0, %v1907
      %v1909 = vpop.f32.mrb[0].mxu0
      %1910 = vmatprep.mubr.bf16.mxu0 %v1753
      %1911 = vmatmul.mubr.bf16.gmra.mrb[0].mxu0 %v1585
      %v1912 = vpop.f32.mrb[0].mxu0
      %v1913 = vadd.f32 0.0, %v1912
      %v1914 = vpop.f32.mrb[0].mxu0
      %v1915 = vpop.f32.mrb[0].mxu0
      %v1916 = vadd.f32 0.0, %v1915
      %v1917 = vpop.f32.mrb[0].mxu0
      %1918 = vmatprep.mubr.bf16.mxu0 %v1756
      %1919 = vmatmul.mubr.bf16.gmra.mrb[0].mxu0 %v1587
      %v1920 = vpop.f32.mrb[0].mxu0
      %v1921 = vadd.f32 0.0, %v1920
      %v1922 = vpop.f32.mrb[0].mxu0
      %v1923 = vpop.f32.mrb[0].mxu0
      %v1924 = vadd.f32 0.0, %v1923
      %v1925 = vpop.f32.mrb[0].mxu0
      %1926 = vmatprep.mubr.bf16.mxu0 %v1759
      %1927 = vmatmul.mubr.bf16.gmra.mrb[0].mxu0 %v1589
      %v1928 = vpop.f32.mrb[0].mxu0
      %v1929 = vadd.f32 0.0, %v1928
      %v1930 = vpop.f32.mrb[0].mxu0
      %v1931 = vpop.f32.mrb[0].mxu0
      %v1932 = vadd.f32 0.0, %v1931
      %v1933 = vpop.f32.mrb[0].mxu0
      %1934 = vmatprep.mubr.bf16.mxu0 %v1762
      %1935 = vmatmul.mubr.bf16.gmra.mrb[0].mxu0 %v1591
      %v1936 = vpop.f32.mrb[0].mxu0
      %v1937 = vadd.f32 0.0, %v1936
      %v1938 = vpop.f32.mrb[0].mxu0
      %v1939 = vpop.f32.mrb[0].mxu0
      %v1940 = vadd.f32 0.0, %v1939
      %v1941 = vpop.f32.mrb[0].mxu0
      %1942 = vmatprep.mubr.bf16.mxu0 %v1765
      %1943 = vmatmul.mubr.bf16.gmra.mrb[0].mxu0 %v1593
      %v1944 = vpop.f32.mrb[0].mxu0
      %v1945 = vadd.f32 0.0, %v1944
      %v1946 = vpop.f32.mrb[0].mxu0
      %v1947 = vpop.f32.mrb[0].mxu0
      %v1948 = vadd.f32 0.0, %v1947
      %v1949 = vpop.f32.mrb[0].mxu0
      %1950 = vmatprep.mubr.bf16.mxu0 %v1768
      %1951 = vmatmul.mubr.bf16.gmra.mrb[0].mxu0 %v1595
      %v1952 = vpop.f32.mrb[0].mxu0
      %v1953 = vadd.f32 0.0, %v1952
      %v1954 = vpop.f32.mrb[0].mxu0
      %v1955 = vpop.f32.mrb[0].mxu0
      %v1956 = vadd.f32 0.0, %v1955
      %v1957 = vpop.f32.mrb[0].mxu0
      %1958 = vmatprep.mubr.bf16.mxu0 %v1771
      %1959 = vmatmul.mubr.bf16.gmra.mrb[0].mxu0 %v1597
      %v1960 = vpop.f32.mrb[0].mxu0
      %v1961 = vadd.f32 0.0, %v1960
      %v1962 = vpop.f32.mrb[0].mxu0
      %v1963 = vpop.f32.mrb[0].mxu0
      %v1964 = vadd.f32 0.0, %v1963
      %v1965 = vpop.f32.mrb[0].mxu0
      %1966 = vmatprep.mubr.bf16.mxu0 %v1774
      %1967 = vmatmul.mubr.bf16.gmra.mrb[0].mxu0 %v1599
      %v1968 = vpop.f32.mrb[0].mxu0
      %v1969 = vadd.f32 0.0, %v1968
      %v1970 = vpop.f32.mrb[0].mxu0
      %v1971 = vpop.f32.mrb[0].mxu0
      %v1972 = vadd.f32 0.0, %v1971
      %v1973 = vpop.f32.mrb[0].mxu0
      %1974 = vmatprep.mubr.bf16.mxu0 %v1777
      %1975 = vmatmul.mubr.bf16.gmra.mrb[0].mxu0 %v1601
      %v1976 = vpop.f32.mrb[0].mxu0
      %v1977 = vadd.f32 0.0, %v1976
      %v1978 = vpop.f32.mrb[0].mxu0
      %v1979 = vpop.f32.mrb[0].mxu0
      %v1980 = vadd.f32 0.0, %v1979
      %v1981 = vpop.f32.mrb[0].mxu0
      %1982 = vmatprep.mubr.bf16.mxu0 %v1780
      %1983 = vmatmul.mubr.bf16.gmra.mrb[0].mxu0 %v1603
      %v1984 = vpop.f32.mrb[0].mxu0
      %v1985 = vadd.f32 0.0, %v1984
      %v1986 = vpop.f32.mrb[0].mxu0
      %v1987 = vpop.f32.mrb[0].mxu0
      %v1988 = vadd.f32 0.0, %v1987
      %v1989 = vpop.f32.mrb[0].mxu0
      %1990 = vmatprep.mubr.bf16.mxu0 %v1783
      %1991 = vmatmul.mubr.bf16.gmra.mrb[0].mxu0 %v1605
      %v1992 = vpop.f32.mrb[0].mxu0
      %v1993 = vadd.f32 0.0, %v1992
      %v1994 = vpop.f32.mrb[0].mxu0
      %v1995 = vpop.f32.mrb[0].mxu0
      %v1996 = vadd.f32 0.0, %v1995
      %v1997 = vpop.f32.mrb[0].mxu0
      %1998 = vmatprep.mubr.bf16.mxu0 %v1786
      %1999 = vmatmul.mubr.bf16.gmra.mrb[0].mxu0 %v1607
      %v2000 = vpop.f32.mrb[0].mxu0
      %v2001 = vadd.f32 0.0, %v2000
      %v2002 = vpop.f32.mrb[0].mxu0
      %v2003 = vpop.f32.mrb[0].mxu0
      %v2004 = vadd.f32 0.0, %v2003
      %v2005 = vpop.f32.mrb[0].mxu0
      %2006 = vmatprep.mubr.bf16.mxu0 %v1789
      %2007 = vmatmul.mubr.bf16.gmra.mrb[0].mxu0 %v1609
      %v2008 = vpop.f32.mrb[0].mxu0
      %v2009 = vadd.f32 0.0, %v2008
      %v2010 = vpop.f32.mrb[0].mxu0
      %v2011 = vpop.f32.mrb[0].mxu0
      %v2012 = vadd.f32 0.0, %v2011
      %v2013 = vpop.f32.mrb[0].mxu0
      %2014 = vmatprep.mubr.bf16.mxu0 %v1792
      %2015 = vmatmul.mubr.bf16.gmra.mrb[0].mxu0 %v1611
      %v2016 = vpop.f32.mrb[0].mxu0
      %v2017 = vadd.f32 0.0, %v2016
      %v2018 = vpop.f32.mrb[0].mxu0
      %v2019 = vpop.f32.mrb[0].mxu0
      %v2020 = vadd.f32 0.0, %v2019
      %v2021 = vpop.f32.mrb[0].mxu0
      %2022 = vmatprep.mubr.bf16.mxu0 %v1795
      %2023 = vmatmul.mubr.bf16.gmra.mrb[0].mxu0 %v1613
      %v2024 = vpop.f32.mrb[0].mxu0
      %v2025 = vadd.f32 0.0, %v2024
      %v2026 = vpop.f32.mrb[0].mxu0
      %v2027 = vpop.f32.mrb[0].mxu0
      %v2028 = vadd.f32 0.0, %v2027
      %v2029 = vpop.f32.mrb[0].mxu0
      %2030 = vmatprep.mubr.bf16.mxu0 %v1798
      %2031 = vmatmul.mubr.bf16.gmra.mrb[0].mxu0 %v1615
      %v2032 = vpop.f32.mrb[0].mxu0
      %v2033 = vadd.f32 0.0, %v2032
      %v2034 = vpop.f32.mrb[0].mxu0
      %v2035 = vpop.f32.mrb[0].mxu0
      %v2036 = vadd.f32 0.0, %v2035
      %v2037 = vpop.f32.mrb[0].mxu0
      %2038 = vmatprep.mubr.bf16.mxu0 %v1801
      %2039 = vmatmul.mubr.bf16.gmra.mrb[0].mxu0 %v1617
      %v2040 = vpop.f32.mrb[0].mxu0
      %v2041 = vadd.f32 0.0, %v2040
      %v2042 = vpop.f32.mrb[0].mxu0
      %v2043 = vpop.f32.mrb[0].mxu0
      %v2044 = vadd.f32 0.0, %v2043
      %v2045 = vpop.f32.mrb[0].mxu0
      %2046 = vmatprep.mubr.bf16.mxu0 %v1804
      %2047 = vmatmul.mubr.bf16.gmra.mrb[0].mxu0 %v1619
      %v2048 = vpop.f32.mrb[0].mxu0
      %v2049 = vadd.f32 0.0, %v2048
      %v2050 = vpop.f32.mrb[0].mxu0
      %v2051 = vpop.f32.mrb[0].mxu0
      %v2052 = vadd.f32 0.0, %v2051
      %v2053 = vpop.f32.mrb[0].mxu0
      %2054 = vmatprep.mubr.bf16.mxu0 %v1807
      %2055 = vmatmul.mubr.bf16.gmra.mrb[0].mxu0 %v1621
      %v2056 = vpop.f32.mrb[0].mxu0
      %v2057 = vadd.f32 0.0, %v2056
      %v2058 = vpop.f32.mrb[0].mxu0
      %v2059 = vpop.f32.mrb[0].mxu0
      %v2060 = vadd.f32 0.0, %v2059
      %v2061 = vpop.f32.mrb[0].mxu0
      %2062 = vmatprep.mubr.bf16.mxu0 %v1810
      %2063 = vmatmul.mubr.bf16.gmra.mrb[0].mxu0 %v1623
      %v2064 = vpop.f32.mrb[0].mxu0
      %v2065 = vadd.f32 0.0, %v2064
      %v2066 = vpop.f32.mrb[0].mxu0
      %v2067 = vpop.f32.mrb[0].mxu0
      %v2068 = vadd.f32 0.0, %v2067
      %v2069 = vpop.f32.mrb[0].mxu0
      %2070 = vmatprep.mubr.bf16.mxu0 %v1813
      %2071 = vmatmul.mubr.bf16.gmra.mrb[0].mxu0 %v1625
      %v2072 = vpop.f32.mrb[0].mxu0
      %v2073 = vadd.f32 0.0, %v2072
      %v2074 = vpop.f32.mrb[0].mxu0
      %v2075 = vpop.f32.mrb[0].mxu0
      %v2076 = vadd.f32 0.0, %v2075
      %v2077 = vpop.f32.mrb[0].mxu0
      %2078 = vmatprep.mubr.bf16.mxu0 %v1816
      %2079 = vmatmul.mubr.bf16.gmra.mrb[0].mxu0 %v1627
      %v2080 = vpop.f32.mrb[0].mxu0
      %v2081 = vadd.f32 0.0, %v2080
      %v2082 = vpop.f32.mrb[0].mxu0
      %v2083 = vpop.f32.mrb[0].mxu0
      %v2084 = vadd.f32 0.0, %v2083
      %v2085 = vpop.f32.mrb[0].mxu0
      %2086 = vmatprep.mubr.bf16.mxu0 %v1819
      %2087 = vmatmul.mubr.bf16.gmra.mrb[0].mxu0 %v1629
      %v2088 = vpop.f32.mrb[0].mxu0
      %v2089 = vadd.f32 0.0, %v2088
      %v2090 = vpop.f32.mrb[0].mxu0
      %v2091 = vpop.f32.mrb[0].mxu0
      %v2092 = vadd.f32 0.0, %v2091
      %v2093 = vpop.f32.mrb[0].mxu0
      %2094 = vmatprep.mubr.bf16.mxu0 %v1822
      %2095 = vmatmul.mubr.bf16.gmra.mrb[0].mxu0 %v1631
      %v2096 = vpop.f32.mrb[0].mxu0
      %v2097 = vadd.f32 0.0, %v2096
      %v2098 = vpop.f32.mrb[0].mxu0
      %v2099 = vpop.f32.mrb[0].mxu0
      %v2100 = vadd.f32 0.0, %v2099
      %v2101 = vpop.f32.mrb[0].mxu0
      %2102 = vmatprep.mubr.bf16.mxu0 %v1825
      %2103 = vmatmul.mubr.bf16.gmra.mrb[0].mxu0 %v1633
      %v2104 = vpop.f32.mrb[0].mxu0
      %v2105 = vadd.f32 0.0, %v2104
      %v2106 = vpop.f32.mrb[0].mxu0
      %v2107 = vpop.f32.mrb[0].mxu0
      %v2108 = vadd.f32 0.0, %v2107
      %v2109 = vpop.f32.mrb[0].mxu0
      %2110 = vmatprep.mubr.bf16.mxu0 %v1828
      %2111 = vmatmul.mubr.bf16.gmra.mrb[0].mxu0 %v1635
      %v2112 = vpop.f32.mrb[0].mxu0
      %v2113 = vadd.f32 0.0, %v2112
      %v2114 = vpop.f32.mrb[0].mxu0
      %v2115 = vpop.f32.mrb[0].mxu0
      %v2116 = vadd.f32 0.0, %v2115
      %v2117 = vpop.f32.mrb[0].mxu0
      %2118 = vdwg.mxu0
      %v2143 = vunpack.c.l.b16 %v1036
      %v2144 = vunpack.c.l.b16 %v1037
      %v2145 = vunpack.c.l.b16 %v1038
      %v2146 = vunpack.c.l.b16 %v1039
      %v2147 = vunpack.c.l.b16 %v1040
      %v2148 = vunpack.c.l.b16 %v1041
      %v2149 = vunpack.c.l.b16 %v1042
      %v2150 = vunpack.c.l.b16 %v1043
      %v2151 = vunpack.c.l.b16 %v1044
      %v2152 = vunpack.c.l.b16 %v1045
      %v2153 = vunpack.c.l.b16 %v1046
      %v2154 = vunpack.c.l.b16 %v1047
      %v2155 = vunpack.c.l.b16 %v1048
      %v2156 = vunpack.c.l.b16 %v1049
      %v2157 = vunpack.c.l.b16 %v1050
      %v2158 = vunpack.c.l.b16 %v1051
      %v2159 = vunpack.c.l.b16 %v1052
      %v2160 = vunpack.c.l.b16 %v1053
      %v2161 = vunpack.c.l.b16 %v1054
      %v2162 = vunpack.c.l.b16 %v1055
      %v2163 = vunpack.c.l.b16 %v1056
      %v2164 = vunpack.c.l.b16 %v1057
      %v2165 = vunpack.c.l.b16 %v1058
      %v2166 = vunpack.c.l.b16 %v1059
      %v2167 = vpack.c.b16 %v2144, %v2143
      %v2168 = vpack.c.b16 %v2146, %v2145
      %v2169 = vpack.c.b16 %v2148, %v2147
      %v2170 = vpack.c.b16 %v2150, %v2149
      %v2171 = vpack.c.b16 %v2152, %v2151
      %v2172 = vpack.c.b16 %v2154, %v2153
      %v2173 = vpack.c.b16 %v2156, %v2155
      %v2174 = vpack.c.b16 %v2158, %v2157
      %v2175 = vpack.c.b16 %v2160, %v2159
      %v2176 = vpack.c.b16 %v2162, %v2161
      %v2177 = vpack.c.b16 %v2164, %v2163
      %v2178 = vpack.c.b16 %v2166, %v2165
      %v2192 = vsel %vm907, %v973, 0
      %v2195 = vsel %vm907, %v975, 0
      %v2198 = vsel %vm907, %v977, 0
      %v2201 = vsel %vm907, %v979, 0
      %v2204 = vsel %vm907, %v981, 0
      %v2207 = vsel %vm907, %v983, 0
      %v2210 = vsel %vm907, %v985, 0
      %v2213 = vsel %vm907, %v987, 0
      %v2216 = vsel %vm907, %v989, 0
      %v2219 = vsel %vm907, %v991, 0
      %v2222 = vsel %vm907, %v993, 0
      %v2225 = vsel %vm907, %v995, 0
      %v2228 = vsel %vm907, %v997, 0
      %v2231 = vsel %vm907, %v999, 0
      %v2234 = vsel %vm907, %v1001, 0
      %v2237 = vsel %vm907, %v1003, 0
      %v2240 = vsel %vm907, %v1005, 0
      %v2243 = vsel %vm907, %v1007, 0
      %v2246 = vsel %vm907, %v1009, 0
      %v2249 = vsel %vm907, %v1011, 0
      %v2252 = vsel %vm907, %v1013, 0
      %v2255 = vsel %vm907, %v1015, 0
      %v2258 = vsel %vm907, %v1017, 0
      %v2261 = vsel %vm907, %v1019, 0
      %v2264 = vsel %vm907, %v1021, 0
      %v2267 = vsel %vm907, %v1023, 0
      %v2270 = vsel %vm907, %v1025, 0
      %v2273 = vsel %vm907, %v1027, 0
      %v2276 = vsel %vm907, %v1029, 0
      %v2279 = vsel %vm907, %v1031, 0
      %v2282 = vsel %vm907, %v1033, 0
      %v2285 = vsel %vm907, %v1035, 0
      %2287 = vmatprep.subr.bf16.mxu0 0
      %2288 = vmatpush1.bf16.msra.mxu0 %v2167
      %2289 = vmatprep.subr.bf16.mxu0 0
      %2290 = vmatpush1.bf16.msra.mxu0 %v2168
      %2291 = vmatprep.subr.bf16.mxu0 0
      %2292 = vmatpush1.bf16.msra.mxu0 %v2169
      %2293 = vmatprep.subr.bf16.mxu0 0
      %2294 = vmatpush1.bf16.msra.mxu0 %v2170
      %2295 = vmatprep.subr.bf16.mxu0 0
      %2296 = vmatpush1.bf16.msra.mxu0 %v2171
      %2297 = vmatprep.subr.bf16.mxu0 0
      %2298 = vmatpush1.bf16.msra.mxu0 %v2172
      %2299 = vmatprep.subr.bf16.mxu0 0
      %2300 = vmatpush1.bf16.msra.mxu0 %v2173
      %2301 = vmatprep.subr.bf16.mxu0 0
      %2302 = vmatpush1.bf16.msra.mxu0 %v2174
      %2303 = vmatprep.subr.bf16.mxu0 0
      %2304 = vmatpush1.bf16.msra.mxu0 %v2175
      %2305 = vmatprep.subr.bf16.mxu0 0
      %2306 = vmatpush1.bf16.msra.mxu0 %v2176
      %2307 = vmatprep.subr.bf16.mxu0 0
      %2308 = vmatpush1.bf16.msra.mxu0 %v2177
      %2309 = vmatprep.subr.bf16.mxu0 0
      %2310 = vmatpush1.bf16.msra.mxu0 %v2178
      %2311 = vmatprep.subr.bf16.mxu0 0
      %2312 = vmatpush1.bf16.msra.mxu0 0
      %2313 = vmatprep.subr.bf16.mxu0 0
      %2314 = vmatpush1.bf16.msra.mxu0 0
      %2315 = vmatprep.subr.bf16.mxu0 0
      %2316 = vmatpush1.bf16.msra.mxu0 0
      %2317 = vmatprep.subr.bf16.mxu0 0
      %2318 = vmatpush1.bf16.msra.mxu0 0
      %2319 = vmatprep.mubr.bf16.mxu0 %v2192
      %2320 = vmatmul.mubr.bf16.gmra.mrb[0].mxu0 %v972
      %v2321 = vpop.f32.mrb[0].mxu0
      %v2322 = vadd.f32 %v1865, %v2321
      %v2323 = vpop.f32.mrb[0].mxu0
      %v2324 = vpop.f32.mrb[0].mxu0
      %v2325 = vadd.f32 %v1868, %v2324
      %v2326 = vpop.f32.mrb[0].mxu0
      %2327 = vmatprep.mubr.bf16.mxu0 %v2195
      %2328 = vmatmul.mubr.bf16.gmra.mrb[0].mxu0 %v974
      %v2329 = vpop.f32.mrb[0].mxu0
      %v2330 = vadd.f32 %v1873, %v2329
      %v2331 = vpop.f32.mrb[0].mxu0
      %v2332 = vpop.f32.mrb[0].mxu0
      %v2333 = vadd.f32 %v1876, %v2332
      %v2334 = vpop.f32.mrb[0].mxu0
      %2335 = vmatprep.mubr.bf16.mxu0 %v2198
      %2336 = vmatmul.mubr.bf16.gmra.mrb[0].mxu0 %v976
      %v2337 = vpop.f32.mrb[0].mxu0
      %v2338 = vadd.f32 %v1881, %v2337
      %v2339 = vpop.f32.mrb[0].mxu0
      %v2340 = vpop.f32.mrb[0].mxu0
      %v2341 = vadd.f32 %v1884, %v2340
      %v2342 = vpop.f32.mrb[0].mxu0
      %2343 = vmatprep.mubr.bf16.mxu0 %v2201
      %2344 = vmatmul.mubr.bf16.gmra.mrb[0].mxu0 %v978
      %v2345 = vpop.f32.mrb[0].mxu0
      %v2346 = vadd.f32 %v1889, %v2345
      %v2347 = vpop.f32.mrb[0].mxu0
      %v2348 = vpop.f32.mrb[0].mxu0
      %v2349 = vadd.f32 %v1892, %v2348
      %v2350 = vpop.f32.mrb[0].mxu0
      %2351 = vmatprep.mubr.bf16.mxu0 %v2204
      %2352 = vmatmul.mubr.bf16.gmra.mrb[0].mxu0 %v980
      %v2353 = vpop.f32.mrb[0].mxu0
      %v2354 = vadd.f32 %v1897, %v2353
      %v2355 = vpop.f32.mrb[0].mxu0
      %v2356 = vpop.f32.mrb[0].mxu0
      %v2357 = vadd.f32 %v1900, %v2356
      %v2358 = vpop.f32.mrb[0].mxu0
      %2359 = vmatprep.mubr.bf16.mxu0 %v2207
      %2360 = vmatmul.mubr.bf16.gmra.mrb[0].mxu0 %v982
      %v2361 = vpop.f32.mrb[0].mxu0
      %v2362 = vadd.f32 %v1905, %v2361
      %v2363 = vpop.f32.mrb[0].mxu0
      %v2364 = vpop.f32.mrb[0].mxu0
      %v2365 = vadd.f32 %v1908, %v2364
      %v2366 = vpop.f32.mrb[0].mxu0
      %2367 = vmatprep.mubr.bf16.mxu0 %v2210
      %2368 = vmatmul.mubr.bf16.gmra.mrb[0].mxu0 %v984
      %v2369 = vpop.f32.mrb[0].mxu0
      %v2370 = vadd.f32 %v1913, %v2369
      %v2371 = vpop.f32.mrb[0].mxu0
      %v2372 = vpop.f32.mrb[0].mxu0
      %v2373 = vadd.f32 %v1916, %v2372
      %v2374 = vpop.f32.mrb[0].mxu0
      %2375 = vmatprep.mubr.bf16.mxu0 %v2213
      %2376 = vmatmul.mubr.bf16.gmra.mrb[0].mxu0 %v986
      %v2377 = vpop.f32.mrb[0].mxu0
      %v2378 = vadd.f32 %v1921, %v2377
      %v2379 = vpop.f32.mrb[0].mxu0
      %v2380 = vpop.f32.mrb[0].mxu0
      %v2381 = vadd.f32 %v1924, %v2380
      %v2382 = vpop.f32.mrb[0].mxu0
      %2383 = vmatprep.mubr.bf16.mxu0 %v2216
      %2384 = vmatmul.mubr.bf16.gmra.mrb[0].mxu0 %v988
      %v2385 = vpop.f32.mrb[0].mxu0
      %v2386 = vadd.f32 %v1929, %v2385
      %v2387 = vpop.f32.mrb[0].mxu0
      %v2388 = vpop.f32.mrb[0].mxu0
      %v2389 = vadd.f32 %v1932, %v2388
      %v2390 = vpop.f32.mrb[0].mxu0
      %2391 = vmatprep.mubr.bf16.mxu0 %v2219
      %2392 = vmatmul.mubr.bf16.gmra.mrb[0].mxu0 %v990
      %v2393 = vpop.f32.mrb[0].mxu0
      %v2394 = vadd.f32 %v1937, %v2393
      %v2395 = vpop.f32.mrb[0].mxu0
      %v2396 = vpop.f32.mrb[0].mxu0
      %v2397 = vadd.f32 %v1940, %v2396
      %v2398 = vpop.f32.mrb[0].mxu0
      %2399 = vmatprep.mubr.bf16.mxu0 %v2222
      %2400 = vmatmul.mubr.bf16.gmra.mrb[0].mxu0 %v992
      %v2401 = vpop.f32.mrb[0].mxu0
      %v2402 = vadd.f32 %v1945, %v2401
      %v2403 = vpop.f32.mrb[0].mxu0
      %v2404 = vpop.f32.mrb[0].mxu0
      %v2405 = vadd.f32 %v1948, %v2404
      %v2406 = vpop.f32.mrb[0].mxu0
      %2407 = vmatprep.mubr.bf16.mxu0 %v2225
      %2408 = vmatmul.mubr.bf16.gmra.mrb[0].mxu0 %v994
      %v2409 = vpop.f32.mrb[0].mxu0
      %v2410 = vadd.f32 %v1953, %v2409
      %v2411 = vpop.f32.mrb[0].mxu0
      %v2412 = vpop.f32.mrb[0].mxu0
      %v2413 = vadd.f32 %v1956, %v2412
      %v2414 = vpop.f32.mrb[0].mxu0
      %2415 = vmatprep.mubr.bf16.mxu0 %v2228
      %2416 = vmatmul.mubr.bf16.gmra.mrb[0].mxu0 %v996
      %v2417 = vpop.f32.mrb[0].mxu0
      %v2418 = vadd.f32 %v1961, %v2417
      %v2419 = vpop.f32.mrb[0].mxu0
      %v2420 = vpop.f32.mrb[0].mxu0
      %v2421 = vadd.f32 %v1964, %v2420
      %v2422 = vpop.f32.mrb[0].mxu0
      %2423 = vmatprep.mubr.bf16.mxu0 %v2231
      %2424 = vmatmul.mubr.bf16.gmra.mrb[0].mxu0 %v998
      %v2425 = vpop.f32.mrb[0].mxu0
      %v2426 = vadd.f32 %v1969, %v2425
      %v2427 = vpop.f32.mrb[0].mxu0
      %v2428 = vpop.f32.mrb[0].mxu0
      %v2429 = vadd.f32 %v1972, %v2428
      %v2430 = vpop.f32.mrb[0].mxu0
      %2431 = vmatprep.mubr.bf16.mxu0 %v2234
      %2432 = vmatmul.mubr.bf16.gmra.mrb[0].mxu0 %v1000
      %v2433 = vpop.f32.mrb[0].mxu0
      %v2434 = vadd.f32 %v1977, %v2433
      %v2435 = vpop.f32.mrb[0].mxu0
      %v2436 = vpop.f32.mrb[0].mxu0
      %v2437 = vadd.f32 %v1980, %v2436
      %v2438 = vpop.f32.mrb[0].mxu0
      %2439 = vmatprep.mubr.bf16.mxu0 %v2237
      %2440 = vmatmul.mubr.bf16.gmra.mrb[0].mxu0 %v1002
      %v2441 = vpop.f32.mrb[0].mxu0
      %v2442 = vadd.f32 %v1985, %v2441
      %v2443 = vpop.f32.mrb[0].mxu0
      %v2444 = vpop.f32.mrb[0].mxu0
      %v2445 = vadd.f32 %v1988, %v2444
      %v2446 = vpop.f32.mrb[0].mxu0
      %2447 = vmatprep.mubr.bf16.mxu0 %v2240
      %2448 = vmatmul.mubr.bf16.gmra.mrb[0].mxu0 %v1004
      %v2449 = vpop.f32.mrb[0].mxu0
      %v2450 = vadd.f32 %v1993, %v2449
      %v2451 = vpop.f32.mrb[0].mxu0
      %v2452 = vpop.f32.mrb[0].mxu0
      %v2453 = vadd.f32 %v1996, %v2452
      %v2454 = vpop.f32.mrb[0].mxu0
      %2455 = vmatprep.mubr.bf16.mxu0 %v2243
      %2456 = vmatmul.mubr.bf16.gmra.mrb[0].mxu0 %v1006
      %v2457 = vpop.f32.mrb[0].mxu0
      %v2458 = vadd.f32 %v2001, %v2457
      %v2459 = vpop.f32.mrb[0].mxu0
      %v2460 = vpop.f32.mrb[0].mxu0
      %v2461 = vadd.f32 %v2004, %v2460
      %v2462 = vpop.f32.mrb[0].mxu0
      %2463 = vmatprep.mubr.bf16.mxu0 %v2246
      %2464 = vmatmul.mubr.bf16.gmra.mrb[0].mxu0 %v1008
      %v2465 = vpop.f32.mrb[0].mxu0
      %v2466 = vadd.f32 %v2009, %v2465
      %v2467 = vpop.f32.mrb[0].mxu0
      %v2468 = vpop.f32.mrb[0].mxu0
      %v2469 = vadd.f32 %v2012, %v2468
      %v2470 = vpop.f32.mrb[0].mxu0
      %2471 = vmatprep.mubr.bf16.mxu0 %v2249
      %2472 = vmatmul.mubr.bf16.gmra.mrb[0].mxu0 %v1010
      %v2473 = vpop.f32.mrb[0].mxu0
      %v2474 = vadd.f32 %v2017, %v2473
      %v2475 = vpop.f32.mrb[0].mxu0
      %v2476 = vpop.f32.mrb[0].mxu0
      %v2477 = vadd.f32 %v2020, %v2476
      %v2478 = vpop.f32.mrb[0].mxu0
      %2479 = vmatprep.mubr.bf16.mxu0 %v2252
      %2480 = vmatmul.mubr.bf16.gmra.mrb[0].mxu0 %v1012
      %v2481 = vpop.f32.mrb[0].mxu0
      %v2482 = vadd.f32 %v2025, %v2481
      %v2483 = vpop.f32.mrb[0].mxu0
      %v2484 = vpop.f32.mrb[0].mxu0
      %v2485 = vadd.f32 %v2028, %v2484
      %v2486 = vpop.f32.mrb[0].mxu0
      %2487 = vmatprep.mubr.bf16.mxu0 %v2255
      %2488 = vmatmul.mubr.bf16.gmra.mrb[0].mxu0 %v1014
      %v2489 = vpop.f32.mrb[0].mxu0
      %v2490 = vadd.f32 %v2033, %v2489
      %v2491 = vpop.f32.mrb[0].mxu0
      %v2492 = vpop.f32.mrb[0].mxu0
      %v2493 = vadd.f32 %v2036, %v2492
      %v2494 = vpop.f32.mrb[0].mxu0
      %2495 = vmatprep.mubr.bf16.mxu0 %v2258
      %2496 = vmatmul.mubr.bf16.gmra.mrb[0].mxu0 %v1016
      %v2497 = vpop.f32.mrb[0].mxu0
      %v2498 = vadd.f32 %v2041, %v2497
      %v2499 = vpop.f32.mrb[0].mxu0
      %v2500 = vpop.f32.mrb[0].mxu0
      %v2501 = vadd.f32 %v2044, %v2500
      %v2502 = vpop.f32.mrb[0].mxu0
      %2503 = vmatprep.mubr.bf16.mxu0 %v2261
      %2504 = vmatmul.mubr.bf16.gmra.mrb[0].mxu0 %v1018
      %v2505 = vpop.f32.mrb[0].mxu0
      %v2506 = vadd.f32 %v2049, %v2505
      %v2507 = vpop.f32.mrb[0].mxu0
      %v2508 = vpop.f32.mrb[0].mxu0
      %v2509 = vadd.f32 %v2052, %v2508
      %v2510 = vpop.f32.mrb[0].mxu0
      %2511 = vmatprep.mubr.bf16.mxu0 %v2264
      %2512 = vmatmul.mubr.bf16.gmra.mrb[0].mxu0 %v1020
      %v2513 = vpop.f32.mrb[0].mxu0
      %v2514 = vadd.f32 %v2057, %v2513
      %v2515 = vpop.f32.mrb[0].mxu0
      %v2516 = vpop.f32.mrb[0].mxu0
      %v2517 = vadd.f32 %v2060, %v2516
      %v2518 = vpop.f32.mrb[0].mxu0
      %2519 = vmatprep.mubr.bf16.mxu0 %v2267
      %2520 = vmatmul.mubr.bf16.gmra.mrb[0].mxu0 %v1022
      %v2521 = vpop.f32.mrb[0].mxu0
      %v2522 = vadd.f32 %v2065, %v2521
      %v2523 = vpop.f32.mrb[0].mxu0
      %v2524 = vpop.f32.mrb[0].mxu0
      %v2525 = vadd.f32 %v2068, %v2524
      %v2526 = vpop.f32.mrb[0].mxu0
      %2527 = vmatprep.mubr.bf16.mxu0 %v2270
      %2528 = vmatmul.mubr.bf16.gmra.mrb[0].mxu0 %v1024
      %v2529 = vpop.f32.mrb[0].mxu0
      %v2530 = vadd.f32 %v2073, %v2529
      %v2531 = vpop.f32.mrb[0].mxu0
      %v2532 = vpop.f32.mrb[0].mxu0
      %v2533 = vadd.f32 %v2076, %v2532
      %v2534 = vpop.f32.mrb[0].mxu0
      %2535 = vmatprep.mubr.bf16.mxu0 %v2273
      %2536 = vmatmul.mubr.bf16.gmra.mrb[0].mxu0 %v1026
      %v2537 = vpop.f32.mrb[0].mxu0
      %v2538 = vadd.f32 %v2081, %v2537
      %v2539 = vpop.f32.mrb[0].mxu0
      %v2540 = vpop.f32.mrb[0].mxu0
      %v2541 = vadd.f32 %v2084, %v2540
      %v2542 = vpop.f32.mrb[0].mxu0
      %2543 = vmatprep.mubr.bf16.mxu0 %v2276
      %2544 = vmatmul.mubr.bf16.gmra.mrb[0].mxu0 %v1028
      %v2545 = vpop.f32.mrb[0].mxu0
      %v2546 = vadd.f32 %v2089, %v2545
      %v2547 = vpop.f32.mrb[0].mxu0
      %v2548 = vpop.f32.mrb[0].mxu0
      %v2549 = vadd.f32 %v2092, %v2548
      %v2550 = vpop.f32.mrb[0].mxu0
      %2551 = vmatprep.mubr.bf16.mxu0 %v2279
      %2552 = vmatmul.mubr.bf16.gmra.mrb[0].mxu0 %v1030
      %v2553 = vpop.f32.mrb[0].mxu0
      %v2554 = vadd.f32 %v2097, %v2553
      %v2555 = vpop.f32.mrb[0].mxu0
      %v2556 = vpop.f32.mrb[0].mxu0
      %v2557 = vadd.f32 %v2100, %v2556
      %v2558 = vpop.f32.mrb[0].mxu0
      %2559 = vmatprep.mubr.bf16.mxu0 %v2282
      %2560 = vmatmul.mubr.bf16.gmra.mrb[0].mxu0 %v1032
      %v2561 = vpop.f32.mrb[0].mxu0
      %v2562 = vadd.f32 %v2105, %v2561
      %v2563 = vpop.f32.mrb[0].mxu0
      %v2564 = vpop.f32.mrb[0].mxu0
      %v2565 = vadd.f32 %v2108, %v2564
      %v2566 = vpop.f32.mrb[0].mxu0
      %2567 = vmatprep.mubr.bf16.mxu0 %v2285
      %2568 = vmatmul.mubr.bf16.gmra.mrb[0].mxu0 %v1034
      %v2569 = vpop.f32.mrb[0].mxu0
      %v2570 = vadd.f32 %v2113, %v2569
      %v2571 = vpop.f32.mrb[0].mxu0
      %v2572 = vpop.f32.mrb[0].mxu0
      %v2573 = vadd.f32 %v2116, %v2572
      %v2574 = vpop.f32.mrb[0].mxu0
      %2575 = vdwg.mxu0
      %s2576 = scalar_lea.vmem [#allocation2], 48
      %v2577 = vld [vmem:[%s2576] sm:$0xff]
      %v2578 = vld [vmem:[%s2576 + $0x8] sm:$0xff]
      %v2579 = vld [vmem:[%s2576 + $0x18] sm:$0xff]
      %v2580 = vld [vmem:[%s2576 + $0x20] sm:$0xff]
      %v2581 = vld [vmem:[%s2576 + $0x30] sm:$0xff]
      %v2582 = vld [vmem:[%s2576 + $0x38] sm:$0xff]
      %v2583 = vld [vmem:[%s2576 + $0x48] sm:$0xff]
      %v2584 = vld [vmem:[%s2576 + $0x50] sm:$0xff]
      %v2585 = vld [vmem:[%s2576 + $0x60] sm:$0xff]
      %v2586 = vld [vmem:[%s2576 + $0x68] sm:$0xff]
      %v2587 = vld [vmem:[%s2576 + $0x78] sm:$0xff]
      %v2588 = vld [vmem:[%s2576 + $0x80] sm:$0xff]
      %v2589 = vld [vmem:[%s2576 + $0x90] sm:$0xff]
      %v2590 = vld [vmem:[%s2576 + $0x98] sm:$0xff]
      %v2591 = vld [vmem:[%s2576 + $0xa8] sm:$0xff]
      %v2592 = vld [vmem:[%s2576 + $0xb0] sm:$0xff]
      %v2593 = vld [vmem:[%s2576 + $0xc0] sm:$0xff]
      %v2594 = vld [vmem:[%s2576 + $0xc8] sm:$0xff]
      %v2595 = vld [vmem:[%s2576 + $0xd8] sm:$0xff]
      %v2596 = vld [vmem:[%s2576 + $0xe0] sm:$0xff]
      %v2597 = vld [vmem:[%s2576 + $0xf0] sm:$0xff]
      %v2598 = vld [vmem:[%s2576 + $0xf8] sm:$0xff]
      %v2599 = vld [vmem:[%s2576 + $0x108] sm:$0xff]
      %v2600 = vld [vmem:[%s2576 + $0x110] sm:$0xff]
      %v2601 = vld [vmem:[%s2576 + $0x120] sm:$0xff]
      %v2602 = vld [vmem:[%s2576 + $0x128] sm:$0xff]
      %v2603 = vld [vmem:[%s2576 + $0x138] sm:$0xff]
      %v2604 = vld [vmem:[%s2576 + $0x140] sm:$0xff]
      %v2605 = vld [vmem:[%s2576 + $0x150] sm:$0xff]
      %v2606 = vld [vmem:[%s2576 + $0x158] sm:$0xff]
      %v2607 = vld [vmem:[%s2576 + $0x168] sm:$0xff]
      %v2608 = vld [vmem:[%s2576 + $0x170] sm:$0xff]
      %v2609 = vld [vmem:[%s2576 + $0x1b0] sm:$0xff]
      %v2610 = vld [vmem:[%s2576 + $0x1b8] sm:$0xff]
      %v2611 = vld [vmem:[%s2576 + $0x1c8] sm:$0xff]
      %v2612 = vld [vmem:[%s2576 + $0x1d0] sm:$0xff]
      %v2613 = vld [vmem:[%s2576 + $0x1e0] sm:$0xff]
      %v2614 = vld [vmem:[%s2576 + $0x1e8] sm:$0xff]
      %v2615 = vld [vmem:[%s2576 + $0x1f8] sm:$0xff]
      %v2616 = vld [vmem:[%s2576 + $0x200] sm:$0xff]
      %v2617 = vld [vmem:[%s2576 + $0x210] sm:$0xff]
      %v2618 = vld [vmem:[%s2576 + $0x218] sm:$0xff]
      %v2619 = vld [vmem:[%s2576 + $0x228] sm:$0xff]
      %v2620 = vld [vmem:[%s2576 + $0x230] sm:$0xff]
      %v2621 = vld [vmem:[%s2576 + $0x240] sm:$0xff]
      %v2622 = vld [vmem:[%s2576 + $0x248] sm:$0xff]
      %v2623 = vld [vmem:[%s2576 + $0x258] sm:$0xff]
      %v2624 = vld [vmem:[%s2576 + $0x260] sm:$0xff]
      %v2625 = vld [vmem:[%s2576 + $0x270] sm:$0xff]
      %v2626 = vld [vmem:[%s2576 + $0x278] sm:$0xff]
      %v2627 = vld [vmem:[%s2576 + $0x288] sm:$0xff]
      %v2628 = vld [vmem:[%s2576 + $0x290] sm:$0xff]
      %v2629 = vld [vmem:[%s2576 + $0x2a0] sm:$0xff]
      %v2630 = vld [vmem:[%s2576 + $0x2a8] sm:$0xff]
      %v2631 = vld [vmem:[%s2576 + $0x2b8] sm:$0xff]
      %v2632 = vld [vmem:[%s2576 + $0x2c0] sm:$0xff]
      %v2633 = vld [vmem:[%s2576 + $0x2d0] sm:$0xff]
      %v2634 = vld [vmem:[%s2576 + $0x2d8] sm:$0xff]
      %v2635 = vld [vmem:[%s2576 + $0x2e8] sm:$0xff]
      %v2636 = vld [vmem:[%s2576 + $0x2f0] sm:$0xff]
      %v2637 = vld [vmem:[%s2576 + $0x300] sm:$0xff]
      %v2638 = vld [vmem:[%s2576 + $0x308] sm:$0xff]
      %v2639 = vld [vmem:[%s2576 + $0x318] sm:$0xff]
      %v2640 = vld [vmem:[%s2576 + $0x320] sm:$0xff]
      %v2641 = vld [vmem:[%s2576 + $0x1] sm:$0xff]
      %v2642 = vld [vmem:[%s2576 + $0x9] sm:$0xff]
      %v2643 = vld [vmem:[%s2576 + $0x19] sm:$0xff]
      %v2644 = vld [vmem:[%s2576 + $0x21] sm:$0xff]
      %v2645 = vld [vmem:[%s2576 + $0x31] sm:$0xff]
      %v2646 = vld [vmem:[%s2576 + $0x39] sm:$0xff]
      %v2647 = vld [vmem:[%s2576 + $0x49] sm:$0xff]
      %v2648 = vld [vmem:[%s2576 + $0x51] sm:$0xff]
      %v2649 = vld [vmem:[%s2576 + $0x61] sm:$0xff]
      %v2650 = vld [vmem:[%s2576 + $0x69] sm:$0xff]
      %v2651 = vld [vmem:[%s2576 + $0x79] sm:$0xff]
      %v2652 = vld [vmem:[%s2576 + $0x81] sm:$0xff]
      %v2653 = vld [vmem:[%s2576 + $0x91] sm:$0xff]
      %v2654 = vld [vmem:[%s2576 + $0x99] sm:$0xff]
      %v2655 = vld [vmem:[%s2576 + $0xa9] sm:$0xff]
      %v2656 = vld [vmem:[%s2576 + $0xb1] sm:$0xff]
      %v2657 = vld [vmem:[%s2576 + $0xc1] sm:$0xff]
      %v2658 = vld [vmem:[%s2576 + $0xc9] sm:$0xff]
      %v2659 = vld [vmem:[%s2576 + $0xd9] sm:$0xff]
      %v2660 = vld [vmem:[%s2576 + $0xe1] sm:$0xff]
      %v2661 = vld [vmem:[%s2576 + $0xf1] sm:$0xff]
      %v2662 = vld [vmem:[%s2576 + $0xf9] sm:$0xff]
      %v2663 = vld [vmem:[%s2576 + $0x109] sm:$0xff]
      %v2664 = vld [vmem:[%s2576 + $0x111] sm:$0xff]
      %v2665 = vld [vmem:[%s2576 + $0x121] sm:$0xff]
      %v2666 = vld [vmem:[%s2576 + $0x129] sm:$0xff]
      %v2667 = vld [vmem:[%s2576 + $0x139] sm:$0xff]
      %v2668 = vld [vmem:[%s2576 + $0x141] sm:$0xff]
      %v2669 = vld [vmem:[%s2576 + $0x151] sm:$0xff]
      %v2670 = vld [vmem:[%s2576 + $0x159] sm:$0xff]
      %v2671 = vld [vmem:[%s2576 + $0x169] sm:$0xff]
      %v2672 = vld [vmem:[%s2576 + $0x171] sm:$0xff]
      %v2673 = vld [vmem:[%s2576 + $0x1b1] sm:$0xff]
      %v2674 = vld [vmem:[%s2576 + $0x1b9] sm:$0xff]
      %v2675 = vld [vmem:[%s2576 + $0x1c9] sm:$0xff]
      %v2676 = vld [vmem:[%s2576 + $0x1d1] sm:$0xff]
      %v2677 = vld [vmem:[%s2576 + $0x1e1] sm:$0xff]
      %v2678 = vld [vmem:[%s2576 + $0x1e9] sm:$0xff]
      %v2679 = vld [vmem:[%s2576 + $0x1f9] sm:$0xff]
      %v2680 = vld [vmem:[%s2576 + $0x201] sm:$0xff]
      %v2681 = vld [vmem:[%s2576 + $0x211] sm:$0xff]
      %v2682 = vld [vmem:[%s2576 + $0x219] sm:$0xff]
      %v2683 = vld [vmem:[%s2576 + $0x229] sm:$0xff]
      %v2684 = vld [vmem:[%s2576 + $0x231] sm:$0xff]
      %v2685 = vld [vmem:[%s2576 + $0x241] sm:$0xff]
      %v2686 = vld [vmem:[%s2576 + $0x249] sm:$0xff]
      %v2687 = vld [vmem:[%s2576 + $0x259] sm:$0xff]
      %v2688 = vld [vmem:[%s2576 + $0x261] sm:$0xff]
      %v2689 = vld [vmem:[%s2576 + $0x271] sm:$0xff]
      %v2690 = vld [vmem:[%s2576 + $0x279] sm:$0xff]
      %v2691 = vld [vmem:[%s2576 + $0x289] sm:$0xff]
      %v2692 = vld [vmem:[%s2576 + $0x291] sm:$0xff]
      %v2693 = vld [vmem:[%s2576 + $0x2a1] sm:$0xff]
      %v2694 = vld [vmem:[%s2576 + $0x2a9] sm:$0xff]
      %v2695 = vld [vmem:[%s2576 + $0x2b9] sm:$0xff]
      %v2696 = vld [vmem:[%s2576 + $0x2c1] sm:$0xff]
      %v2697 = vld [vmem:[%s2576 + $0x2d1] sm:$0xff]
      %v2698 = vld [vmem:[%s2576 + $0x2d9] sm:$0xff]
      %v2699 = vld [vmem:[%s2576 + $0x2e9] sm:$0xff]
      %v2700 = vld [vmem:[%s2576 + $0x2f1] sm:$0xff]
      %v2701 = vld [vmem:[%s2576 + $0x301] sm:$0xff]
      %v2702 = vld [vmem:[%s2576 + $0x309] sm:$0xff]
      %v2703 = vld [vmem:[%s2576 + $0x319] sm:$0xff]
      %v2704 = vld [vmem:[%s2576 + $0x321] sm:$0xff]
      %v2705 = vld [vmem:[%s2576 + $0x2] sm:$0xff]
      %v2706 = vld [vmem:[%s2576 + $0xa] sm:$0xff]
      %v2707 = vld [vmem:[%s2576 + $0x1a] sm:$0xff]
      %v2708 = vld [vmem:[%s2576 + $0x22] sm:$0xff]
      %v2709 = vld [vmem:[%s2576 + $0x32] sm:$0xff]
      %v2710 = vld [vmem:[%s2576 + $0x3a] sm:$0xff]
      %v2711 = vld [vmem:[%s2576 + $0x4a] sm:$0xff]
      %v2712 = vld [vmem:[%s2576 + $0x52] sm:$0xff]
      %v2713 = vld [vmem:[%s2576 + $0x62] sm:$0xff]
      %v2714 = vld [vmem:[%s2576 + $0x6a] sm:$0xff]
      %v2715 = vld [vmem:[%s2576 + $0x7a] sm:$0xff]
      %v2716 = vld [vmem:[%s2576 + $0x82] sm:$0xff]
      %v2717 = vld [vmem:[%s2576 + $0x92] sm:$0xff]
      %v2718 = vld [vmem:[%s2576 + $0x9a] sm:$0xff]
      %v2719 = vld [vmem:[%s2576 + $0xaa] sm:$0xff]
      %v2720 = vld [vmem:[%s2576 + $0xb2] sm:$0xff]
      %v2721 = vld [vmem:[%s2576 + $0xc2] sm:$0xff]
      %v2722 = vld [vmem:[%s2576 + $0xca] sm:$0xff]
      %v2723 = vld [vmem:[%s2576 + $0xda] sm:$0xff]
      %v2724 = vld [vmem:[%s2576 + $0xe2] sm:$0xff]
      %v2725 = vld [vmem:[%s2576 + $0xf2] sm:$0xff]
      %v2726 = vld [vmem:[%s2576 + $0xfa] sm:$0xff]
      %v2727 = vld [vmem:[%s2576 + $0x10a] sm:$0xff]
      %v2728 = vld [vmem:[%s2576 + $0x112] sm:$0xff]
      %v2729 = vld [vmem:[%s2576 + $0x122] sm:$0xff]
      %v2730 = vld [vmem:[%s2576 + $0x12a] sm:$0xff]
      %v2731 = vld [vmem:[%s2576 + $0x13a] sm:$0xff]
      %v2732 = vld [vmem:[%s2576 + $0x142] sm:$0xff]
      %v2733 = vld [vmem:[%s2576 + $0x152] sm:$0xff]
      %v2734 = vld [vmem:[%s2576 + $0x15a] sm:$0xff]
      %v2735 = vld [vmem:[%s2576 + $0x16a] sm:$0xff]
      %v2736 = vld [vmem:[%s2576 + $0x172] sm:$0xff]
      %v2737 = vld [vmem:[%s2576 + $0x1b2] sm:$0xff]
      %v2738 = vld [vmem:[%s2576 + $0x1ba] sm:$0xff]
      %v2739 = vld [vmem:[%s2576 + $0x1ca] sm:$0xff]
      %v2740 = vld [vmem:[%s2576 + $0x1d2] sm:$0xff]
      %v2741 = vld [vmem:[%s2576 + $0x1e2] sm:$0xff]
      %v2742 = vld [vmem:[%s2576 + $0x1ea] sm:$0xff]
      %v2743 = vld [vmem:[%s2576 + $0x1fa] sm:$0xff]
      %v2744 = vld [vmem:[%s2576 + $0x202] sm:$0xff]
      %v2745 = vld [vmem:[%s2576 + $0x212] sm:$0xff]
      %v2746 = vld [vmem:[%s2576 + $0x21a] sm:$0xff]
      %v2747 = vld [vmem:[%s2576 + $0x22a] sm:$0xff]
      %v2748 = vld [vmem:[%s2576 + $0x232] sm:$0xff]
      %v2749 = vld [vmem:[%s2576 + $0x242] sm:$0xff]
      %v2750 = vld [vmem:[%s2576 + $0x24a] sm:$0xff]
      %v2751 = vld [vmem:[%s2576 + $0x25a] sm:$0xff]
      %v2752 = vld [vmem:[%s2576 + $0x262] sm:$0xff]
      %v2753 = vld [vmem:[%s2576 + $0x272] sm:$0xff]
      %v2754 = vld [vmem:[%s2576 + $0x27a] sm:$0xff]
      %v2755 = vld [vmem:[%s2576 + $0x28a] sm:$0xff]
      %v2756 = vld [vmem:[%s2576 + $0x292] sm:$0xff]
      %v2757 = vld [vmem:[%s2576 + $0x2a2] sm:$0xff]
      %v2758 = vld [vmem:[%s2576 + $0x2aa] sm:$0xff]
      %v2759 = vld [vmem:[%s2576 + $0x2ba] sm:$0xff]
      %v2760 = vld [vmem:[%s2576 + $0x2c2] sm:$0xff]
      %v2761 = vld [vmem:[%s2576 + $0x2d2] sm:$0xff]
      %v2762 = vld [vmem:[%s2576 + $0x2da] sm:$0xff]
      %v2763 = vld [vmem:[%s2576 + $0x2ea] sm:$0xff]
      %v2764 = vld [vmem:[%s2576 + $0x2f2] sm:$0xff]
      %v2765 = vld [vmem:[%s2576 + $0x302] sm:$0xff]
      %v2766 = vld [vmem:[%s2576 + $0x30a] sm:$0xff]
      %v2767 = vld [vmem:[%s2576 + $0x31a] sm:$0xff]
      %v2768 = vld [vmem:[%s2576 + $0x322] sm:$0xff]
      %2833 = vrot.lane.b32.xlu0 %v2641, 64
      %v2834 = vpop.permute.xlu0 %2833
      %2835 = vrot.lane.b32.xlu0 %v2642, 64
      %v2836 = vpop.permute.xlu0 %2835
      %2837 = vrot.lane.b32.xlu0 %v2643, 64
      %v2838 = vpop.permute.xlu0 %2837
      %2839 = vrot.lane.b32.xlu0 %v2644, 64
      %v2840 = vpop.permute.xlu0 %2839
      %2841 = vrot.lane.b32.xlu0 %v2645, 64
      %v2842 = vpop.permute.xlu0 %2841
      %2843 = vrot.lane.b32.xlu0 %v2646, 64
      %v2844 = vpop.permute.xlu0 %2843
      %2845 = vrot.lane.b32.xlu0 %v2647, 64
      %v2846 = vpop.permute.xlu0 %2845
      %2847 = vrot.lane.b32.xlu0 %v2648, 64
      %v2848 = vpop.permute.xlu0 %2847
      %2849 = vrot.lane.b32.xlu0 %v2649, 64
      %v2850 = vpop.permute.xlu0 %2849
      %2851 = vrot.lane.b32.xlu0 %v2650, 64
      %v2852 = vpop.permute.xlu0 %2851
      %2853 = vrot.lane.b32.xlu0 %v2651, 64
      %v2854 = vpop.permute.xlu0 %2853
      %2855 = vrot.lane.b32.xlu0 %v2652, 64
      %v2856 = vpop.permute.xlu0 %2855
      %2857 = vrot.lane.b32.xlu0 %v2653, 64
      %v2858 = vpop.permute.xlu0 %2857
      %2859 = vrot.lane.b32.xlu0 %v2654, 64
      %v2860 = vpop.permute.xlu0 %2859
      %2861 = vrot.lane.b32.xlu0 %v2655, 64
      %v2862 = vpop.permute.xlu0 %2861
      %2863 = vrot.lane.b32.xlu0 %v2656, 64
      %v2864 = vpop.permute.xlu0 %2863
      %2865 = vrot.lane.b32.xlu0 %v2657, 64
      %v2866 = vpop.permute.xlu0 %2865
      %2867 = vrot.lane.b32.xlu0 %v2658, 64
      %v2868 = vpop.permute.xlu0 %2867
      %2869 = vrot.lane.b32.xlu0 %v2659, 64
      %v2870 = vpop.permute.xlu0 %2869
      %2871 = vrot.lane.b32.xlu0 %v2660, 64
      %v2872 = vpop.permute.xlu0 %2871
      %2873 = vrot.lane.b32.xlu0 %v2661, 64
      %v2874 = vpop.permute.xlu0 %2873
      %2875 = vrot.lane.b32.xlu0 %v2662, 64
      %v2876 = vpop.permute.xlu0 %2875
      %2877 = vrot.lane.b32.xlu0 %v2663, 64
      %v2878 = vpop.permute.xlu0 %2877
      %2879 = vrot.lane.b32.xlu0 %v2664, 64
      %v2880 = vpop.permute.xlu0 %2879
      %2881 = vrot.lane.b32.xlu0 %v2665, 64
      %v2882 = vpop.permute.xlu0 %2881
      %2883 = vrot.lane.b32.xlu0 %v2666, 64
      %v2884 = vpop.permute.xlu0 %2883
      %2885 = vrot.lane.b32.xlu0 %v2667, 64
      %v2886 = vpop.permute.xlu0 %2885
      %2887 = vrot.lane.b32.xlu0 %v2668, 64
      %v2888 = vpop.permute.xlu0 %2887
      %2889 = vrot.lane.b32.xlu0 %v2669, 64
      %v2890 = vpop.permute.xlu0 %2889
      %2891 = vrot.lane.b32.xlu0 %v2670, 64
      %v2892 = vpop.permute.xlu0 %2891
      %2893 = vrot.lane.b32.xlu0 %v2671, 64
      %v2894 = vpop.permute.xlu0 %2893
      %2895 = vrot.lane.b32.xlu0 %v2672, 64
      %v2896 = vpop.permute.xlu0 %2895
      %2897 = vrot.lane.b32.xlu0 %v2673, 64
      %v2898 = vpop.permute.xlu0 %2897
      %2899 = vrot.lane.b32.xlu0 %v2674, 64
      %v2900 = vpop.permute.xlu0 %2899
      %2901 = vrot.lane.b32.xlu0 %v2675, 64
      %v2902 = vpop.permute.xlu0 %2901
      %2903 = vrot.lane.b32.xlu0 %v2676, 64
      %v2904 = vpop.permute.xlu0 %2903
      %2905 = vrot.lane.b32.xlu0 %v2677, 64
      %v2906 = vpop.permute.xlu0 %2905
      %2907 = vrot.lane.b32.xlu0 %v2678, 64
      %v2908 = vpop.permute.xlu0 %2907
      %2909 = vrot.lane.b32.xlu0 %v2679, 64
      %v2910 = vpop.permute.xlu0 %2909
      %2911 = vrot.lane.b32.xlu0 %v2680, 64
      %v2912 = vpop.permute.xlu0 %2911
      %2913 = vrot.lane.b32.xlu0 %v2681, 64
      %v2914 = vpop.permute.xlu0 %2913
      %2915 = vrot.lane.b32.xlu0 %v2682, 64
      %v2916 = vpop.permute.xlu0 %2915
      %2917 = vrot.lane.b32.xlu0 %v2683, 64
      %v2918 = vpop.permute.xlu0 %2917
      %2919 = vrot.lane.b32.xlu0 %v2684, 64
      %v2920 = vpop.permute.xlu0 %2919
      %2921 = vrot.lane.b32.xlu0 %v2685, 64
      %v2922 = vpop.permute.xlu0 %2921
      %2923 = vrot.lane.b32.xlu0 %v2686, 64
      %v2924 = vpop.permute.xlu0 %2923
      %2925 = vrot.lane.b32.xlu0 %v2687, 64
      %v2926 = vpop.permute.xlu0 %2925
      %2927 = vrot.lane.b32.xlu0 %v2688, 64
      %v2928 = vpop.permute.xlu0 %2927
      %2929 = vrot.lane.b32.xlu0 %v2689, 64
      %v2930 = vpop.permute.xlu0 %2929
      %2931 = vrot.lane.b32.xlu0 %v2690, 64
      %v2932 = vpop.permute.xlu0 %2931
      %2933 = vrot.lane.b32.xlu0 %v2691, 64
      %v2934 = vpop.permute.xlu0 %2933
      %2935 = vrot.lane.b32.xlu0 %v2692, 64
      %v2936 = vpop.permute.xlu0 %2935
      %2937 = vrot.lane.b32.xlu0 %v2693, 64
      %v2938 = vpop.permute.xlu0 %2937
      %2939 = vrot.lane.b32.xlu0 %v2694, 64
      %v2940 = vpop.permute.xlu0 %2939
      %2941 = vrot.lane.b32.xlu0 %v2695, 64
      %v2942 = vpop.permute.xlu0 %2941
      %2943 = vrot.lane.b32.xlu0 %v2696, 64
      %v2944 = vpop.permute.xlu0 %2943
      %2945 = vrot.lane.b32.xlu0 %v2697, 64
      %v2946 = vpop.permute.xlu0 %2945
      %2947 = vrot.lane.b32.xlu0 %v2698, 64
      %v2948 = vpop.permute.xlu0 %2947
      %2949 = vrot.lane.b32.xlu0 %v2699, 64
      %v2950 = vpop.permute.xlu0 %2949
      %2951 = vrot.lane.b32.xlu0 %v2700, 64
      %v2952 = vpop.permute.xlu0 %2951
      %2953 = vrot.lane.b32.xlu0 %v2701, 64
      %v2954 = vpop.permute.xlu0 %2953
      %2955 = vrot.lane.b32.xlu0 %v2702, 64
      %v2956 = vpop.permute.xlu0 %2955
      %2957 = vrot.lane.b32.xlu0 %v2703, 64
      %v2958 = vpop.permute.xlu0 %2957
      %2959 = vrot.lane.b32.xlu0 %v2704, 64
      %v2960 = vpop.permute.xlu0 %2959
      %v3025 = vsel %vm907, %v2577, %v2834
      %v3026 = vsel %vm907, %v2578, %v2836
      %v3027 = vsel %vm907, %v2579, %v2838
      %v3028 = vsel %vm907, %v2580, %v2840
      %v3029 = vsel %vm907, %v2581, %v2842
      %v3030 = vsel %vm907, %v2582, %v2844
      %v3031 = vsel %vm907, %v2583, %v2846
      %v3032 = vsel %vm907, %v2584, %v2848
      %v3033 = vsel %vm907, %v2585, %v2850
      %v3034 = vsel %vm907, %v2586, %v2852
      %v3035 = vsel %vm907, %v2587, %v2854
      %v3036 = vsel %vm907, %v2588, %v2856
      %v3037 = vsel %vm907, %v2589, %v2858
      %v3038 = vsel %vm907, %v2590, %v2860
      %v3039 = vsel %vm907, %v2591, %v2862
      %v3040 = vsel %vm907, %v2592, %v2864
      %v3041 = vsel %vm907, %v2593, %v2866
      %v3042 = vsel %vm907, %v2594, %v2868
      %v3043 = vsel %vm907, %v2595, %v2870
      %v3044 = vsel %vm907, %v2596, %v2872
      %v3045 = vsel %vm907, %v2597, %v2874
      %v3046 = vsel %vm907, %v2598, %v2876
      %v3047 = vsel %vm907, %v2599, %v2878
      %v3048 = vsel %vm907, %v2600, %v2880
      %v3049 = vsel %vm907, %v2601, %v2882
      %v3050 = vsel %vm907, %v2602, %v2884
      %v3051 = vsel %vm907, %v2603, %v2886
      %v3052 = vsel %vm907, %v2604, %v2888
      %v3053 = vsel %vm907, %v2605, %v2890
      %v3054 = vsel %vm907, %v2606, %v2892
      %v3055 = vsel %vm907, %v2607, %v2894
      %v3056 = vsel %vm907, %v2608, %v2896
      %v3057 = vsel %vm907, %v2609, %v2898
      %v3058 = vsel %vm907, %v2610, %v2900
      %v3059 = vsel %vm907, %v2611, %v2902
      %v3060 = vsel %vm907, %v2612, %v2904
      %v3061 = vsel %vm907, %v2613, %v2906
      %v3062 = vsel %vm907, %v2614, %v2908
      %v3063 = vsel %vm907, %v2615, %v2910
      %v3064 = vsel %vm907, %v2616, %v2912
      %v3065 = vsel %vm907, %v2617, %v2914
      %v3066 = vsel %vm907, %v2618, %v2916
      %v3067 = vsel %vm907, %v2619, %v2918
      %v3068 = vsel %vm907, %v2620, %v2920
      %v3069 = vsel %vm907, %v2621, %v2922
      %v3070 = vsel %vm907, %v2622, %v2924
      %v3071 = vsel %vm907, %v2623, %v2926
      %v3072 = vsel %vm907, %v2624, %v2928
      %v3073 = vsel %vm907, %v2625, %v2930
      %v3074 = vsel %vm907, %v2626, %v2932
      %v3075 = vsel %vm907, %v2627, %v2934
      %v3076 = vsel %vm907, %v2628, %v2936
      %v3077 = vsel %vm907, %v2629, %v2938
      %v3078 = vsel %vm907, %v2630, %v2940
      %v3079 = vsel %vm907, %v2631, %v2942
      %v3080 = vsel %vm907, %v2632, %v2944
      %v3081 = vsel %vm907, %v2633, %v2946
      %v3082 = vsel %vm907, %v2634, %v2948
      %v3083 = vsel %vm907, %v2635, %v2950
      %v3084 = vsel %vm907, %v2636, %v2952
      %v3085 = vsel %vm907, %v2637, %v2954
      %v3086 = vsel %vm907, %v2638, %v2956
      %v3087 = vsel %vm907, %v2639, %v2958
      %v3088 = vsel %vm907, %v2640, %v2960
      %v3089 = vpack.c.bf16 %v3026, %v3025
      %v3090 = vpack.c.bf16 %v2706, %v2705
      %v3091 = vpack.c.bf16 %v3028, %v3027
      %v3092 = vpack.c.bf16 %v2708, %v2707
      %v3093 = vpack.c.bf16 %v3030, %v3029
      %v3094 = vpack.c.bf16 %v2710, %v2709
      %v3095 = vpack.c.bf16 %v3032, %v3031
      %v3096 = vpack.c.bf16 %v2712, %v2711
      %v3097 = vpack.c.bf16 %v3034, %v3033
      %v3098 = vpack.c.bf16 %v2714, %v2713
      %v3099 = vpack.c.bf16 %v3036, %v3035
      %v3100 = vpack.c.bf16 %v2716, %v2715
      %v3101 = vpack.c.bf16 %v3038, %v3037
      %v3102 = vpack.c.bf16 %v2718, %v2717
      %v3103 = vpack.c.bf16 %v3040, %v3039
      %v3104 = vpack.c.bf16 %v2720, %v2719
      %v3105 = vpack.c.bf16 %v3042, %v3041
      %v3106 = vpack.c.bf16 %v2722, %v2721
      %v3107 = vpack.c.bf16 %v3044, %v3043
      %v3108 = vpack.c.bf16 %v2724, %v2723
      %v3109 = vpack.c.bf16 %v3046, %v3045
      %v3110 = vpack.c.bf16 %v2726, %v2725
      %v3111 = vpack.c.bf16 %v3048, %v3047
      %v3112 = vpack.c.bf16 %v2728, %v2727
      %v3113 = vpack.c.bf16 %v3050, %v3049
      %v3114 = vpack.c.bf16 %v2730, %v2729
      %v3115 = vpack.c.bf16 %v3052, %v3051
      %v3116 = vpack.c.bf16 %v2732, %v2731
      %v3117 = vpack.c.bf16 %v3054, %v3053
      %v3118 = vpack.c.bf16 %v2734, %v2733
      %v3119 = vpack.c.bf16 %v3056, %v3055
      %v3120 = vpack.c.bf16 %v2736, %v2735
      %v3121 = vpack.c.bf16 %v3058, %v3057
      %v3122 = vpack.c.bf16 %v2738, %v2737
      %v3123 = vpack.c.bf16 %v3060, %v3059
      %v3124 = vpack.c.bf16 %v2740, %v2739
      %v3125 = vpack.c.bf16 %v3062, %v3061
      %v3126 = vpack.c.bf16 %v2742, %v2741
      %v3127 = vpack.c.bf16 %v3064, %v3063
      %v3128 = vpack.c.bf16 %v2744, %v2743
      %v3129 = vpack.c.bf16 %v3066, %v3065
      %v3130 = vpack.c.bf16 %v2746, %v2745
      %v3131 = vpack.c.bf16 %v3068, %v3067
      %v3132 = vpack.c.bf16 %v2748, %v2747
      %v3133 = vpack.c.bf16 %v3070, %v3069
      %v3134 = vpack.c.bf16 %v2750, %v2749
      %v3135 = vpack.c.bf16 %v3072, %v3071
      %v3136 = vpack.c.bf16 %v2752, %v2751
      %v3137 = vpack.c.bf16 %v3074, %v3073
      %v3138 = vpack.c.bf16 %v2754, %v2753
      %v3139 = vpack.c.bf16 %v3076, %v3075
      %v3140 = vpack.c.bf16 %v2756, %v2755
      %v3141 = vpack.c.bf16 %v3078, %v3077
      %v3142 = vpack.c.bf16 %v2758, %v2757
      %v3143 = vpack.c.bf16 %v3080, %v3079
      %v3144 = vpack.c.bf16 %v2760, %v2759
      %v3145 = vpack.c.bf16 %v3082, %v3081
      %v3146 = vpack.c.bf16 %v2762, %v2761
      %v3147 = vpack.c.bf16 %v3084, %v3083
      %v3148 = vpack.c.bf16 %v2764, %v2763
      %v3149 = vpack.c.bf16 %v3086, %v3085
      %v3150 = vpack.c.bf16 %v2766, %v2765
      %v3151 = vpack.c.bf16 %v3088, %v3087
      %v3152 = vpack.c.bf16 %v2768, %v2767
      %s3153 = scalar_lea.vmem %s206, 192
      %v3154 = vld [vmem:[%s3153] sm:$0xf]
      %v3155 = vld [vmem:[%s3153 + $0x4] sm:$0xf]
      %v3156 = vld [vmem:[%s3153 + $0x8] sm:$0xf]
      %v3157 = vld [vmem:[%s3153 + $0xc] sm:$0xf]
      %v3158 = vld [vmem:[%s3153 + $0x10] sm:$0xf]
      %v3159 = vld [vmem:[%s3153 + $0x14] sm:$0xf]
      %v3160 = vld [vmem:[%s3153 + $0x18] sm:$0xf]
      %v3161 = vld [vmem:[%s3153 + $0x1c] sm:$0xf]
      %v3162 = vld [vmem:[%s3153 + $0x20] sm:$0xf]
      %v3163 = vld [vmem:[%s3153 + $0x24] sm:$0xf]
      %v3164 = vld [vmem:[%s3153 + $0x28] sm:$0xf]
      %v3165 = vld [vmem:[%s3153 + $0x2c] sm:$0xf]
      %v3166 = vld [vmem:[%s3153 + $0x30] sm:$0xf]
      %v3167 = vld [vmem:[%s3153 + $0x34] sm:$0xf]
      %v3168 = vld [vmem:[%s3153 + $0x38] sm:$0xf]
      %v3169 = vld [vmem:[%s3153 + $0x3c] sm:$0xf]
      %v3170 = vld [vmem:[%s3153 + $0x40] sm:$0xf]
      %v3171 = vld [vmem:[%s3153 + $0x44] sm:$0xf]
      %v3172 = vld [vmem:[%s3153 + $0x48] sm:$0xf]
      %v3173 = vld [vmem:[%s3153 + $0x4c] sm:$0xf]
      %v3174 = vld [vmem:[%s3153 + $0x50] sm:$0xf]
      %v3175 = vld [vmem:[%s3153 + $0x54] sm:$0xf]
      %v3176 = vld [vmem:[%s3153 + $0x58] sm:$0xf]
      %v3177 = vld [vmem:[%s3153 + $0x5c] sm:$0xf]
      %v3202 = vunpack.c.l.b16 %v3154
      %v3203 = vunpack.c.l.b16 %v3155
      %v3204 = vunpack.c.l.b16 %v3156
      %v3205 = vunpack.c.l.b16 %v3157
      %v3206 = vunpack.c.l.b16 %v3158
      %v3207 = vunpack.c.l.b16 %v3159
      %v3208 = vunpack.c.l.b16 %v3160
      %v3209 = vunpack.c.l.b16 %v3161
      %v3210 = vunpack.c.l.b16 %v3162
      %v3211 = vunpack.c.l.b16 %v3163
      %v3212 = vunpack.c.l.b16 %v3164
      %v3213 = vunpack.c.l.b16 %v3165
      %v3214 = vunpack.c.l.b16 %v3166
      %v3215 = vunpack.c.l.b16 %v3167
      %v3216 = vunpack.c.l.b16 %v3168
      %v3217 = vunpack.c.l.b16 %v3169
      %v3218 = vunpack.c.l.b16 %v3170
      %v3219 = vunpack.c.l.b16 %v3171
      %v3220 = vunpack.c.l.b16 %v3172
      %v3221 = vunpack.c.l.b16 %v3173
      %v3222 = vunpack.c.l.b16 %v3174
      %v3223 = vunpack.c.l.b16 %v3175
      %v3224 = vunpack.c.l.b16 %v3176
      %v3225 = vunpack.c.l.b16 %v3177
      %v3226 = vpack.c.b16 %v3203, %v3202
      %v3227 = vpack.c.b16 %v3205, %v3204
      %v3228 = vpack.c.b16 %v3207, %v3206
      %v3229 = vpack.c.b16 %v3209, %v3208
      %v3230 = vpack.c.b16 %v3211, %v3210
      %v3231 = vpack.c.b16 %v3213, %v3212
      %v3232 = vpack.c.b16 %v3215, %v3214
      %v3233 = vpack.c.b16 %v3217, %v3216
      %v3234 = vpack.c.b16 %v3219, %v3218
      %v3235 = vpack.c.b16 %v3221, %v3220
      %v3236 = vpack.c.b16 %v3223, %v3222
      %v3237 = vpack.c.b16 %v3225, %v3224
      %v3251 = vsel %vm907, %v3090, 0
      %v3254 = vsel %vm907, %v3092, 0
      %v3257 = vsel %vm907, %v3094, 0
      %v3260 = vsel %vm907, %v3096, 0
      %v3263 = vsel %vm907, %v3098, 0
      %v3266 = vsel %vm907, %v3100, 0
      %v3269 = vsel %vm907, %v3102, 0
      %v3272 = vsel %vm907, %v3104, 0
      %v3275 = vsel %vm907, %v3106, 0
      %v3278 = vsel %vm907, %v3108, 0
      %v3281 = vsel %vm907, %v3110, 0
      %v3284 = vsel %vm907, %v3112, 0
      %v3287 = vsel %vm907, %v3114, 0
      %v3290 = vsel %vm907, %v3116, 0
      %v3293 = vsel %vm907, %v3118, 0
      %v3296 = vsel %vm907, %v3120, 0
      %v3299 = vsel %vm907, %v3122, 0
      %v3302 = vsel %vm907, %v3124, 0
      %v3305 = vsel %vm907, %v3126, 0
      %v3308 = vsel %vm907, %v3128, 0
      %v3311 = vsel %vm907, %v3130, 0
      %v3314 = vsel %vm907, %v3132, 0
      %v3317 = vsel %vm907, %v3134, 0
      %v3320 = vsel %vm907, %v3136, 0
      %v3323 = vsel %vm907, %v3138, 0
      %v3326 = vsel %vm907, %v3140, 0
      %v3329 = vsel %vm907, %v3142, 0
      %v3332 = vsel %vm907, %v3144, 0
      %v3335 = vsel %vm907, %v3146, 0
      %v3338 = vsel %vm907, %v3148, 0
      %v3341 = vsel %vm907, %v3150, 0
      %v3344 = vsel %vm907, %v3152, 0
      %3346 = vmatprep.subr.bf16.mxu0 0
      %3347 = vmatpush1.bf16.msra.mxu0 %v3226
      %3348 = vmatprep.subr.bf16.mxu0 0
      %3349 = vmatpush1.bf16.msra.mxu0 %v3227
      %3350 = vmatprep.subr.bf16.mxu0 0
      %3351 = vmatpush1.bf16.msra.mxu0 %v3228
      %3352 = vmatprep.subr.bf16.mxu0 0
      %3353 = vmatpush1.bf16.msra.mxu0 %v3229
      %3354 = vmatprep.subr.bf16.mxu0 0
      %3355 = vmatpush1.bf16.msra.mxu0 %v3230
      %3356 = vmatprep.subr.bf16.mxu0 0
      %3357 = vmatpush1.bf16.msra.mxu0 %v3231
      %3358 = vmatprep.subr.bf16.mxu0 0
      %3359 = vmatpush1.bf16.msra.mxu0 %v3232
      %3360 = vmatprep.subr.bf16.mxu0 0
      %3361 = vmatpush1.bf16.msra.mxu0 %v3233
      %3362 = vmatprep.subr.bf16.mxu0 0
      %3363 = vmatpush1.bf16.msra.mxu0 %v3234
      %3364 = vmatprep.subr.bf16.mxu0 0
      %3365 = vmatpush1.bf16.msra.mxu0 %v3235
      %3366 = vmatprep.subr.bf16.mxu0 0
      %3367 = vmatpush1.bf16.msra.mxu0 %v3236
      %3368 = vmatprep.subr.bf16.mxu0 0
      %3369 = vmatpush1.bf16.msra.mxu0 %v3237
      %3370 = vmatprep.subr.bf16.mxu0 0
      %3371 = vmatpush1.bf16.msra.mxu0 0
      %3372 = vmatprep.subr.bf16.mxu0 0
      %3373 = vmatpush1.bf16.msra.mxu0 0
      %3374 = vmatprep.subr.bf16.mxu0 0
      %3375 = vmatpush1.bf16.msra.mxu0 0
      %3376 = vmatprep.subr.bf16.mxu0 0
      %3377 = vmatpush1.bf16.msra.mxu0 0
      %3378 = vmatprep.mubr.bf16.mxu0 %v3251
      %3379 = vmatmul.mubr.bf16.gmra.mrb[0].mxu0 %v3089
      %v3380 = vpop.f32.mrb[0].mxu0
      %v3381 = vadd.f32 0.0, %v3380
      %v3382 = vpop.f32.mrb[0].mxu0
      %v3383 = vpop.f32.mrb[0].mxu0
      %v3384 = vadd.f32 0.0, %v3383
      %v3385 = vpop.f32.mrb[0].mxu0
      %3386 = vmatprep.mubr.bf16.mxu0 %v3254
      %3387 = vmatmul.mubr.bf16.gmra.mrb[0].mxu0 %v3091
      %v3388 = vpop.f32.mrb[0].mxu0
      %v3389 = vadd.f32 0.0, %v3388
      %v3390 = vpop.f32.mrb[0].mxu0
      %v3391 = vpop.f32.mrb[0].mxu0
      %v3392 = vadd.f32 0.0, %v3391
      %v3393 = vpop.f32.mrb[0].mxu0
      %3394 = vmatprep.mubr.bf16.mxu0 %v3257
      %3395 = vmatmul.mubr.bf16.gmra.mrb[0].mxu0 %v3093
      %v3396 = vpop.f32.mrb[0].mxu0
      %v3397 = vadd.f32 0.0, %v3396
      %v3398 = vpop.f32.mrb[0].mxu0
      %v3399 = vpop.f32.mrb[0].mxu0
      %v3400 = vadd.f32 0.0, %v3399
      %v3401 = vpop.f32.mrb[0].mxu0
      %3402 = vmatprep.mubr.bf16.mxu0 %v3260
      %3403 = vmatmul.mubr.bf16.gmra.mrb[0].mxu0 %v3095
      %v3404 = vpop.f32.mrb[0].mxu0
      %v3405 = vadd.f32 0.0, %v3404
      %v3406 = vpop.f32.mrb[0].mxu0
      %v3407 = vpop.f32.mrb[0].mxu0
      %v3408 = vadd.f32 0.0, %v3407
      %v3409 = vpop.f32.mrb[0].mxu0
      %3410 = vmatprep.mubr.bf16.mxu0 %v3263
      %3411 = vmatmul.mubr.bf16.gmra.mrb[0].mxu0 %v3097
      %v3412 = vpop.f32.mrb[0].mxu0
      %v3413 = vadd.f32 0.0, %v3412
      %v3414 = vpop.f32.mrb[0].mxu0
      %v3415 = vpop.f32.mrb[0].mxu0
      %v3416 = vadd.f32 0.0, %v3415
      %v3417 = vpop.f32.mrb[0].mxu0
      %3418 = vmatprep.mubr.bf16.mxu0 %v3266
      %3419 = vmatmul.mubr.bf16.gmra.mrb[0].mxu0 %v3099
      %v3420 = vpop.f32.mrb[0].mxu0
      %v3421 = vadd.f32 0.0, %v3420
      %v3422 = vpop.f32.mrb[0].mxu0
      %v3423 = vpop.f32.mrb[0].mxu0
      %v3424 = vadd.f32 0.0, %v3423
      %v3425 = vpop.f32.mrb[0].mxu0
      %3426 = vmatprep.mubr.bf16.mxu0 %v3269
      %3427 = vmatmul.mubr.bf16.gmra.mrb[0].mxu0 %v3101
      %v3428 = vpop.f32.mrb[0].mxu0
      %v3429 = vadd.f32 0.0, %v3428
      %v3430 = vpop.f32.mrb[0].mxu0
      %v3431 = vpop.f32.mrb[0].mxu0
      %v3432 = vadd.f32 0.0, %v3431
      %v3433 = vpop.f32.mrb[0].mxu0
      %3434 = vmatprep.mubr.bf16.mxu0 %v3272
      %3435 = vmatmul.mubr.bf16.gmra.mrb[0].mxu0 %v3103
      %v3436 = vpop.f32.mrb[0].mxu0
      %v3437 = vadd.f32 0.0, %v3436
      %v3438 = vpop.f32.mrb[0].mxu0
      %v3439 = vpop.f32.mrb[0].mxu0
      %v3440 = vadd.f32 0.0, %v3439
      %v3441 = vpop.f32.mrb[0].mxu0
      %3442 = vmatprep.mubr.bf16.mxu0 %v3275
      %3443 = vmatmul.mubr.bf16.gmra.mrb[0].mxu0 %v3105
      %v3444 = vpop.f32.mrb[0].mxu0
      %v3445 = vadd.f32 0.0, %v3444
      %v3446 = vpop.f32.mrb[0].mxu0
      %v3447 = vpop.f32.mrb[0].mxu0
      %v3448 = vadd.f32 0.0, %v3447
      %v3449 = vpop.f32.mrb[0].mxu0
      %3450 = vmatprep.mubr.bf16.mxu0 %v3278
      %3451 = vmatmul.mubr.bf16.gmra.mrb[0].mxu0 %v3107
      %v3452 = vpop.f32.mrb[0].mxu0
      %v3453 = vadd.f32 0.0, %v3452
      %v3454 = vpop.f32.mrb[0].mxu0
      %v3455 = vpop.f32.mrb[0].mxu0
      %v3456 = vadd.f32 0.0, %v3455
      %v3457 = vpop.f32.mrb[0].mxu0
      %3458 = vmatprep.mubr.bf16.mxu0 %v3281
      %3459 = vmatmul.mubr.bf16.gmra.mrb[0].mxu0 %v3109
      %v3460 = vpop.f32.mrb[0].mxu0
      %v3461 = vadd.f32 0.0, %v3460
      %v3462 = vpop.f32.mrb[0].mxu0
      %v3463 = vpop.f32.mrb[0].mxu0
      %v3464 = vadd.f32 0.0, %v3463
      %v3465 = vpop.f32.mrb[0].mxu0
      %3466 = vmatprep.mubr.bf16.mxu0 %v3284
      %3467 = vmatmul.mubr.bf16.gmra.mrb[0].mxu0 %v3111
      %v3468 = vpop.f32.mrb[0].mxu0
      %v3469 = vadd.f32 0.0, %v3468
      %v3470 = vpop.f32.mrb[0].mxu0
      %v3471 = vpop.f32.mrb[0].mxu0
      %v3472 = vadd.f32 0.0, %v3471
      %v3473 = vpop.f32.mrb[0].mxu0
      %3474 = vmatprep.mubr.bf16.mxu0 %v3287
      %3475 = vmatmul.mubr.bf16.gmra.mrb[0].mxu0 %v3113
      %v3476 = vpop.f32.mrb[0].mxu0
      %v3477 = vadd.f32 0.0, %v3476
      %v3478 = vpop.f32.mrb[0].mxu0
      %v3479 = vpop.f32.mrb[0].mxu0
      %v3480 = vadd.f32 0.0, %v3479
      %v3481 = vpop.f32.mrb[0].mxu0
      %3482 = vmatprep.mubr.bf16.mxu0 %v3290
      %3483 = vmatmul.mubr.bf16.gmra.mrb[0].mxu0 %v3115
      %v3484 = vpop.f32.mrb[0].mxu0
      %v3485 = vadd.f32 0.0, %v3484
      %v3486 = vpop.f32.mrb[0].mxu0
      %v3487 = vpop.f32.mrb[0].mxu0
      %v3488 = vadd.f32 0.0, %v3487
      %v3489 = vpop.f32.mrb[0].mxu0
      %3490 = vmatprep.mubr.bf16.mxu0 %v3293
      %3491 = vmatmul.mubr.bf16.gmra.mrb[0].mxu0 %v3117
      %v3492 = vpop.f32.mrb[0].mxu0
      %v3493 = vadd.f32 0.0, %v3492
      %v3494 = vpop.f32.mrb[0].mxu0
      %v3495 = vpop.f32.mrb[0].mxu0
      %v3496 = vadd.f32 0.0, %v3495
      %v3497 = vpop.f32.mrb[0].mxu0
      %3498 = vmatprep.mubr.bf16.mxu0 %v3296
      %3499 = vmatmul.mubr.bf16.gmra.mrb[0].mxu0 %v3119
      %v3500 = vpop.f32.mrb[0].mxu0
      %v3501 = vadd.f32 0.0, %v3500
      %v3502 = vpop.f32.mrb[0].mxu0
      %v3503 = vpop.f32.mrb[0].mxu0
      %v3504 = vadd.f32 0.0, %v3503
      %v3505 = vpop.f32.mrb[0].mxu0
      %3506 = vmatprep.mubr.bf16.mxu0 %v3299
      %3507 = vmatmul.mubr.bf16.gmra.mrb[0].mxu0 %v3121
      %v3508 = vpop.f32.mrb[0].mxu0
      %v3509 = vadd.f32 0.0, %v3508
      %v3510 = vpop.f32.mrb[0].mxu0
      %v3511 = vpop.f32.mrb[0].mxu0
      %v3512 = vadd.f32 0.0, %v3511
      %v3513 = vpop.f32.mrb[0].mxu0
      %3514 = vmatprep.mubr.bf16.mxu0 %v3302
      %3515 = vmatmul.mubr.bf16.gmra.mrb[0].mxu0 %v3123
      %v3516 = vpop.f32.mrb[0].mxu0
      %v3517 = vadd.f32 0.0, %v3516
      %v3518 = vpop.f32.mrb[0].mxu0
      %v3519 = vpop.f32.mrb[0].mxu0
      %v3520 = vadd.f32 0.0, %v3519
      %v3521 = vpop.f32.mrb[0].mxu0
      %3522 = vmatprep.mubr.bf16.mxu0 %v3305
      %3523 = vmatmul.mubr.bf16.gmra.mrb[0].mxu0 %v3125
      %v3524 = vpop.f32.mrb[0].mxu0
      %v3525 = vadd.f32 0.0, %v3524
      %v3526 = vpop.f32.mrb[0].mxu0
      %v3527 = vpop.f32.mrb[0].mxu0
      %v3528 = vadd.f32 0.0, %v3527
      %v3529 = vpop.f32.mrb[0].mxu0
      %3530 = vmatprep.mubr.bf16.mxu0 %v3308
      %3531 = vmatmul.mubr.bf16.gmra.mrb[0].mxu0 %v3127
      %v3532 = vpop.f32.mrb[0].mxu0
      %v3533 = vadd.f32 0.0, %v3532
      %v3534 = vpop.f32.mrb[0].mxu0
      %v3535 = vpop.f32.mrb[0].mxu0
      %v3536 = vadd.f32 0.0, %v3535
      %v3537 = vpop.f32.mrb[0].mxu0
      %3538 = vmatprep.mubr.bf16.mxu0 %v3311
      %3539 = vmatmul.mubr.bf16.gmra.mrb[0].mxu0 %v3129
      %v3540 = vpop.f32.mrb[0].mxu0
      %v3541 = vadd.f32 0.0, %v3540
      %v3542 = vpop.f32.mrb[0].mxu0
      %v3543 = vpop.f32.mrb[0].mxu0
      %v3544 = vadd.f32 0.0, %v3543
      %v3545 = vpop.f32.mrb[0].mxu0
      %3546 = vmatprep.mubr.bf16.mxu0 %v3314
      %3547 = vmatmul.mubr.bf16.gmra.mrb[0].mxu0 %v3131
      %v3548 = vpop.f32.mrb[0].mxu0
      %v3549 = vadd.f32 0.0, %v3548
      %v3550 = vpop.f32.mrb[0].mxu0
      %v3551 = vpop.f32.mrb[0].mxu0
      %v3552 = vadd.f32 0.0, %v3551
      %v3553 = vpop.f32.mrb[0].mxu0
      %3554 = vmatprep.mubr.bf16.mxu0 %v3317
      %3555 = vmatmul.mubr.bf16.gmra.mrb[0].mxu0 %v3133
      %v3556 = vpop.f32.mrb[0].mxu0
      %v3557 = vadd.f32 0.0, %v3556
      %v3558 = vpop.f32.mrb[0].mxu0
      %v3559 = vpop.f32.mrb[0].mxu0
      %v3560 = vadd.f32 0.0, %v3559
      %v3561 = vpop.f32.mrb[0].mxu0
      %3562 = vmatprep.mubr.bf16.mxu0 %v3320
      %3563 = vmatmul.mubr.bf16.gmra.mrb[0].mxu0 %v3135
      %v3564 = vpop.f32.mrb[0].mxu0
      %v3565 = vadd.f32 0.0, %v3564
      %v3566 = vpop.f32.mrb[0].mxu0
      %v3567 = vpop.f32.mrb[0].mxu0
      %v3568 = vadd.f32 0.0, %v3567
      %v3569 = vpop.f32.mrb[0].mxu0
      %3570 = vmatprep.mubr.bf16.mxu0 %v3323
      %3571 = vmatmul.mubr.bf16.gmra.mrb[0].mxu0 %v3137
      %v3572 = vpop.f32.mrb[0].mxu0
      %v3573 = vadd.f32 0.0, %v3572
      %v3574 = vpop.f32.mrb[0].mxu0
      %v3575 = vpop.f32.mrb[0].mxu0
      %v3576 = vadd.f32 0.0, %v3575
      %v3577 = vpop.f32.mrb[0].mxu0
      %3578 = vmatprep.mubr.bf16.mxu0 %v3326
      %3579 = vmatmul.mubr.bf16.gmra.mrb[0].mxu0 %v3139
      %v3580 = vpop.f32.mrb[0].mxu0
      %v3581 = vadd.f32 0.0, %v3580
      %v3582 = vpop.f32.mrb[0].mxu0
      %v3583 = vpop.f32.mrb[0].mxu0
      %v3584 = vadd.f32 0.0, %v3583
      %v3585 = vpop.f32.mrb[0].mxu0
      %3586 = vmatprep.mubr.bf16.mxu0 %v3329
      %3587 = vmatmul.mubr.bf16.gmra.mrb[0].mxu0 %v3141
      %v3588 = vpop.f32.mrb[0].mxu0
      %v3589 = vadd.f32 0.0, %v3588
      %v3590 = vpop.f32.mrb[0].mxu0
      %v3591 = vpop.f32.mrb[0].mxu0
      %v3592 = vadd.f32 0.0, %v3591
      %v3593 = vpop.f32.mrb[0].mxu0
      %3594 = vmatprep.mubr.bf16.mxu0 %v3332
      %3595 = vmatmul.mubr.bf16.gmra.mrb[0].mxu0 %v3143
      %v3596 = vpop.f32.mrb[0].mxu0
      %v3597 = vadd.f32 0.0, %v3596
      %v3598 = vpop.f32.mrb[0].mxu0
      %v3599 = vpop.f32.mrb[0].mxu0
      %v3600 = vadd.f32 0.0, %v3599
      %v3601 = vpop.f32.mrb[0].mxu0
      %3602 = vmatprep.mubr.bf16.mxu0 %v3335
      %3603 = vmatmul.mubr.bf16.gmra.mrb[0].mxu0 %v3145
      %v3604 = vpop.f32.mrb[0].mxu0
      %v3605 = vadd.f32 0.0, %v3604
      %v3606 = vpop.f32.mrb[0].mxu0
      %v3607 = vpop.f32.mrb[0].mxu0
      %v3608 = vadd.f32 0.0, %v3607
      %v3609 = vpop.f32.mrb[0].mxu0
      %3610 = vmatprep.mubr.bf16.mxu0 %v3338
      %3611 = vmatmul.mubr.bf16.gmra.mrb[0].mxu0 %v3147
      %v3612 = vpop.f32.mrb[0].mxu0
      %v3613 = vadd.f32 0.0, %v3612
      %v3614 = vpop.f32.mrb[0].mxu0
      %v3615 = vpop.f32.mrb[0].mxu0
      %v3616 = vadd.f32 0.0, %v3615
      %v3617 = vpop.f32.mrb[0].mxu0
      %3618 = vmatprep.mubr.bf16.mxu0 %v3341
      %3619 = vmatmul.mubr.bf16.gmra.mrb[0].mxu0 %v3149
      %v3620 = vpop.f32.mrb[0].mxu0
      %v3621 = vadd.f32 0.0, %v3620
      %v3622 = vpop.f32.mrb[0].mxu0
      %v3623 = vpop.f32.mrb[0].mxu0
      %v3624 = vadd.f32 0.0, %v3623
      %v3625 = vpop.f32.mrb[0].mxu0
      %3626 = vmatprep.mubr.bf16.mxu0 %v3344
      %3627 = vmatmul.mubr.bf16.gmra.mrb[0].mxu0 %v3151
      %v3628 = vpop.f32.mrb[0].mxu0
      %v3629 = vadd.f32 0.0, %v3628
      %v3630 = vpop.f32.mrb[0].mxu0
      %v3631 = vpop.f32.mrb[0].mxu0
      %v3632 = vadd.f32 0.0, %v3631
      %v3633 = vpop.f32.mrb[0].mxu0
      %3634 = vdwg.mxu0
      %v3635 = vadd.f32 %v2322, %v3381
      %v3636 = vadd.f32 %v2325, %v3384
      %v3637 = vadd.f32 %v2330, %v3389
      %v3638 = vadd.f32 %v2333, %v3392
      %v3639 = vadd.f32 %v2338, %v3397
      %v3640 = vadd.f32 %v2341, %v3400
      %v3641 = vadd.f32 %v2346, %v3405
      %v3642 = vadd.f32 %v2349, %v3408
      %v3643 = vadd.f32 %v2354, %v3413
      %v3644 = vadd.f32 %v2357, %v3416
      %v3645 = vadd.f32 %v2362, %v3421
      %v3646 = vadd.f32 %v2365, %v3424
      %v3647 = vadd.f32 %v2370, %v3429
      %v3648 = vadd.f32 %v2373, %v3432
      %v3649 = vadd.f32 %v2378, %v3437
      %v3650 = vadd.f32 %v2381, %v3440
      %v3651 = vadd.f32 %v2386, %v3445
      %v3652 = vadd.f32 %v2389, %v3448
      %v3653 = vadd.f32 %v2394, %v3453
      %v3654 = vadd.f32 %v2397, %v3456
      %v3655 = vadd.f32 %v2402, %v3461
      %v3656 = vadd.f32 %v2405, %v3464
      %v3657 = vadd.f32 %v2410, %v3469
      %v3658 = vadd.f32 %v2413, %v3472
      %v3659 = vadd.f32 %v2418, %v3477
      %v3660 = vadd.f32 %v2421, %v3480
      %v3661 = vadd.f32 %v2426, %v3485
      %v3662 = vadd.f32 %v2429, %v3488
      %v3663 = vadd.f32 %v2434, %v3493
      %v3664 = vadd.f32 %v2437, %v3496
      %v3665 = vadd.f32 %v2442, %v3501
      %v3666 = vadd.f32 %v2445, %v3504
      %v3667 = vadd.f32 %v2450, %v3509
      %v3668 = vadd.f32 %v2453, %v3512
      %v3669 = vadd.f32 %v2458, %v3517
      %v3670 = vadd.f32 %v2461, %v3520
      %v3671 = vadd.f32 %v2466, %v3525
      %v3672 = vadd.f32 %v2469, %v3528
      %v3673 = vadd.f32 %v2474, %v3533
      %v3674 = vadd.f32 %v2477, %v3536
      %v3675 = vadd.f32 %v2482, %v3541
      %v3676 = vadd.f32 %v2485, %v3544
      %v3677 = vadd.f32 %v2490, %v3549
      %v3678 = vadd.f32 %v2493, %v3552
      %v3679 = vadd.f32 %v2498, %v3557
      %v3680 = vadd.f32 %v2501, %v3560
      %v3681 = vadd.f32 %v2506, %v3565
      %v3682 = vadd.f32 %v2509, %v3568
      %v3683 = vadd.f32 %v2514, %v3573
      %v3684 = vadd.f32 %v2517, %v3576
      %v3685 = vadd.f32 %v2522, %v3581
      %v3686 = vadd.f32 %v2525, %v3584
      %v3687 = vadd.f32 %v2530, %v3589
      %v3688 = vadd.f32 %v2533, %v3592
      %v3689 = vadd.f32 %v2538, %v3597
      %v3690 = vadd.f32 %v2541, %v3600
      %v3691 = vadd.f32 %v2546, %v3605
      %v3692 = vadd.f32 %v2549, %v3608
      %v3693 = vadd.f32 %v2554, %v3613
      %v3694 = vadd.f32 %v2557, %v3616
      %v3695 = vadd.f32 %v2562, %v3621
      %v3696 = vadd.f32 %v2565, %v3624
      %v3697 = vadd.f32 %v2570, %v3629
      %v3698 = vadd.f32 %v2573, %v3632
      %v3699 = vld [vmem:[%s209] sm:$0x1]
      %v3701 = vlaneseq
      %v3702 = vshrl.u32 %v3701, 7
      %v3703 = vsub.s32 0, %v3702
      %v3704 = vrot.slane %v3699, %v3703
      %v3706 = vadd.f32 %v3635, %v3704
      %v3707 = vadd.f32 %v3636, %v3704
      %v3708 = vadd.f32 %v3637, %v3704
      %v3709 = vadd.f32 %v3638, %v3704
      %v3710 = vadd.f32 %v3639, %v3704
      %v3711 = vadd.f32 %v3640, %v3704
      %v3712 = vadd.f32 %v3641, %v3704
      %v3713 = vadd.f32 %v3642, %v3704
      %v3714 = vadd.f32 %v3643, %v3704
      %v3715 = vadd.f32 %v3644, %v3704
      %v3716 = vadd.f32 %v3645, %v3704
      %v3717 = vadd.f32 %v3646, %v3704
      %v3718 = vadd.f32 %v3647, %v3704
      %v3719 = vadd.f32 %v3648, %v3704
      %v3720 = vadd.f32 %v3649, %v3704
      %v3721 = vadd.f32 %v3650, %v3704
      %v3722 = vadd.f32 %v3651, %v3704
      %v3723 = vadd.f32 %v3652, %v3704
      %v3724 = vadd.f32 %v3653, %v3704
      %v3725 = vadd.f32 %v3654, %v3704
      %v3726 = vadd.f32 %v3655, %v3704
      %v3727 = vadd.f32 %v3656, %v3704
      %v3728 = vadd.f32 %v3657, %v3704
      %v3729 = vadd.f32 %v3658, %v3704
      %v3730 = vadd.f32 %v3659, %v3704
      %v3731 = vadd.f32 %v3660, %v3704
      %v3732 = vadd.f32 %v3661, %v3704
      %v3733 = vadd.f32 %v3662, %v3704
      %v3734 = vadd.f32 %v3663, %v3704
      %v3735 = vadd.f32 %v3664, %v3704
      %v3736 = vadd.f32 %v3665, %v3704
      %v3737 = vadd.f32 %v3666, %v3704
      %v3738 = vadd.f32 %v3667, %v3704
      %v3739 = vadd.f32 %v3668, %v3704
      %v3740 = vadd.f32 %v3669, %v3704
      %v3741 = vadd.f32 %v3670, %v3704
      %v3742 = vadd.f32 %v3671, %v3704
      %v3743 = vadd.f32 %v3672, %v3704
      %v3744 = vadd.f32 %v3673, %v3704
      %v3745 = vadd.f32 %v3674, %v3704
      %v3746 = vadd.f32 %v3675, %v3704
      %v3747 = vadd.f32 %v3676, %v3704
      %v3748 = vadd.f32 %v3677, %v3704
      %v3749 = vadd.f32 %v3678, %v3704
      %v3750 = vadd.f32 %v3679, %v3704
      %v3751 = vadd.f32 %v3680, %v3704
      %v3752 = vadd.f32 %v3681, %v3704
      %v3753 = vadd.f32 %v3682, %v3704
      %v3754 = vadd.f32 %v3683, %v3704
      %v3755 = vadd.f32 %v3684, %v3704
      %v3756 = vadd.f32 %v3685, %v3704
      %v3757 = vadd.f32 %v3686, %v3704
      %v3758 = vadd.f32 %v3687, %v3704
      %v3759 = vadd.f32 %v3688, %v3704
      %v3760 = vadd.f32 %v3689, %v3704
      %v3761 = vadd.f32 %v3690, %v3704
      %v3762 = vadd.f32 %v3691, %v3704
      %v3763 = vadd.f32 %v3692, %v3704
      %v3764 = vadd.f32 %v3693, %v3704
      %v3765 = vadd.f32 %v3694, %v3704
      %v3766 = vadd.f32 %v3695, %v3704
      %v3767 = vadd.f32 %v3696, %v3704
      %v3768 = vadd.f32 %v3697, %v3704
      %v3769 = vadd.f32 %v3698, %v3704
      // Predicated region
      $region41: #{dncnn_complex_forward.1} parent=35 // pred_check
        %p3770 = pneg %p215
      $region42: #{dncnn_complex_forward.1} parent=35 // pred_check_branch
        %3772 = sbr.rel (%p3770) target = $region44
      $region43: #{dncnn_complex_forward.1} parent=35 // pred_region
        %v3773 = vmax.f32 %v3706, 0.0
        %v3774 = vmax.f32 %v3707, 0.0
        %v3775 = vmax.f32 %v3708, 0.0
        %v3776 = vmax.f32 %v3709, 0.0
        %v3777 = vmax.f32 %v3710, 0.0
        %v3778 = vmax.f32 %v3711, 0.0
        %v3779 = vmax.f32 %v3712, 0.0
        %v3780 = vmax.f32 %v3713, 0.0
        %v3781 = vmax.f32 %v3714, 0.0
        %v3782 = vmax.f32 %v3715, 0.0
        %v3783 = vmax.f32 %v3716, 0.0
        %v3784 = vmax.f32 %v3717, 0.0
        %v3785 = vmax.f32 %v3718, 0.0
        %v3786 = vmax.f32 %v3719, 0.0
        %v3787 = vmax.f32 %v3720, 0.0
        %v3788 = vmax.f32 %v3721, 0.0
        %v3789 = vmax.f32 %v3722, 0.0
        %v3790 = vmax.f32 %v3723, 0.0
        %v3791 = vmax.f32 %v3724, 0.0
        %v3792 = vmax.f32 %v3725, 0.0
        %v3793 = vmax.f32 %v3726, 0.0
        %v3794 = vmax.f32 %v3727, 0.0
        %v3795 = vmax.f32 %v3728, 0.0
        %v3796 = vmax.f32 %v3729, 0.0
        %v3797 = vmax.f32 %v3730, 0.0
        %v3798 = vmax.f32 %v3731, 0.0
        %v3799 = vmax.f32 %v3732, 0.0
        %v3800 = vmax.f32 %v3733, 0.0
        %v3801 = vmax.f32 %v3734, 0.0
        %v3802 = vmax.f32 %v3735, 0.0
        %v3803 = vmax.f32 %v3736, 0.0
        %v3804 = vmax.f32 %v3737, 0.0
        %v3805 = vmax.f32 %v3738, 0.0
        %v3806 = vmax.f32 %v3739, 0.0
        %v3807 = vmax.f32 %v3740, 0.0
        %v3808 = vmax.f32 %v3741, 0.0
        %v3809 = vmax.f32 %v3742, 0.0
        %v3810 = vmax.f32 %v3743, 0.0
        %v3811 = vmax.f32 %v3744, 0.0
        %v3812 = vmax.f32 %v3745, 0.0
        %v3813 = vmax.f32 %v3746, 0.0
        %v3814 = vmax.f32 %v3747, 0.0
        %v3815 = vmax.f32 %v3748, 0.0
        %v3816 = vmax.f32 %v3749, 0.0
        %v3817 = vmax.f32 %v3750, 0.0
        %v3818 = vmax.f32 %v3751, 0.0
        %v3819 = vmax.f32 %v3752, 0.0
        %v3820 = vmax.f32 %v3753, 0.0
        %v3821 = vmax.f32 %v3754, 0.0
        %v3822 = vmax.f32 %v3755, 0.0
        %v3823 = vmax.f32 %v3756, 0.0
        %v3824 = vmax.f32 %v3757, 0.0
        %v3825 = vmax.f32 %v3758, 0.0
        %v3826 = vmax.f32 %v3759, 0.0
        %v3827 = vmax.f32 %v3760, 0.0
        %v3828 = vmax.f32 %v3761, 0.0
        %v3829 = vmax.f32 %v3762, 0.0
        %v3830 = vmax.f32 %v3763, 0.0
        %v3831 = vmax.f32 %v3764, 0.0
        %v3832 = vmax.f32 %v3765, 0.0
        %v3833 = vmax.f32 %v3766, 0.0
        %v3834 = vmax.f32 %v3767, 0.0
        %v3835 = vmax.f32 %v3768, 0.0
        %v3836 = vmax.f32 %v3769, 0.0
        %3837 = vst.msk [vmem:[%s1060 + $0x1] sm:$0xff] %vm907, %v3773
        %3838 = vst.msk [vmem:[%s1060 + $0x9] sm:$0xff] %vm907, %v3774
        %3839 = vst.msk [vmem:[%s1060 + $0x19] sm:$0xff] %vm907, %v3775
        %3840 = vst.msk [vmem:[%s1060 + $0x21] sm:$0xff] %vm907, %v3776
        %3841 = vst.msk [vmem:[%s1060 + $0x31] sm:$0xff] %vm907, %v3777
        %3842 = vst.msk [vmem:[%s1060 + $0x39] sm:$0xff] %vm907, %v3778
        %3843 = vst.msk [vmem:[%s1060 + $0x49] sm:$0xff] %vm907, %v3779
        %3844 = vst.msk [vmem:[%s1060 + $0x51] sm:$0xff] %vm907, %v3780
        %3845 = vst.msk [vmem:[%s1060 + $0x61] sm:$0xff] %vm907, %v3781
        %3846 = vst.msk [vmem:[%s1060 + $0x69] sm:$0xff] %vm907, %v3782
        %3847 = vst.msk [vmem:[%s1060 + $0x79] sm:$0xff] %vm907, %v3783
        %3848 = vst.msk [vmem:[%s1060 + $0x81] sm:$0xff] %vm907, %v3784
        %3849 = vst.msk [vmem:[%s1060 + $0x91] sm:$0xff] %vm907, %v3785
        %3850 = vst.msk [vmem:[%s1060 + $0x99] sm:$0xff] %vm907, %v3786
        %3851 = vst.msk [vmem:[%s1060 + $0xa9] sm:$0xff] %vm907, %v3787
        %3852 = vst.msk [vmem:[%s1060 + $0xb1] sm:$0xff] %vm907, %v3788
        %3853 = vst.msk [vmem:[%s1060 + $0xc1] sm:$0xff] %vm907, %v3789
        %3854 = vst.msk [vmem:[%s1060 + $0xc9] sm:$0xff] %vm907, %v3790
        %3855 = vst.msk [vmem:[%s1060 + $0xd9] sm:$0xff] %vm907, %v3791
        %3856 = vst.msk [vmem:[%s1060 + $0xe1] sm:$0xff] %vm907, %v3792
        %3857 = vst.msk [vmem:[%s1060 + $0xf1] sm:$0xff] %vm907, %v3793
        %3858 = vst.msk [vmem:[%s1060 + $0xf9] sm:$0xff] %vm907, %v3794
        %3859 = vst.msk [vmem:[%s1060 + $0x109] sm:$0xff] %vm907, %v3795
        %3860 = vst.msk [vmem:[%s1060 + $0x111] sm:$0xff] %vm907, %v3796
        %3861 = vst.msk [vmem:[%s1060 + $0x121] sm:$0xff] %vm907, %v3797
        %3862 = vst.msk [vmem:[%s1060 + $0x129] sm:$0xff] %vm907, %v3798
        %3863 = vst.msk [vmem:[%s1060 + $0x139] sm:$0xff] %vm907, %v3799
        %3864 = vst.msk [vmem:[%s1060 + $0x141] sm:$0xff] %vm907, %v3800
        %3865 = vst.msk [vmem:[%s1060 + $0x151] sm:$0xff] %vm907, %v3801
        %3866 = vst.msk [vmem:[%s1060 + $0x159] sm:$0xff] %vm907, %v3802
        %3867 = vst.msk [vmem:[%s1060 + $0x169] sm:$0xff] %vm907, %v3803
        %3868 = vst.msk [vmem:[%s1060 + $0x171] sm:$0xff] %vm907, %v3804
        %3869 = vst.msk [vmem:[%s1060 + $0x1b1] sm:$0xff] %vm907, %v3805
        %3870 = vst.msk [vmem:[%s1060 + $0x1b9] sm:$0xff] %vm907, %v3806
        %3871 = vst.msk [vmem:[%s1060 + $0x1c9] sm:$0xff] %vm907, %v3807
        %3872 = vst.msk [vmem:[%s1060 + $0x1d1] sm:$0xff] %vm907, %v3808
        %3873 = vst.msk [vmem:[%s1060 + $0x1e1] sm:$0xff] %vm907, %v3809
        %3874 = vst.msk [vmem:[%s1060 + $0x1e9] sm:$0xff] %vm907, %v3810
        %3875 = vst.msk [vmem:[%s1060 + $0x1f9] sm:$0xff] %vm907, %v3811
        %3876 = vst.msk [vmem:[%s1060 + $0x201] sm:$0xff] %vm907, %v3812
        %3877 = vst.msk [vmem:[%s1060 + $0x211] sm:$0xff] %vm907, %v3813
        %3878 = vst.msk [vmem:[%s1060 + $0x219] sm:$0xff] %vm907, %v3814
        %3879 = vst.msk [vmem:[%s1060 + $0x229] sm:$0xff] %vm907, %v3815
        %3880 = vst.msk [vmem:[%s1060 + $0x231] sm:$0xff] %vm907, %v3816
        %3881 = vst.msk [vmem:[%s1060 + $0x241] sm:$0xff] %vm907, %v3817
        %3882 = vst.msk [vmem:[%s1060 + $0x249] sm:$0xff] %vm907, %v3818
        %3883 = vst.msk [vmem:[%s1060 + $0x259] sm:$0xff] %vm907, %v3819
        %3884 = vst.msk [vmem:[%s1060 + $0x261] sm:$0xff] %vm907, %v3820
        %3885 = vst.msk [vmem:[%s1060 + $0x271] sm:$0xff] %vm907, %v3821
        %3886 = vst.msk [vmem:[%s1060 + $0x279] sm:$0xff] %vm907, %v3822
        %3887 = vst.msk [vmem:[%s1060 + $0x289] sm:$0xff] %vm907, %v3823
        %3888 = vst.msk [vmem:[%s1060 + $0x291] sm:$0xff] %vm907, %v3824
        %3889 = vst.msk [vmem:[%s1060 + $0x2a1] sm:$0xff] %vm907, %v3825
        %3890 = vst.msk [vmem:[%s1060 + $0x2a9] sm:$0xff] %vm907, %v3826
        %3891 = vst.msk [vmem:[%s1060 + $0x2b9] sm:$0xff] %vm907, %v3827
        %3892 = vst.msk [vmem:[%s1060 + $0x2c1] sm:$0xff] %vm907, %v3828
        %3893 = vst.msk [vmem:[%s1060 + $0x2d1] sm:$0xff] %vm907, %v3829
        %3894 = vst.msk [vmem:[%s1060 + $0x2d9] sm:$0xff] %vm907, %v3830
        %3895 = vst.msk [vmem:[%s1060 + $0x2e9] sm:$0xff] %vm907, %v3831
        %3896 = vst.msk [vmem:[%s1060 + $0x2f1] sm:$0xff] %vm907, %v3832
        %3897 = vst.msk [vmem:[%s1060 + $0x301] sm:$0xff] %vm907, %v3833
        %3898 = vst.msk [vmem:[%s1060 + $0x309] sm:$0xff] %vm907, %v3834
        %3899 = vst.msk [vmem:[%s1060 + $0x319] sm:$0xff] %vm907, %v3835
        %3900 = vst.msk [vmem:[%s1060 + $0x321] sm:$0xff] %vm907, %v3836
      $region44: #{dncnn_complex_forward.1} parent=35 // pred_fallthru
        _
      %p3901 = scmp.gt.s32.totalorder %s15, 0
      %p3902 = scmp.lt.s32.totalorder %s15, 19
      %p3903 = pnand %p3901, %p3902
      %p3904 = pneg %p3903
      // Predicated region
      $region45: #{dncnn_complex_forward.1} parent=35 // pred_check
        _
      $region46: #{dncnn_complex_forward.1} parent=35 // pred_check_branch
        %3906 = sbr.rel (%p3903) target = $region48
      $region47: #{dncnn_complex_forward.1} parent=35 // pred_region
        %v3907 = vsel %vm907, %v3706, 0.0
        %v3908 = vsel %vm907, %v3707, 0.0
        %v3909 = vadd.f32 %v3907, %v3908
        %v3910 = vsel %vm907, %v3708, 0.0
        %v3911 = vadd.f32 %v3909, %v3910
        %v3912 = vsel %vm907, %v3709, 0.0
        %v3913 = vadd.f32 %v3911, %v3912
        %v3914 = vsel %vm907, %v3710, 0.0
        %v3915 = vadd.f32 %v3913, %v3914
        %v3916 = vsel %vm907, %v3711, 0.0
        %v3917 = vadd.f32 %v3915, %v3916
        %v3918 = vsel %vm907, %v3712, 0.0
        %v3919 = vadd.f32 %v3917, %v3918
        %v3920 = vsel %vm907, %v3713, 0.0
        %v3921 = vadd.f32 %v3919, %v3920
        %v3922 = vsel %vm907, %v3714, 0.0
        %v3923 = vadd.f32 %v3921, %v3922
        %v3924 = vsel %vm907, %v3715, 0.0
        %v3925 = vadd.f32 %v3923, %v3924
        %v3926 = vsel %vm907, %v3716, 0.0
        %v3927 = vadd.f32 %v3925, %v3926
        %v3928 = vsel %vm907, %v3717, 0.0
        %v3929 = vadd.f32 %v3927, %v3928
        %v3930 = vsel %vm907, %v3718, 0.0
        %v3931 = vadd.f32 %v3929, %v3930
        %v3932 = vsel %vm907, %v3719, 0.0
        %v3933 = vadd.f32 %v3931, %v3932
        %v3934 = vsel %vm907, %v3720, 0.0
        %v3935 = vadd.f32 %v3933, %v3934
        %v3936 = vsel %vm907, %v3721, 0.0
        %v3937 = vadd.f32 %v3935, %v3936
        %v3938 = vsel %vm907, %v3722, 0.0
        %v3939 = vadd.f32 %v3937, %v3938
        %v3940 = vsel %vm907, %v3723, 0.0
        %v3941 = vadd.f32 %v3939, %v3940
        %v3942 = vsel %vm907, %v3724, 0.0
        %v3943 = vadd.f32 %v3941, %v3942
        %v3944 = vsel %vm907, %v3725, 0.0
        %v3945 = vadd.f32 %v3943, %v3944
        %v3946 = vsel %vm907, %v3726, 0.0
        %v3947 = vadd.f32 %v3945, %v3946
        %v3948 = vsel %vm907, %v3727, 0.0
        %v3949 = vadd.f32 %v3947, %v3948
        %v3950 = vsel %vm907, %v3728, 0.0
        %v3951 = vadd.f32 %v3949, %v3950
        %v3952 = vsel %vm907, %v3729, 0.0
        %v3953 = vadd.f32 %v3951, %v3952
        %v3954 = vsel %vm907, %v3730, 0.0
        %v3955 = vadd.f32 %v3953, %v3954
        %v3956 = vsel %vm907, %v3731, 0.0
        %v3957 = vadd.f32 %v3955, %v3956
        %v3958 = vsel %vm907, %v3732, 0.0
        %v3959 = vadd.f32 %v3957, %v3958
        %v3960 = vsel %vm907, %v3733, 0.0
        %v3961 = vadd.f32 %v3959, %v3960
        %v3962 = vsel %vm907, %v3734, 0.0
        %v3963 = vadd.f32 %v3961, %v3962
        %v3964 = vsel %vm907, %v3735, 0.0
        %v3965 = vadd.f32 %v3963, %v3964
        %v3966 = vsel %vm907, %v3736, 0.0
        %v3967 = vadd.f32 %v3965, %v3966
        %v3968 = vsel %vm907, %v3737, 0.0
        %v3969 = vadd.f32 %v3967, %v3968
        %v3970 = vsel %vm907, %v3738, 0.0
        %v3971 = vadd.f32 %v3969, %v3970
        %v3972 = vsel %vm907, %v3739, 0.0
        %v3973 = vadd.f32 %v3971, %v3972
        %v3974 = vsel %vm907, %v3740, 0.0
        %v3975 = vadd.f32 %v3973, %v3974
        %v3976 = vsel %vm907, %v3741, 0.0
        %v3977 = vadd.f32 %v3975, %v3976
        %v3978 = vsel %vm907, %v3742, 0.0
        %v3979 = vadd.f32 %v3977, %v3978
        %v3980 = vsel %vm907, %v3743, 0.0
        %v3981 = vadd.f32 %v3979, %v3980
        %v3982 = vsel %vm907, %v3744, 0.0
        %v3983 = vadd.f32 %v3981, %v3982
        %v3984 = vsel %vm907, %v3745, 0.0
        %v3985 = vadd.f32 %v3983, %v3984
        %v3986 = vsel %vm907, %v3746, 0.0
        %v3987 = vadd.f32 %v3985, %v3986
        %v3988 = vsel %vm907, %v3747, 0.0
        %v3989 = vadd.f32 %v3987, %v3988
        %v3990 = vsel %vm907, %v3748, 0.0
        %v3991 = vadd.f32 %v3989, %v3990
        %v3992 = vsel %vm907, %v3749, 0.0
        %v3993 = vadd.f32 %v3991, %v3992
        %v3994 = vsel %vm907, %v3750, 0.0
        %v3995 = vadd.f32 %v3993, %v3994
        %v3996 = vsel %vm907, %v3751, 0.0
        %v3997 = vadd.f32 %v3995, %v3996
        %v3998 = vsel %vm907, %v3752, 0.0
        %v3999 = vadd.f32 %v3997, %v3998
        %v4000 = vsel %vm907, %v3753, 0.0
        %v4001 = vadd.f32 %v3999, %v4000
        %v4002 = vsel %vm907, %v3754, 0.0
        %v4003 = vadd.f32 %v4001, %v4002
        %v4004 = vsel %vm907, %v3755, 0.0
        %v4005 = vadd.f32 %v4003, %v4004
        %v4006 = vsel %vm907, %v3756, 0.0
        %v4007 = vadd.f32 %v4005, %v4006
        %v4008 = vsel %vm907, %v3757, 0.0
        %v4009 = vadd.f32 %v4007, %v4008
        %v4010 = vsel %vm907, %v3758, 0.0
        %v4011 = vadd.f32 %v4009, %v4010
        %v4012 = vsel %vm907, %v3759, 0.0
        %v4013 = vadd.f32 %v4011, %v4012
        %v4014 = vsel %vm907, %v3760, 0.0
        %v4015 = vadd.f32 %v4013, %v4014
        %v4016 = vsel %vm907, %v3761, 0.0
        %v4017 = vadd.f32 %v4015, %v4016
        %v4018 = vsel %vm907, %v3762, 0.0
        %v4019 = vadd.f32 %v4017, %v4018
        %v4020 = vsel %vm907, %v3763, 0.0
        %v4021 = vadd.f32 %v4019, %v4020
        %v4022 = vsel %vm907, %v3764, 0.0
        %v4023 = vadd.f32 %v4021, %v4022
        %v4024 = vsel %vm907, %v3765, 0.0
        %v4025 = vadd.f32 %v4023, %v4024
        %v4026 = vsel %vm907, %v3766, 0.0
        %v4027 = vadd.f32 %v4025, %v4026
        %v4028 = vsel %vm907, %v3767, 0.0
        %v4029 = vadd.f32 %v4027, %v4028
        %v4030 = vsel %vm907, %v3768, 0.0
        %v4031 = vadd.f32 %v4029, %v4030
        %v4032 = vsel %vm907, %v3769, 0.0
        %v4033 = vadd.f32 %v4031, %v4032
        %v4034 = vrot.slane %v4033, 4
        %v4035 = vadd.f32 %v4033, %v4034
        %v4036 = vrot.slane %v4035, 2
        %v4037 = vadd.f32 %v4035, %v4036
        %v4038 = vrot.slane %v4037, 1
        %v4039 = vadd.f32 %v4037, %v4038
        %v4040 = vrcp.pop 512.0
        %v4041 = vmul.f32 %v4039, %v4040
        %v4042 = vsub.f32 %v3706, %v4041
        %v4043 = vsub.f32 %v3707, %v4041
        %v4044 = vsub.f32 %v3708, %v4041
        %v4045 = vsub.f32 %v3709, %v4041
        %v4046 = vsub.f32 %v3710, %v4041
        %v4047 = vsub.f32 %v3711, %v4041
        %v4048 = vsub.f32 %v3712, %v4041
        %v4049 = vsub.f32 %v3713, %v4041
        %v4050 = vsub.f32 %v3714, %v4041
        %v4051 = vsub.f32 %v3715, %v4041
        %v4052 = vsub.f32 %v3716, %v4041
        %v4053 = vsub.f32 %v3717, %v4041
        %v4054 = vsub.f32 %v3718, %v4041
        %v4055 = vsub.f32 %v3719, %v4041
        %v4056 = vsub.f32 %v3720, %v4041
        %v4057 = vsub.f32 %v3721, %v4041
        %v4058 = vsub.f32 %v3722, %v4041
        %v4059 = vsub.f32 %v3723, %v4041
        %v4060 = vsub.f32 %v3724, %v4041
        %v4061 = vsub.f32 %v3725, %v4041
        %v4062 = vsub.f32 %v3726, %v4041
        %v4063 = vsub.f32 %v3727, %v4041
        %v4064 = vsub.f32 %v3728, %v4041
        %v4065 = vsub.f32 %v3729, %v4041
        %v4066 = vsub.f32 %v3730, %v4041
        %v4067 = vsub.f32 %v3731, %v4041
        %v4068 = vsub.f32 %v3732, %v4041
        %v4069 = vsub.f32 %v3733, %v4041
        %v4070 = vsub.f32 %v3734, %v4041
        %v4071 = vsub.f32 %v3735, %v4041
        %v4072 = vsub.f32 %v3736, %v4041
        %v4073 = vsub.f32 %v3737, %v4041
        %v4074 = vsub.f32 %v3738, %v4041
        %v4075 = vsub.f32 %v3739, %v4041
        %v4076 = vsub.f32 %v3740, %v4041
        %v4077 = vsub.f32 %v3741, %v4041
        %v4078 = vsub.f32 %v3742, %v4041
        %v4079 = vsub.f32 %v3743, %v4041
        %v4080 = vsub.f32 %v3744, %v4041
        %v4081 = vsub.f32 %v3745, %v4041
        %v4082 = vsub.f32 %v3746, %v4041
        %v4083 = vsub.f32 %v3747, %v4041
        %v4084 = vsub.f32 %v3748, %v4041
        %v4085 = vsub.f32 %v3749, %v4041
        %v4086 = vsub.f32 %v3750, %v4041
        %v4087 = vsub.f32 %v3751, %v4041
        %v4088 = vsub.f32 %v3752, %v4041
        %v4089 = vsub.f32 %v3753, %v4041
        %v4090 = vsub.f32 %v3754, %v4041
        %v4091 = vsub.f32 %v3755, %v4041
        %v4092 = vsub.f32 %v3756, %v4041
        %v4093 = vsub.f32 %v3757, %v4041
        %v4094 = vsub.f32 %v3758, %v4041
        %v4095 = vsub.f32 %v3759, %v4041
        %v4096 = vsub.f32 %v3760, %v4041
        %v4097 = vsub.f32 %v3761, %v4041
        %v4098 = vsub.f32 %v3762, %v4041
        %v4099 = vsub.f32 %v3763, %v4041
        %v4100 = vsub.f32 %v3764, %v4041
        %v4101 = vsub.f32 %v3765, %v4041
        %v4102 = vsub.f32 %v3766, %v4041
        %v4103 = vsub.f32 %v3767, %v4041
        %v4104 = vsub.f32 %v3768, %v4041
        %v4105 = vsub.f32 %v3769, %v4041
        %4170 = vrot.lane.b32.xlu0 %v4042, 96
        %v4171 = vpop.permute.xlu0 %4170
        %4172 = vrot.lane.b32.xlu0 %v4043, 96
        %v4173 = vpop.permute.xlu0 %4172
        %4174 = vrot.lane.b32.xlu0 %v4044, 96
        %v4175 = vpop.permute.xlu0 %4174
        %4176 = vrot.lane.b32.xlu0 %v4045, 96
        %v4177 = vpop.permute.xlu0 %4176
        %4178 = vrot.lane.b32.xlu0 %v4046, 96
        %v4179 = vpop.permute.xlu0 %4178
        %4180 = vrot.lane.b32.xlu0 %v4047, 96
        %v4181 = vpop.permute.xlu0 %4180
        %4182 = vrot.lane.b32.xlu0 %v4048, 96
        %v4183 = vpop.permute.xlu0 %4182
        %4184 = vrot.lane.b32.xlu0 %v4049, 96
        %v4185 = vpop.permute.xlu0 %4184
        %4186 = vrot.lane.b32.xlu0 %v4050, 96
        %v4187 = vpop.permute.xlu0 %4186
        %4188 = vrot.lane.b32.xlu0 %v4051, 96
        %v4189 = vpop.permute.xlu0 %4188
        %4190 = vrot.lane.b32.xlu0 %v4052, 96
        %v4191 = vpop.permute.xlu0 %4190
        %4192 = vrot.lane.b32.xlu0 %v4053, 96
        %v4193 = vpop.permute.xlu0 %4192
        %4194 = vrot.lane.b32.xlu0 %v4054, 96
        %v4195 = vpop.permute.xlu0 %4194
        %4196 = vrot.lane.b32.xlu0 %v4055, 96
        %v4197 = vpop.permute.xlu0 %4196
        %4198 = vrot.lane.b32.xlu0 %v4056, 96
        %v4199 = vpop.permute.xlu0 %4198
        %4200 = vrot.lane.b32.xlu0 %v4057, 96
        %v4201 = vpop.permute.xlu0 %4200
        %4202 = vrot.lane.b32.xlu0 %v4058, 96
        %v4203 = vpop.permute.xlu0 %4202
        %4204 = vrot.lane.b32.xlu0 %v4059, 96
        %v4205 = vpop.permute.xlu0 %4204
        %4206 = vrot.lane.b32.xlu0 %v4060, 96
        %v4207 = vpop.permute.xlu0 %4206
        %4208 = vrot.lane.b32.xlu0 %v4061, 96
        %v4209 = vpop.permute.xlu0 %4208
        %4210 = vrot.lane.b32.xlu0 %v4062, 96
        %v4211 = vpop.permute.xlu0 %4210
        %4212 = vrot.lane.b32.xlu0 %v4063, 96
        %v4213 = vpop.permute.xlu0 %4212
        %4214 = vrot.lane.b32.xlu0 %v4064, 96
        %v4215 = vpop.permute.xlu0 %4214
        %4216 = vrot.lane.b32.xlu0 %v4065, 96
        %v4217 = vpop.permute.xlu0 %4216
        %4218 = vrot.lane.b32.xlu0 %v4066, 96
        %v4219 = vpop.permute.xlu0 %4218
        %4220 = vrot.lane.b32.xlu0 %v4067, 96
        %v4221 = vpop.permute.xlu0 %4220
        %4222 = vrot.lane.b32.xlu0 %v4068, 96
        %v4223 = vpop.permute.xlu0 %4222
        %4224 = vrot.lane.b32.xlu0 %v4069, 96
        %v4225 = vpop.permute.xlu0 %4224
        %4226 = vrot.lane.b32.xlu0 %v4070, 96
        %v4227 = vpop.permute.xlu0 %4226
        %4228 = vrot.lane.b32.xlu0 %v4071, 96
        %v4229 = vpop.permute.xlu0 %4228
        %4230 = vrot.lane.b32.xlu0 %v4072, 96
        %v4231 = vpop.permute.xlu0 %4230
        %4232 = vrot.lane.b32.xlu0 %v4073, 96
        %v4233 = vpop.permute.xlu0 %4232
        %4234 = vrot.lane.b32.xlu0 %v4074, 96
        %v4235 = vpop.permute.xlu0 %4234
        %4236 = vrot.lane.b32.xlu0 %v4075, 96
        %v4237 = vpop.permute.xlu0 %4236
        %4238 = vrot.lane.b32.xlu0 %v4076, 96
        %v4239 = vpop.permute.xlu0 %4238
        %4240 = vrot.lane.b32.xlu0 %v4077, 96
        %v4241 = vpop.permute.xlu0 %4240
        %4242 = vrot.lane.b32.xlu0 %v4078, 96
        %v4243 = vpop.permute.xlu0 %4242
        %4244 = vrot.lane.b32.xlu0 %v4079, 96
        %v4245 = vpop.permute.xlu0 %4244
        %4246 = vrot.lane.b32.xlu0 %v4080, 96
        %v4247 = vpop.permute.xlu0 %4246
        %4248 = vrot.lane.b32.xlu0 %v4081, 96
        %v4249 = vpop.permute.xlu0 %4248
        %4250 = vrot.lane.b32.xlu0 %v4082, 96
        %v4251 = vpop.permute.xlu0 %4250
        %4252 = vrot.lane.b32.xlu0 %v4083, 96
        %v4253 = vpop.permute.xlu0 %4252
        %4254 = vrot.lane.b32.xlu0 %v4084, 96
        %v4255 = vpop.permute.xlu0 %4254
        %4256 = vrot.lane.b32.xlu0 %v4085, 96
        %v4257 = vpop.permute.xlu0 %4256
        %4258 = vrot.lane.b32.xlu0 %v4086, 96
        %v4259 = vpop.permute.xlu0 %4258
        %4260 = vrot.lane.b32.xlu0 %v4087, 96
        %v4261 = vpop.permute.xlu0 %4260
        %4262 = vrot.lane.b32.xlu0 %v4088, 96
        %v4263 = vpop.permute.xlu0 %4262
        %4264 = vrot.lane.b32.xlu0 %v4089, 96
        %v4265 = vpop.permute.xlu0 %4264
        %4266 = vrot.lane.b32.xlu0 %v4090, 96
        %v4267 = vpop.permute.xlu0 %4266
        %4268 = vrot.lane.b32.xlu0 %v4091, 96
        %v4269 = vpop.permute.xlu0 %4268
        %4270 = vrot.lane.b32.xlu0 %v4092, 96
        %v4271 = vpop.permute.xlu0 %4270
        %4272 = vrot.lane.b32.xlu0 %v4093, 96
        %v4273 = vpop.permute.xlu0 %4272
        %4274 = vrot.lane.b32.xlu0 %v4094, 96
        %v4275 = vpop.permute.xlu0 %4274
        %4276 = vrot.lane.b32.xlu0 %v4095, 96
        %v4277 = vpop.permute.xlu0 %4276
        %4278 = vrot.lane.b32.xlu0 %v4096, 96
        %v4279 = vpop.permute.xlu0 %4278
        %4280 = vrot.lane.b32.xlu0 %v4097, 96
        %v4281 = vpop.permute.xlu0 %4280
        %4282 = vrot.lane.b32.xlu0 %v4098, 96
        %v4283 = vpop.permute.xlu0 %4282
        %4284 = vrot.lane.b32.xlu0 %v4099, 96
        %v4285 = vpop.permute.xlu0 %4284
        %4286 = vrot.lane.b32.xlu0 %v4100, 96
        %v4287 = vpop.permute.xlu0 %4286
        %4288 = vrot.lane.b32.xlu0 %v4101, 96
        %v4289 = vpop.permute.xlu0 %4288
        %4290 = vrot.lane.b32.xlu0 %v4102, 96
        %v4291 = vpop.permute.xlu0 %4290
        %4292 = vrot.lane.b32.xlu0 %v4103, 96
        %v4293 = vpop.permute.xlu0 %4292
        %4294 = vrot.lane.b32.xlu0 %v4104, 96
        %v4295 = vpop.permute.xlu0 %4294
        %4296 = vrot.lane.b32.xlu0 %v4105, 96
        %v4297 = vpop.permute.xlu0 %4296
        %4362 = vrot.lane.b32.xlu0 %v4042, 32
        %v4363 = vpop.permute.xlu0 %4362
        %4364 = vrot.lane.b32.xlu0 %v4043, 32
        %v4365 = vpop.permute.xlu0 %4364
        %4366 = vrot.lane.b32.xlu0 %v4044, 32
        %v4367 = vpop.permute.xlu0 %4366
        %4368 = vrot.lane.b32.xlu0 %v4045, 32
        %v4369 = vpop.permute.xlu0 %4368
        %4370 = vrot.lane.b32.xlu0 %v4046, 32
        %v4371 = vpop.permute.xlu0 %4370
        %4372 = vrot.lane.b32.xlu0 %v4047, 32
        %v4373 = vpop.permute.xlu0 %4372
        %4374 = vrot.lane.b32.xlu0 %v4048, 32
        %v4375 = vpop.permute.xlu0 %4374
        %4376 = vrot.lane.b32.xlu0 %v4049, 32
        %v4377 = vpop.permute.xlu0 %4376
        %4378 = vrot.lane.b32.xlu0 %v4050, 32
        %v4379 = vpop.permute.xlu0 %4378
        %4380 = vrot.lane.b32.xlu0 %v4051, 32
        %v4381 = vpop.permute.xlu0 %4380
        %4382 = vrot.lane.b32.xlu0 %v4052, 32
        %v4383 = vpop.permute.xlu0 %4382
        %4384 = vrot.lane.b32.xlu0 %v4053, 32
        %v4385 = vpop.permute.xlu0 %4384
        %4386 = vrot.lane.b32.xlu0 %v4054, 32
        %v4387 = vpop.permute.xlu0 %4386
        %4388 = vrot.lane.b32.xlu0 %v4055, 32
        %v4389 = vpop.permute.xlu0 %4388
        %4390 = vrot.lane.b32.xlu0 %v4056, 32
        %v4391 = vpop.permute.xlu0 %4390
        %4392 = vrot.lane.b32.xlu0 %v4057, 32
        %v4393 = vpop.permute.xlu0 %4392
        %4394 = vrot.lane.b32.xlu0 %v4058, 32
        %v4395 = vpop.permute.xlu0 %4394
        %4396 = vrot.lane.b32.xlu0 %v4059, 32
        %v4397 = vpop.permute.xlu0 %4396
        %4398 = vrot.lane.b32.xlu0 %v4060, 32
        %v4399 = vpop.permute.xlu0 %4398
        %4400 = vrot.lane.b32.xlu0 %v4061, 32
        %v4401 = vpop.permute.xlu0 %4400
        %4402 = vrot.lane.b32.xlu0 %v4062, 32
        %v4403 = vpop.permute.xlu0 %4402
        %4404 = vrot.lane.b32.xlu0 %v4063, 32
        %v4405 = vpop.permute.xlu0 %4404
        %4406 = vrot.lane.b32.xlu0 %v4064, 32
        %v4407 = vpop.permute.xlu0 %4406
        %4408 = vrot.lane.b32.xlu0 %v4065, 32
        %v4409 = vpop.permute.xlu0 %4408
        %4410 = vrot.lane.b32.xlu0 %v4066, 32
        %v4411 = vpop.permute.xlu0 %4410
        %4412 = vrot.lane.b32.xlu0 %v4067, 32
        %v4413 = vpop.permute.xlu0 %4412
        %4414 = vrot.lane.b32.xlu0 %v4068, 32
        %v4415 = vpop.permute.xlu0 %4414
        %4416 = vrot.lane.b32.xlu0 %v4069, 32
        %v4417 = vpop.permute.xlu0 %4416
        %4418 = vrot.lane.b32.xlu0 %v4070, 32
        %v4419 = vpop.permute.xlu0 %4418
        %4420 = vrot.lane.b32.xlu0 %v4071, 32
        %v4421 = vpop.permute.xlu0 %4420
        %4422 = vrot.lane.b32.xlu0 %v4072, 32
        %v4423 = vpop.permute.xlu0 %4422
        %4424 = vrot.lane.b32.xlu0 %v4073, 32
        %v4425 = vpop.permute.xlu0 %4424
        %4426 = vrot.lane.b32.xlu0 %v4074, 32
        %v4427 = vpop.permute.xlu0 %4426
        %4428 = vrot.lane.b32.xlu0 %v4075, 32
        %v4429 = vpop.permute.xlu0 %4428
        %4430 = vrot.lane.b32.xlu0 %v4076, 32
        %v4431 = vpop.permute.xlu0 %4430
        %4432 = vrot.lane.b32.xlu0 %v4077, 32
        %v4433 = vpop.permute.xlu0 %4432
        %4434 = vrot.lane.b32.xlu0 %v4078, 32
        %v4435 = vpop.permute.xlu0 %4434
        %4436 = vrot.lane.b32.xlu0 %v4079, 32
        %v4437 = vpop.permute.xlu0 %4436
        %4438 = vrot.lane.b32.xlu0 %v4080, 32
        %v4439 = vpop.permute.xlu0 %4438
        %4440 = vrot.lane.b32.xlu0 %v4081, 32
        %v4441 = vpop.permute.xlu0 %4440
        %4442 = vrot.lane.b32.xlu0 %v4082, 32
        %v4443 = vpop.permute.xlu0 %4442
        %4444 = vrot.lane.b32.xlu0 %v4083, 32
        %v4445 = vpop.permute.xlu0 %4444
        %4446 = vrot.lane.b32.xlu0 %v4084, 32
        %v4447 = vpop.permute.xlu0 %4446
        %4448 = vrot.lane.b32.xlu0 %v4085, 32
        %v4449 = vpop.permute.xlu0 %4448
        %4450 = vrot.lane.b32.xlu0 %v4086, 32
        %v4451 = vpop.permute.xlu0 %4450
        %4452 = vrot.lane.b32.xlu0 %v4087, 32
        %v4453 = vpop.permute.xlu0 %4452
        %4454 = vrot.lane.b32.xlu0 %v4088, 32
        %v4455 = vpop.permute.xlu0 %4454
        %4456 = vrot.lane.b32.xlu0 %v4089, 32
        %v4457 = vpop.permute.xlu0 %4456
        %4458 = vrot.lane.b32.xlu0 %v4090, 32
        %v4459 = vpop.permute.xlu0 %4458
        %4460 = vrot.lane.b32.xlu0 %v4091, 32
        %v4461 = vpop.permute.xlu0 %4460
        %4462 = vrot.lane.b32.xlu0 %v4092, 32
        %v4463 = vpop.permute.xlu0 %4462
        %4464 = vrot.lane.b32.xlu0 %v4093, 32
        %v4465 = vpop.permute.xlu0 %4464
        %4466 = vrot.lane.b32.xlu0 %v4094, 32
        %v4467 = vpop.permute.xlu0 %4466
        %4468 = vrot.lane.b32.xlu0 %v4095, 32
        %v4469 = vpop.permute.xlu0 %4468
        %4470 = vrot.lane.b32.xlu0 %v4096, 32
        %v4471 = vpop.permute.xlu0 %4470
        %4472 = vrot.lane.b32.xlu0 %v4097, 32
        %v4473 = vpop.permute.xlu0 %4472
        %4474 = vrot.lane.b32.xlu0 %v4098, 32
        %v4475 = vpop.permute.xlu0 %4474
        %4476 = vrot.lane.b32.xlu0 %v4099, 32
        %v4477 = vpop.permute.xlu0 %4476
        %4478 = vrot.lane.b32.xlu0 %v4100, 32
        %v4479 = vpop.permute.xlu0 %4478
        %4480 = vrot.lane.b32.xlu0 %v4101, 32
        %v4481 = vpop.permute.xlu0 %4480
        %4482 = vrot.lane.b32.xlu0 %v4102, 32
        %v4483 = vpop.permute.xlu0 %4482
        %4484 = vrot.lane.b32.xlu0 %v4103, 32
        %v4485 = vpop.permute.xlu0 %4484
        %4486 = vrot.lane.b32.xlu0 %v4104, 32
        %v4487 = vpop.permute.xlu0 %4486
        %4488 = vrot.lane.b32.xlu0 %v4105, 32
        %v4489 = vpop.permute.xlu0 %4488
        %vm4554 = vcmask 261120
        %v4555 = vsel %vm4554, %v4171, %v4363
        %v4556 = vsel %vm4554, %v4173, %v4365
        %v4557 = vsel %vm4554, %v4175, %v4367
        %v4558 = vsel %vm4554, %v4177, %v4369
        %v4559 = vsel %vm4554, %v4179, %v4371
        %v4560 = vsel %vm4554, %v4181, %v4373
        %v4561 = vsel %vm4554, %v4183, %v4375
        %v4562 = vsel %vm4554, %v4185, %v4377
        %v4563 = vsel %vm4554, %v4187, %v4379
        %v4564 = vsel %vm4554, %v4189, %v4381
        %v4565 = vsel %vm4554, %v4191, %v4383
        %v4566 = vsel %vm4554, %v4193, %v4385
        %v4567 = vsel %vm4554, %v4195, %v4387
        %v4568 = vsel %vm4554, %v4197, %v4389
        %v4569 = vsel %vm4554, %v4199, %v4391
        %v4570 = vsel %vm4554, %v4201, %v4393
        %v4571 = vsel %vm4554, %v4203, %v4395
        %v4572 = vsel %vm4554, %v4205, %v4397
        %v4573 = vsel %vm4554, %v4207, %v4399
        %v4574 = vsel %vm4554, %v4209, %v4401
        %v4575 = vsel %vm4554, %v4211, %v4403
        %v4576 = vsel %vm4554, %v4213, %v4405
        %v4577 = vsel %vm4554, %v4215, %v4407
        %v4578 = vsel %vm4554, %v4217, %v4409
        %v4579 = vsel %vm4554, %v4219, %v4411
        %v4580 = vsel %vm4554, %v4221, %v4413
        %v4581 = vsel %vm4554, %v4223, %v4415
        %v4582 = vsel %vm4554, %v4225, %v4417
        %v4583 = vsel %vm4554, %v4227, %v4419
        %v4584 = vsel %vm4554, %v4229, %v4421
        %v4585 = vsel %vm4554, %v4231, %v4423
        %v4586 = vsel %vm4554, %v4233, %v4425
        %v4587 = vsel %vm4554, %v4235, %v4427
        %v4588 = vsel %vm4554, %v4237, %v4429
        %v4589 = vsel %vm4554, %v4239, %v4431
        %v4590 = vsel %vm4554, %v4241, %v4433
        %v4591 = vsel %vm4554, %v4243, %v4435
        %v4592 = vsel %vm4554, %v4245, %v4437
        %v4593 = vsel %vm4554, %v4247, %v4439
        %v4594 = vsel %vm4554, %v4249, %v4441
        %v4595 = vsel %vm4554, %v4251, %v4443
        %v4596 = vsel %vm4554, %v4253, %v4445
        %v4597 = vsel %vm4554, %v4255, %v4447
        %v4598 = vsel %vm4554, %v4257, %v4449
        %v4599 = vsel %vm4554, %v4259, %v4451
        %v4600 = vsel %vm4554, %v4261, %v4453
        %v4601 = vsel %vm4554, %v4263, %v4455
        %v4602 = vsel %vm4554, %v4265, %v4457
        %v4603 = vsel %vm4554, %v4267, %v4459
        %v4604 = vsel %vm4554, %v4269, %v4461
        %v4605 = vsel %vm4554, %v4271, %v4463
        %v4606 = vsel %vm4554, %v4273, %v4465
        %v4607 = vsel %vm4554, %v4275, %v4467
        %v4608 = vsel %vm4554, %v4277, %v4469
        %v4609 = vsel %vm4554, %v4279, %v4471
        %v4610 = vsel %vm4554, %v4281, %v4473
        %v4611 = vsel %vm4554, %v4283, %v4475
        %v4612 = vsel %vm4554, %v4285, %v4477
        %v4613 = vsel %vm4554, %v4287, %v4479
        %v4614 = vsel %vm4554, %v4289, %v4481
        %v4615 = vsel %vm4554, %v4291, %v4483
        %v4616 = vsel %vm4554, %v4293, %v4485
        %v4617 = vsel %vm4554, %v4295, %v4487
        %v4618 = vsel %vm4554, %v4297, %v4489
        %v4619 = vmul.f32 %v4042, %v4042
        %v4620 = vmul.f32 %v4043, %v4043
        %v4621 = vmul.f32 %v4044, %v4044
        %v4622 = vmul.f32 %v4045, %v4045
        %v4623 = vmul.f32 %v4046, %v4046
        %v4624 = vmul.f32 %v4047, %v4047
        %v4625 = vmul.f32 %v4048, %v4048
        %v4626 = vmul.f32 %v4049, %v4049
        %v4627 = vmul.f32 %v4050, %v4050
        %v4628 = vmul.f32 %v4051, %v4051
        %v4629 = vmul.f32 %v4052, %v4052
        %v4630 = vmul.f32 %v4053, %v4053
        %v4631 = vmul.f32 %v4054, %v4054
        %v4632 = vmul.f32 %v4055, %v4055
        %v4633 = vmul.f32 %v4056, %v4056
        %v4634 = vmul.f32 %v4057, %v4057
        %v4635 = vmul.f32 %v4058, %v4058
        %v4636 = vmul.f32 %v4059, %v4059
        %v4637 = vmul.f32 %v4060, %v4060
        %v4638 = vmul.f32 %v4061, %v4061
        %v4639 = vmul.f32 %v4062, %v4062
        %v4640 = vmul.f32 %v4063, %v4063
        %v4641 = vmul.f32 %v4064, %v4064
        %v4642 = vmul.f32 %v4065, %v4065
        %v4643 = vmul.f32 %v4066, %v4066
        %v4644 = vmul.f32 %v4067, %v4067
        %v4645 = vmul.f32 %v4068, %v4068
        %v4646 = vmul.f32 %v4069, %v4069
        %v4647 = vmul.f32 %v4070, %v4070
        %v4648 = vmul.f32 %v4071, %v4071
        %v4649 = vmul.f32 %v4072, %v4072
        %v4650 = vmul.f32 %v4073, %v4073
        %v4651 = vmul.f32 %v4074, %v4074
        %v4652 = vmul.f32 %v4075, %v4075
        %v4653 = vmul.f32 %v4076, %v4076
        %v4654 = vmul.f32 %v4077, %v4077
        %v4655 = vmul.f32 %v4078, %v4078
        %v4656 = vmul.f32 %v4079, %v4079
        %v4657 = vmul.f32 %v4080, %v4080
        %v4658 = vmul.f32 %v4081, %v4081
        %v4659 = vmul.f32 %v4082, %v4082
        %v4660 = vmul.f32 %v4083, %v4083
        %v4661 = vmul.f32 %v4084, %v4084
        %v4662 = vmul.f32 %v4085, %v4085
        %v4663 = vmul.f32 %v4086, %v4086
        %v4664 = vmul.f32 %v4087, %v4087
        %v4665 = vmul.f32 %v4088, %v4088
        %v4666 = vmul.f32 %v4089, %v4089
        %v4667 = vmul.f32 %v4090, %v4090
        %v4668 = vmul.f32 %v4091, %v4091
        %v4669 = vmul.f32 %v4092, %v4092
        %v4670 = vmul.f32 %v4093, %v4093
        %v4671 = vmul.f32 %v4094, %v4094
        %v4672 = vmul.f32 %v4095, %v4095
        %v4673 = vmul.f32 %v4096, %v4096
        %v4674 = vmul.f32 %v4097, %v4097
        %v4675 = vmul.f32 %v4098, %v4098
        %v4676 = vmul.f32 %v4099, %v4099
        %v4677 = vmul.f32 %v4100, %v4100
        %v4678 = vmul.f32 %v4101, %v4101
        %v4679 = vmul.f32 %v4102, %v4102
        %v4680 = vmul.f32 %v4103, %v4103
        %v4681 = vmul.f32 %v4104, %v4104
        %v4682 = vmul.f32 %v4105, %v4105
        %v4683 = vsel %vm907, %v4619, 0.0
        %v4684 = vsel %vm907, %v4620, 0.0
        %v4685 = vadd.f32 %v4683, %v4684
        %v4686 = vsel %vm907, %v4621, 0.0
        %v4687 = vadd.f32 %v4685, %v4686
        %v4688 = vsel %vm907, %v4622, 0.0
        %v4689 = vadd.f32 %v4687, %v4688
        %v4690 = vsel %vm907, %v4623, 0.0
        %v4691 = vadd.f32 %v4689, %v4690
        %v4692 = vsel %vm907, %v4624, 0.0
        %v4693 = vadd.f32 %v4691, %v4692
        %v4694 = vsel %vm907, %v4625, 0.0
        %v4695 = vadd.f32 %v4693, %v4694
        %v4696 = vsel %vm907, %v4626, 0.0
        %v4697 = vadd.f32 %v4695, %v4696
        %v4698 = vsel %vm907, %v4627, 0.0
        %v4699 = vadd.f32 %v4697, %v4698
        %v4700 = vsel %vm907, %v4628, 0.0
        %v4701 = vadd.f32 %v4699, %v4700
        %v4702 = vsel %vm907, %v4629, 0.0
        %v4703 = vadd.f32 %v4701, %v4702
        %v4704 = vsel %vm907, %v4630, 0.0
        %v4705 = vadd.f32 %v4703, %v4704
        %v4706 = vsel %vm907, %v4631, 0.0
        %v4707 = vadd.f32 %v4705, %v4706
        %v4708 = vsel %vm907, %v4632, 0.0
        %v4709 = vadd.f32 %v4707, %v4708
        %v4710 = vsel %vm907, %v4633, 0.0
        %v4711 = vadd.f32 %v4709, %v4710
        %v4712 = vsel %vm907, %v4634, 0.0
        %v4713 = vadd.f32 %v4711, %v4712
        %v4714 = vsel %vm907, %v4635, 0.0
        %v4715 = vadd.f32 %v4713, %v4714
        %v4716 = vsel %vm907, %v4636, 0.0
        %v4717 = vadd.f32 %v4715, %v4716
        %v4718 = vsel %vm907, %v4637, 0.0
        %v4719 = vadd.f32 %v4717, %v4718
        %v4720 = vsel %vm907, %v4638, 0.0
        %v4721 = vadd.f32 %v4719, %v4720
        %v4722 = vsel %vm907, %v4639, 0.0
        %v4723 = vadd.f32 %v4721, %v4722
        %v4724 = vsel %vm907, %v4640, 0.0
        %v4725 = vadd.f32 %v4723, %v4724
        %v4726 = vsel %vm907, %v4641, 0.0
        %v4727 = vadd.f32 %v4725, %v4726
        %v4728 = vsel %vm907, %v4642, 0.0
        %v4729 = vadd.f32 %v4727, %v4728
        %v4730 = vsel %vm907, %v4643, 0.0
        %v4731 = vadd.f32 %v4729, %v4730
        %v4732 = vsel %vm907, %v4644, 0.0
        %v4733 = vadd.f32 %v4731, %v4732
        %v4734 = vsel %vm907, %v4645, 0.0
        %v4735 = vadd.f32 %v4733, %v4734
        %v4736 = vsel %vm907, %v4646, 0.0
        %v4737 = vadd.f32 %v4735, %v4736
        %v4738 = vsel %vm907, %v4647, 0.0
        %v4739 = vadd.f32 %v4737, %v4738
        %v4740 = vsel %vm907, %v4648, 0.0
        %v4741 = vadd.f32 %v4739, %v4740
        %v4742 = vsel %vm907, %v4649, 0.0
        %v4743 = vadd.f32 %v4741, %v4742
        %v4744 = vsel %vm907, %v4650, 0.0
        %v4745 = vadd.f32 %v4743, %v4744
        %v4746 = vsel %vm907, %v4651, 0.0
        %v4747 = vadd.f32 %v4745, %v4746
        %v4748 = vsel %vm907, %v4652, 0.0
        %v4749 = vadd.f32 %v4747, %v4748
        %v4750 = vsel %vm907, %v4653, 0.0
        %v4751 = vadd.f32 %v4749, %v4750
        %v4752 = vsel %vm907, %v4654, 0.0
        %v4753 = vadd.f32 %v4751, %v4752
        %v4754 = vsel %vm907, %v4655, 0.0
        %v4755 = vadd.f32 %v4753, %v4754
        %v4756 = vsel %vm907, %v4656, 0.0
        %v4757 = vadd.f32 %v4755, %v4756
        %v4758 = vsel %vm907, %v4657, 0.0
        %v4759 = vadd.f32 %v4757, %v4758
        %v4760 = vsel %vm907, %v4658, 0.0
        %v4761 = vadd.f32 %v4759, %v4760
        %v4762 = vsel %vm907, %v4659, 0.0
        %v4763 = vadd.f32 %v4761, %v4762
        %v4764 = vsel %vm907, %v4660, 0.0
        %v4765 = vadd.f32 %v4763, %v4764
        %v4766 = vsel %vm907, %v4661, 0.0
        %v4767 = vadd.f32 %v4765, %v4766
        %v4768 = vsel %vm907, %v4662, 0.0
        %v4769 = vadd.f32 %v4767, %v4768
        %v4770 = vsel %vm907, %v4663, 0.0
        %v4771 = vadd.f32 %v4769, %v4770
        %v4772 = vsel %vm907, %v4664, 0.0
        %v4773 = vadd.f32 %v4771, %v4772
        %v4774 = vsel %vm907, %v4665, 0.0
        %v4775 = vadd.f32 %v4773, %v4774
        %v4776 = vsel %vm907, %v4666, 0.0
        %v4777 = vadd.f32 %v4775, %v4776
        %v4778 = vsel %vm907, %v4667, 0.0
        %v4779 = vadd.f32 %v4777, %v4778
        %v4780 = vsel %vm907, %v4668, 0.0
        %v4781 = vadd.f32 %v4779, %v4780
        %v4782 = vsel %vm907, %v4669, 0.0
        %v4783 = vadd.f32 %v4781, %v4782
        %v4784 = vsel %vm907, %v4670, 0.0
        %v4785 = vadd.f32 %v4783, %v4784
        %v4786 = vsel %vm907, %v4671, 0.0
        %v4787 = vadd.f32 %v4785, %v4786
        %v4788 = vsel %vm907, %v4672, 0.0
        %v4789 = vadd.f32 %v4787, %v4788
        %v4790 = vsel %vm907, %v4673, 0.0
        %v4791 = vadd.f32 %v4789, %v4790
        %v4792 = vsel %vm907, %v4674, 0.0
        %v4793 = vadd.f32 %v4791, %v4792
        %v4794 = vsel %vm907, %v4675, 0.0
        %v4795 = vadd.f32 %v4793, %v4794
        %v4796 = vsel %vm907, %v4676, 0.0
        %v4797 = vadd.f32 %v4795, %v4796
        %v4798 = vsel %vm907, %v4677, 0.0
        %v4799 = vadd.f32 %v4797, %v4798
        %v4800 = vsel %vm907, %v4678, 0.0
        %v4801 = vadd.f32 %v4799, %v4800
        %v4802 = vsel %vm907, %v4679, 0.0
        %v4803 = vadd.f32 %v4801, %v4802
        %v4804 = vsel %vm907, %v4680, 0.0
        %v4805 = vadd.f32 %v4803, %v4804
        %v4806 = vsel %vm907, %v4681, 0.0
        %v4807 = vadd.f32 %v4805, %v4806
        %v4808 = vsel %vm907, %v4682, 0.0
        %v4809 = vadd.f32 %v4807, %v4808
        %v4810 = vrot.slane %v4809, 4
        %v4811 = vadd.f32 %v4809, %v4810
        %v4812 = vrot.slane %v4811, 2
        %v4813 = vadd.f32 %v4811, %v4812
        %v4814 = vrot.slane %v4813, 1
        %v4815 = vadd.f32 %v4813, %v4814
        %v4816 = vmul.f32 %v4815, %v4040
        %v4817 = vadd.f32 %v4816, 1e-05
        %v4818 = vmul.f32 %v4042, %v4555
        %v4819 = vmul.f32 %v4043, %v4556
        %v4820 = vmul.f32 %v4044, %v4557
        %v4821 = vmul.f32 %v4045, %v4558
        %v4822 = vmul.f32 %v4046, %v4559
        %v4823 = vmul.f32 %v4047, %v4560
        %v4824 = vmul.f32 %v4048, %v4561
        %v4825 = vmul.f32 %v4049, %v4562
        %v4826 = vmul.f32 %v4050, %v4563
        %v4827 = vmul.f32 %v4051, %v4564
        %v4828 = vmul.f32 %v4052, %v4565
        %v4829 = vmul.f32 %v4053, %v4566
        %v4830 = vmul.f32 %v4054, %v4567
        %v4831 = vmul.f32 %v4055, %v4568
        %v4832 = vmul.f32 %v4056, %v4569
        %v4833 = vmul.f32 %v4057, %v4570
        %v4834 = vmul.f32 %v4058, %v4571
        %v4835 = vmul.f32 %v4059, %v4572
        %v4836 = vmul.f32 %v4060, %v4573
        %v4837 = vmul.f32 %v4061, %v4574
        %v4838 = vmul.f32 %v4062, %v4575
        %v4839 = vmul.f32 %v4063, %v4576
        %v4840 = vmul.f32 %v4064, %v4577
        %v4841 = vmul.f32 %v4065, %v4578
        %v4842 = vmul.f32 %v4066, %v4579
        %v4843 = vmul.f32 %v4067, %v4580
        %v4844 = vmul.f32 %v4068, %v4581
        %v4845 = vmul.f32 %v4069, %v4582
        %v4846 = vmul.f32 %v4070, %v4583
        %v4847 = vmul.f32 %v4071, %v4584
        %v4848 = vmul.f32 %v4072, %v4585
        %v4849 = vmul.f32 %v4073, %v4586
        %v4850 = vmul.f32 %v4074, %v4587
        %v4851 = vmul.f32 %v4075, %v4588
        %v4852 = vmul.f32 %v4076, %v4589
        %v4853 = vmul.f32 %v4077, %v4590
        %v4854 = vmul.f32 %v4078, %v4591
        %v4855 = vmul.f32 %v4079, %v4592
        %v4856 = vmul.f32 %v4080, %v4593
        %v4857 = vmul.f32 %v4081, %v4594
        %v4858 = vmul.f32 %v4082, %v4595
        %v4859 = vmul.f32 %v4083, %v4596
        %v4860 = vmul.f32 %v4084, %v4597
        %v4861 = vmul.f32 %v4085, %v4598
        %v4862 = vmul.f32 %v4086, %v4599
        %v4863 = vmul.f32 %v4087, %v4600
        %v4864 = vmul.f32 %v4088, %v4601
        %v4865 = vmul.f32 %v4089, %v4602
        %v4866 = vmul.f32 %v4090, %v4603
        %v4867 = vmul.f32 %v4091, %v4604
        %v4868 = vmul.f32 %v4092, %v4605
        %v4869 = vmul.f32 %v4093, %v4606
        %v4870 = vmul.f32 %v4094, %v4607
        %v4871 = vmul.f32 %v4095, %v4608
        %v4872 = vmul.f32 %v4096, %v4609
        %v4873 = vmul.f32 %v4097, %v4610
        %v4874 = vmul.f32 %v4098, %v4611
        %v4875 = vmul.f32 %v4099, %v4612
        %v4876 = vmul.f32 %v4100, %v4613
        %v4877 = vmul.f32 %v4101, %v4614
        %v4878 = vmul.f32 %v4102, %v4615
        %v4879 = vmul.f32 %v4103, %v4616
        %v4880 = vmul.f32 %v4104, %v4617
        %v4881 = vmul.f32 %v4105, %v4618
        %v4882 = vsel %vm907, %v4818, 0.0
        %v4883 = vsel %vm907, %v4819, 0.0
        %v4884 = vadd.f32 %v4882, %v4883
        %v4885 = vsel %vm907, %v4820, 0.0
        %v4886 = vadd.f32 %v4884, %v4885
        %v4887 = vsel %vm907, %v4821, 0.0
        %v4888 = vadd.f32 %v4886, %v4887
        %v4889 = vsel %vm907, %v4822, 0.0
        %v4890 = vadd.f32 %v4888, %v4889
        %v4891 = vsel %vm907, %v4823, 0.0
        %v4892 = vadd.f32 %v4890, %v4891
        %v4893 = vsel %vm907, %v4824, 0.0
        %v4894 = vadd.f32 %v4892, %v4893
        %v4895 = vsel %vm907, %v4825, 0.0
        %v4896 = vadd.f32 %v4894, %v4895
        %v4897 = vsel %vm907, %v4826, 0.0
        %v4898 = vadd.f32 %v4896, %v4897
        %v4899 = vsel %vm907, %v4827, 0.0
        %v4900 = vadd.f32 %v4898, %v4899
        %v4901 = vsel %vm907, %v4828, 0.0
        %v4902 = vadd.f32 %v4900, %v4901
        %v4903 = vsel %vm907, %v4829, 0.0
        %v4904 = vadd.f32 %v4902, %v4903
        %v4905 = vsel %vm907, %v4830, 0.0
        %v4906 = vadd.f32 %v4904, %v4905
        %v4907 = vsel %vm907, %v4831, 0.0
        %v4908 = vadd.f32 %v4906, %v4907
        %v4909 = vsel %vm907, %v4832, 0.0
        %v4910 = vadd.f32 %v4908, %v4909
        %v4911 = vsel %vm907, %v4833, 0.0
        %v4912 = vadd.f32 %v4910, %v4911
        %v4913 = vsel %vm907, %v4834, 0.0
        %v4914 = vadd.f32 %v4912, %v4913
        %v4915 = vsel %vm907, %v4835, 0.0
        %v4916 = vadd.f32 %v4914, %v4915
        %v4917 = vsel %vm907, %v4836, 0.0
        %v4918 = vadd.f32 %v4916, %v4917
        %v4919 = vsel %vm907, %v4837, 0.0
        %v4920 = vadd.f32 %v4918, %v4919
        %v4921 = vsel %vm907, %v4838, 0.0
        %v4922 = vadd.f32 %v4920, %v4921
        %v4923 = vsel %vm907, %v4839, 0.0
        %v4924 = vadd.f32 %v4922, %v4923
        %v4925 = vsel %vm907, %v4840, 0.0
        %v4926 = vadd.f32 %v4924, %v4925
        %v4927 = vsel %vm907, %v4841, 0.0
        %v4928 = vadd.f32 %v4926, %v4927
        %v4929 = vsel %vm907, %v4842, 0.0
        %v4930 = vadd.f32 %v4928, %v4929
        %v4931 = vsel %vm907, %v4843, 0.0
        %v4932 = vadd.f32 %v4930, %v4931
        %v4933 = vsel %vm907, %v4844, 0.0
        %v4934 = vadd.f32 %v4932, %v4933
        %v4935 = vsel %vm907, %v4845, 0.0
        %v4936 = vadd.f32 %v4934, %v4935
        %v4937 = vsel %vm907, %v4846, 0.0
        %v4938 = vadd.f32 %v4936, %v4937
        %v4939 = vsel %vm907, %v4847, 0.0
        %v4940 = vadd.f32 %v4938, %v4939
        %v4941 = vsel %vm907, %v4848, 0.0
        %v4942 = vadd.f32 %v4940, %v4941
        %v4943 = vsel %vm907, %v4849, 0.0
        %v4944 = vadd.f32 %v4942, %v4943
        %v4945 = vsel %vm907, %v4850, 0.0
        %v4946 = vadd.f32 %v4944, %v4945
        %v4947 = vsel %vm907, %v4851, 0.0
        %v4948 = vadd.f32 %v4946, %v4947
        %v4949 = vsel %vm907, %v4852, 0.0
        %v4950 = vadd.f32 %v4948, %v4949
        %v4951 = vsel %vm907, %v4853, 0.0
        %v4952 = vadd.f32 %v4950, %v4951
        %v4953 = vsel %vm907, %v4854, 0.0
        %v4954 = vadd.f32 %v4952, %v4953
        %v4955 = vsel %vm907, %v4855, 0.0
        %v4956 = vadd.f32 %v4954, %v4955
        %v4957 = vsel %vm907, %v4856, 0.0
        %v4958 = vadd.f32 %v4956, %v4957
        %v4959 = vsel %vm907, %v4857, 0.0
        %v4960 = vadd.f32 %v4958, %v4959
        %v4961 = vsel %vm907, %v4858, 0.0
        %v4962 = vadd.f32 %v4960, %v4961
        %v4963 = vsel %vm907, %v4859, 0.0
        %v4964 = vadd.f32 %v4962, %v4963
        %v4965 = vsel %vm907, %v4860, 0.0
        %v4966 = vadd.f32 %v4964, %v4965
        %v4967 = vsel %vm907, %v4861, 0.0
        %v4968 = vadd.f32 %v4966, %v4967
        %v4969 = vsel %vm907, %v4862, 0.0
        %v4970 = vadd.f32 %v4968, %v4969
        %v4971 = vsel %vm907, %v4863, 0.0
        %v4972 = vadd.f32 %v4970, %v4971
        %v4973 = vsel %vm907, %v4864, 0.0
        %v4974 = vadd.f32 %v4972, %v4973
        %v4975 = vsel %vm907, %v4865, 0.0
        %v4976 = vadd.f32 %v4974, %v4975
        %v4977 = vsel %vm907, %v4866, 0.0
        %v4978 = vadd.f32 %v4976, %v4977
        %v4979 = vsel %vm907, %v4867, 0.0
        %v4980 = vadd.f32 %v4978, %v4979
        %v4981 = vsel %vm907, %v4868, 0.0
        %v4982 = vadd.f32 %v4980, %v4981
        %v4983 = vsel %vm907, %v4869, 0.0
        %v4984 = vadd.f32 %v4982, %v4983
        %v4985 = vsel %vm907, %v4870, 0.0
        %v4986 = vadd.f32 %v4984, %v4985
        %v4987 = vsel %vm907, %v4871, 0.0
        %v4988 = vadd.f32 %v4986, %v4987
        %v4989 = vsel %vm907, %v4872, 0.0
        %v4990 = vadd.f32 %v4988, %v4989
        %v4991 = vsel %vm907, %v4873, 0.0
        %v4992 = vadd.f32 %v4990, %v4991
        %v4993 = vsel %vm907, %v4874, 0.0
        %v4994 = vadd.f32 %v4992, %v4993
        %v4995 = vsel %vm907, %v4875, 0.0
        %v4996 = vadd.f32 %v4994, %v4995
        %v4997 = vsel %vm907, %v4876, 0.0
        %v4998 = vadd.f32 %v4996, %v4997
        %v4999 = vsel %vm907, %v4877, 0.0
        %v5000 = vadd.f32 %v4998, %v4999
        %v5001 = vsel %vm907, %v4878, 0.0
        %v5002 = vadd.f32 %v5000, %v5001
        %v5003 = vsel %vm907, %v4879, 0.0
        %v5004 = vadd.f32 %v5002, %v5003
        %v5005 = vsel %vm907, %v4880, 0.0
        %v5006 = vadd.f32 %v5004, %v5005
        %v5007 = vsel %vm907, %v4881, 0.0
        %v5008 = vadd.f32 %v5006, %v5007
        %v5009 = vrot.slane %v5008, 4
        %v5010 = vadd.f32 %v5008, %v5009
        %v5011 = vrot.slane %v5010, 2
        %v5012 = vadd.f32 %v5010, %v5011
        %v5013 = vrot.slane %v5012, 1
        %v5014 = vadd.f32 %v5012, %v5013
        %v5015 = vmul.f32 %v5014, %v4040
        %5017 = vrot.lane.b32.xlu0 %v4817, 96
        %v5018 = vpop.permute.xlu0 %5017
        %5020 = vrot.lane.b32.xlu0 %v4817, 32
        %v5021 = vpop.permute.xlu0 %5020
        %v5023 = vsel %vm4554, %v5018, %v5021
        %v5024 = vmul.f32 %v4817, %v5023
        %v5025 = vmul.f32 %v5015, %v5015
        %v5026 = vsub.f32 %v5024, %v5025
        %v5027 = vrsqrt.pop %v5026
        %v5028 = vmul.f32 %v5026, %v5027
        %vm5029 = vcmp.eq.f32.partialorder %v5026, inf
        %v5030 = vsel %vm5029, %v5026, %v5028
        %vm5031 = vcmp.eq.f32.partialorder %v5026, 0.0
        %v5032 = vand.u32 %v5026, 2147483648
        %v5033 = vsel %vm5031, %v5032, %v5030
        %v5034 = vadd.f32 %v4817, %v5023
        %v5035 = vmul.f32 %v5033, 2.0
        %v5036 = vadd.f32 %v5034, %v5035
        %v5037 = vrsqrt.pop %v5036
        %v5038 = vmul.f32 %v5036, %v5037
        %vm5039 = vcmp.eq.f32.partialorder %v5036, inf
        %v5040 = vsel %vm5039, %v5036, %v5038
        %vm5041 = vcmp.eq.f32.partialorder %v5036, 0.0
        %v5042 = vand.u32 %v5036, 2147483648
        %v5043 = vsel %vm5041, %v5042, %v5040
        %v5044 = vmul.f32 %v5033, %v5043
        %v5045 = vrcp.pop %v5044
        %v5046 = vmul.f32 1.0, %v5045
        %v5047 = vadd.f32 %v5023, %v5033
        %v5048 = vmul.f32 %v5047, %v5046
        %v5049 = vsub.f32 0.0, %v5015
        %v5050 = vmul.f32 %v5049, %v5046
        %v5051 = vld [vmem:[%s213] sm:$0x7]
        %v5052 = vmul.f32 %v5051, %v5048
        %v5054 = vrot.slane %v5050, 7
        %v5056 = vmul.f32 %v5051, %v5054
        %v5058 = vrot.slane %v5056, 1
        %v5060 = vadd.f32 %v5052, %v5058
        %v5061 = vmul.f32 %v5051, %v5050
        %5063 = vrot.lane.b32.xlu0 %v5048, 96
        %v5064 = vpop.permute.xlu0 %5063
        %5066 = vrot.lane.b32.xlu0 %v5048, 32
        %v5067 = vpop.permute.xlu0 %5066
        %v5069 = vsel %vm4554, %v5064, %v5067
        %v5071 = vrot.slane %v5069, 7
        %v5073 = vmul.f32 %v5051, %v5071
        %v5075 = vrot.slane %v5073, 1
        %v5077 = vadd.f32 %v5061, %v5075
        %v5078 = vlaneseq
        %v5079 = vshrl.u32 %v5078, 7
        %v5080 = vsub.s32 0, %v5079
        %v5081 = vrot.slane %v5060, %v5080
        %v5082 = vmul.f32 %v5081, %v4042
        %v5083 = vmul.f32 %v5081, %v4043
        %v5084 = vmul.f32 %v5081, %v4044
        %v5085 = vmul.f32 %v5081, %v4045
        %v5086 = vmul.f32 %v5081, %v4046
        %v5087 = vmul.f32 %v5081, %v4047
        %v5088 = vmul.f32 %v5081, %v4048
        %v5089 = vmul.f32 %v5081, %v4049
        %v5090 = vmul.f32 %v5081, %v4050
        %v5091 = vmul.f32 %v5081, %v4051
        %v5092 = vmul.f32 %v5081, %v4052
        %v5093 = vmul.f32 %v5081, %v4053
        %v5094 = vmul.f32 %v5081, %v4054
        %v5095 = vmul.f32 %v5081, %v4055
        %v5096 = vmul.f32 %v5081, %v4056
        %v5097 = vmul.f32 %v5081, %v4057
        %v5098 = vmul.f32 %v5081, %v4058
        %v5099 = vmul.f32 %v5081, %v4059
        %v5100 = vmul.f32 %v5081, %v4060
        %v5101 = vmul.f32 %v5081, %v4061
        %v5102 = vmul.f32 %v5081, %v4062
        %v5103 = vmul.f32 %v5081, %v4063
        %v5104 = vmul.f32 %v5081, %v4064
        %v5105 = vmul.f32 %v5081, %v4065
        %v5106 = vmul.f32 %v5081, %v4066
        %v5107 = vmul.f32 %v5081, %v4067
        %v5108 = vmul.f32 %v5081, %v4068
        %v5109 = vmul.f32 %v5081, %v4069
        %v5110 = vmul.f32 %v5081, %v4070
        %v5111 = vmul.f32 %v5081, %v4071
        %v5112 = vmul.f32 %v5081, %v4072
        %v5113 = vmul.f32 %v5081, %v4073
        %v5114 = vmul.f32 %v5081, %v4074
        %v5115 = vmul.f32 %v5081, %v4075
        %v5116 = vmul.f32 %v5081, %v4076
        %v5117 = vmul.f32 %v5081, %v4077
        %v5118 = vmul.f32 %v5081, %v4078
        %v5119 = vmul.f32 %v5081, %v4079
        %v5120 = vmul.f32 %v5081, %v4080
        %v5121 = vmul.f32 %v5081, %v4081
        %v5122 = vmul.f32 %v5081, %v4082
        %v5123 = vmul.f32 %v5081, %v4083
        %v5124 = vmul.f32 %v5081, %v4084
        %v5125 = vmul.f32 %v5081, %v4085
        %v5126 = vmul.f32 %v5081, %v4086
        %v5127 = vmul.f32 %v5081, %v4087
        %v5128 = vmul.f32 %v5081, %v4088
        %v5129 = vmul.f32 %v5081, %v4089
        %v5130 = vmul.f32 %v5081, %v4090
        %v5131 = vmul.f32 %v5081, %v4091
        %v5132 = vmul.f32 %v5081, %v4092
        %v5133 = vmul.f32 %v5081, %v4093
        %v5134 = vmul.f32 %v5081, %v4094
        %v5135 = vmul.f32 %v5081, %v4095
        %v5136 = vmul.f32 %v5081, %v4096
        %v5137 = vmul.f32 %v5081, %v4097
        %v5138 = vmul.f32 %v5081, %v4098
        %v5139 = vmul.f32 %v5081, %v4099
        %v5140 = vmul.f32 %v5081, %v4100
        %v5141 = vmul.f32 %v5081, %v4101
        %v5142 = vmul.f32 %v5081, %v4102
        %v5143 = vmul.f32 %v5081, %v4103
        %v5144 = vmul.f32 %v5081, %v4104
        %v5145 = vmul.f32 %v5081, %v4105
        %v5146 = vlaneseq
        %v5147 = vshrl.u32 %v5146, 7
        %v5148 = vsub.s32 0, %v5147
        %v5149 = vrot.slane %v5077, %v5148
        %v5150 = vmul.f32 %v5149, %v4555
        %v5151 = vmul.f32 %v5149, %v4556
        %v5152 = vmul.f32 %v5149, %v4557
        %v5153 = vmul.f32 %v5149, %v4558
        %v5154 = vmul.f32 %v5149, %v4559
        %v5155 = vmul.f32 %v5149, %v4560
        %v5156 = vmul.f32 %v5149, %v4561
        %v5157 = vmul.f32 %v5149, %v4562
        %v5158 = vmul.f32 %v5149, %v4563
        %v5159 = vmul.f32 %v5149, %v4564
        %v5160 = vmul.f32 %v5149, %v4565
        %v5161 = vmul.f32 %v5149, %v4566
        %v5162 = vmul.f32 %v5149, %v4567
        %v5163 = vmul.f32 %v5149, %v4568
        %v5164 = vmul.f32 %v5149, %v4569
        %v5165 = vmul.f32 %v5149, %v4570
        %v5166 = vmul.f32 %v5149, %v4571
        %v5167 = vmul.f32 %v5149, %v4572
        %v5168 = vmul.f32 %v5149, %v4573
        %v5169 = vmul.f32 %v5149, %v4574
        %v5170 = vmul.f32 %v5149, %v4575
        %v5171 = vmul.f32 %v5149, %v4576
        %v5172 = vmul.f32 %v5149, %v4577
        %v5173 = vmul.f32 %v5149, %v4578
        %v5174 = vmul.f32 %v5149, %v4579
        %v5175 = vmul.f32 %v5149, %v4580
        %v5176 = vmul.f32 %v5149, %v4581
        %v5177 = vmul.f32 %v5149, %v4582
        %v5178 = vmul.f32 %v5149, %v4583
        %v5179 = vmul.f32 %v5149, %v4584
        %v5180 = vmul.f32 %v5149, %v4585
        %v5181 = vmul.f32 %v5149, %v4586
        %v5182 = vmul.f32 %v5149, %v4587
        %v5183 = vmul.f32 %v5149, %v4588
        %v5184 = vmul.f32 %v5149, %v4589
        %v5185 = vmul.f32 %v5149, %v4590
        %v5186 = vmul.f32 %v5149, %v4591
        %v5187 = vmul.f32 %v5149, %v4592
        %v5188 = vmul.f32 %v5149, %v4593
        %v5189 = vmul.f32 %v5149, %v4594
        %v5190 = vmul.f32 %v5149, %v4595
        %v5191 = vmul.f32 %v5149, %v4596
        %v5192 = vmul.f32 %v5149, %v4597
        %v5193 = vmul.f32 %v5149, %v4598
        %v5194 = vmul.f32 %v5149, %v4599
        %v5195 = vmul.f32 %v5149, %v4600
        %v5196 = vmul.f32 %v5149, %v4601
        %v5197 = vmul.f32 %v5149, %v4602
        %v5198 = vmul.f32 %v5149, %v4603
        %v5199 = vmul.f32 %v5149, %v4604
        %v5200 = vmul.f32 %v5149, %v4605
        %v5201 = vmul.f32 %v5149, %v4606
        %v5202 = vmul.f32 %v5149, %v4607
        %v5203 = vmul.f32 %v5149, %v4608
        %v5204 = vmul.f32 %v5149, %v4609
        %v5205 = vmul.f32 %v5149, %v4610
        %v5206 = vmul.f32 %v5149, %v4611
        %v5207 = vmul.f32 %v5149, %v4612
        %v5208 = vmul.f32 %v5149, %v4613
        %v5209 = vmul.f32 %v5149, %v4614
        %v5210 = vmul.f32 %v5149, %v4615
        %v5211 = vmul.f32 %v5149, %v4616
        %v5212 = vmul.f32 %v5149, %v4617
        %v5213 = vmul.f32 %v5149, %v4618
        %v5214 = vadd.f32 %v5082, %v5150
        %v5215 = vadd.f32 %v5083, %v5151
        %v5216 = vadd.f32 %v5084, %v5152
        %v5217 = vadd.f32 %v5085, %v5153
        %v5218 = vadd.f32 %v5086, %v5154
        %v5219 = vadd.f32 %v5087, %v5155
        %v5220 = vadd.f32 %v5088, %v5156
        %v5221 = vadd.f32 %v5089, %v5157
        %v5222 = vadd.f32 %v5090, %v5158
        %v5223 = vadd.f32 %v5091, %v5159
        %v5224 = vadd.f32 %v5092, %v5160
        %v5225 = vadd.f32 %v5093, %v5161
        %v5226 = vadd.f32 %v5094, %v5162
        %v5227 = vadd.f32 %v5095, %v5163
        %v5228 = vadd.f32 %v5096, %v5164
        %v5229 = vadd.f32 %v5097, %v5165
        %v5230 = vadd.f32 %v5098, %v5166
        %v5231 = vadd.f32 %v5099, %v5167
        %v5232 = vadd.f32 %v5100, %v5168
        %v5233 = vadd.f32 %v5101, %v5169
        %v5234 = vadd.f32 %v5102, %v5170
        %v5235 = vadd.f32 %v5103, %v5171
        %v5236 = vadd.f32 %v5104, %v5172
        %v5237 = vadd.f32 %v5105, %v5173
        %v5238 = vadd.f32 %v5106, %v5174
        %v5239 = vadd.f32 %v5107, %v5175
        %v5240 = vadd.f32 %v5108, %v5176
        %v5241 = vadd.f32 %v5109, %v5177
        %v5242 = vadd.f32 %v5110, %v5178
        %v5243 = vadd.f32 %v5111, %v5179
        %v5244 = vadd.f32 %v5112, %v5180
        %v5245 = vadd.f32 %v5113, %v5181
        %v5246 = vadd.f32 %v5114, %v5182
        %v5247 = vadd.f32 %v5115, %v5183
        %v5248 = vadd.f32 %v5116, %v5184
        %v5249 = vadd.f32 %v5117, %v5185
        %v5250 = vadd.f32 %v5118, %v5186
        %v5251 = vadd.f32 %v5119, %v5187
        %v5252 = vadd.f32 %v5120, %v5188
        %v5253 = vadd.f32 %v5121, %v5189
        %v5254 = vadd.f32 %v5122, %v5190
        %v5255 = vadd.f32 %v5123, %v5191
        %v5256 = vadd.f32 %v5124, %v5192
        %v5257 = vadd.f32 %v5125, %v5193
        %v5258 = vadd.f32 %v5126, %v5194
        %v5259 = vadd.f32 %v5127, %v5195
        %v5260 = vadd.f32 %v5128, %v5196
        %v5261 = vadd.f32 %v5129, %v5197
        %v5262 = vadd.f32 %v5130, %v5198
        %v5263 = vadd.f32 %v5131, %v5199
        %v5264 = vadd.f32 %v5132, %v5200
        %v5265 = vadd.f32 %v5133, %v5201
        %v5266 = vadd.f32 %v5134, %v5202
        %v5267 = vadd.f32 %v5135, %v5203
        %v5268 = vadd.f32 %v5136, %v5204
        %v5269 = vadd.f32 %v5137, %v5205
        %v5270 = vadd.f32 %v5138, %v5206
        %v5271 = vadd.f32 %v5139, %v5207
        %v5272 = vadd.f32 %v5140, %v5208
        %v5273 = vadd.f32 %v5141, %v5209
        %v5274 = vadd.f32 %v5142, %v5210
        %v5275 = vadd.f32 %v5143, %v5211
        %v5276 = vadd.f32 %v5144, %v5212
        %v5277 = vadd.f32 %v5145, %v5213
        %v5278 = vlaneseq
        %v5279 = vshrl.u32 %v5278, 7
        %v5280 = vsub.s32 2, %v5279
        %v5281 = vrot.slane %v5051, %v5280
        %v5282 = vadd.f32 %v5214, %v5281
        %v5283 = vadd.f32 %v5215, %v5281
        %v5284 = vadd.f32 %v5216, %v5281
        %v5285 = vadd.f32 %v5217, %v5281
        %v5286 = vadd.f32 %v5218, %v5281
        %v5287 = vadd.f32 %v5219, %v5281
        %v5288 = vadd.f32 %v5220, %v5281
        %v5289 = vadd.f32 %v5221, %v5281
        %v5290 = vadd.f32 %v5222, %v5281
        %v5291 = vadd.f32 %v5223, %v5281
        %v5292 = vadd.f32 %v5224, %v5281
        %v5293 = vadd.f32 %v5225, %v5281
        %v5294 = vadd.f32 %v5226, %v5281
        %v5295 = vadd.f32 %v5227, %v5281
        %v5296 = vadd.f32 %v5228, %v5281
        %v5297 = vadd.f32 %v5229, %v5281
        %v5298 = vadd.f32 %v5230, %v5281
        %v5299 = vadd.f32 %v5231, %v5281
        %v5300 = vadd.f32 %v5232, %v5281
        %v5301 = vadd.f32 %v5233, %v5281
        %v5302 = vadd.f32 %v5234, %v5281
        %v5303 = vadd.f32 %v5235, %v5281
        %v5304 = vadd.f32 %v5236, %v5281
        %v5305 = vadd.f32 %v5237, %v5281
        %v5306 = vadd.f32 %v5238, %v5281
        %v5307 = vadd.f32 %v5239, %v5281
        %v5308 = vadd.f32 %v5240, %v5281
        %v5309 = vadd.f32 %v5241, %v5281
        %v5310 = vadd.f32 %v5242, %v5281
        %v5311 = vadd.f32 %v5243, %v5281
        %v5312 = vadd.f32 %v5244, %v5281
        %v5313 = vadd.f32 %v5245, %v5281
        %v5314 = vadd.f32 %v5246, %v5281
        %v5315 = vadd.f32 %v5247, %v5281
        %v5316 = vadd.f32 %v5248, %v5281
        %v5317 = vadd.f32 %v5249, %v5281
        %v5318 = vadd.f32 %v5250, %v5281
        %v5319 = vadd.f32 %v5251, %v5281
        %v5320 = vadd.f32 %v5252, %v5281
        %v5321 = vadd.f32 %v5253, %v5281
        %v5322 = vadd.f32 %v5254, %v5281
        %v5323 = vadd.f32 %v5255, %v5281
        %v5324 = vadd.f32 %v5256, %v5281
        %v5325 = vadd.f32 %v5257, %v5281
        %v5326 = vadd.f32 %v5258, %v5281
        %v5327 = vadd.f32 %v5259, %v5281
        %v5328 = vadd.f32 %v5260, %v5281
        %v5329 = vadd.f32 %v5261, %v5281
        %v5330 = vadd.f32 %v5262, %v5281
        %v5331 = vadd.f32 %v5263, %v5281
        %v5332 = vadd.f32 %v5264, %v5281
        %v5333 = vadd.f32 %v5265, %v5281
        %v5334 = vadd.f32 %v5266, %v5281
        %v5335 = vadd.f32 %v5267, %v5281
        %v5336 = vadd.f32 %v5268, %v5281
        %v5337 = vadd.f32 %v5269, %v5281
        %v5338 = vadd.f32 %v5270, %v5281
        %v5339 = vadd.f32 %v5271, %v5281
        %v5340 = vadd.f32 %v5272, %v5281
        %v5341 = vadd.f32 %v5273, %v5281
        %v5342 = vadd.f32 %v5274, %v5281
        %v5343 = vadd.f32 %v5275, %v5281
        %v5344 = vadd.f32 %v5276, %v5281
        %v5345 = vadd.f32 %v5277, %v5281
        %v5346 = vmax.f32 %v5282, 0.0
        %v5347 = vmax.f32 %v5283, 0.0
        %v5348 = vmax.f32 %v5284, 0.0
        %v5349 = vmax.f32 %v5285, 0.0
        %v5350 = vmax.f32 %v5286, 0.0
        %v5351 = vmax.f32 %v5287, 0.0
        %v5352 = vmax.f32 %v5288, 0.0
        %v5353 = vmax.f32 %v5289, 0.0
        %v5354 = vmax.f32 %v5290, 0.0
        %v5355 = vmax.f32 %v5291, 0.0
        %v5356 = vmax.f32 %v5292, 0.0
        %v5357 = vmax.f32 %v5293, 0.0
        %v5358 = vmax.f32 %v5294, 0.0
        %v5359 = vmax.f32 %v5295, 0.0
        %v5360 = vmax.f32 %v5296, 0.0
        %v5361 = vmax.f32 %v5297, 0.0
        %v5362 = vmax.f32 %v5298, 0.0
        %v5363 = vmax.f32 %v5299, 0.0
        %v5364 = vmax.f32 %v5300, 0.0
        %v5365 = vmax.f32 %v5301, 0.0
        %v5366 = vmax.f32 %v5302, 0.0
        %v5367 = vmax.f32 %v5303, 0.0
        %v5368 = vmax.f32 %v5304, 0.0
        %v5369 = vmax.f32 %v5305, 0.0
        %v5370 = vmax.f32 %v5306, 0.0
        %v5371 = vmax.f32 %v5307, 0.0
        %v5372 = vmax.f32 %v5308, 0.0
        %v5373 = vmax.f32 %v5309, 0.0
        %v5374 = vmax.f32 %v5310, 0.0
        %v5375 = vmax.f32 %v5311, 0.0
        %v5376 = vmax.f32 %v5312, 0.0
        %v5377 = vmax.f32 %v5313, 0.0
        %v5378 = vmax.f32 %v5314, 0.0
        %v5379 = vmax.f32 %v5315, 0.0
        %v5380 = vmax.f32 %v5316, 0.0
        %v5381 = vmax.f32 %v5317, 0.0
        %v5382 = vmax.f32 %v5318, 0.0
        %v5383 = vmax.f32 %v5319, 0.0
        %v5384 = vmax.f32 %v5320, 0.0
        %v5385 = vmax.f32 %v5321, 0.0
        %v5386 = vmax.f32 %v5322, 0.0
        %v5387 = vmax.f32 %v5323, 0.0
        %v5388 = vmax.f32 %v5324, 0.0
        %v5389 = vmax.f32 %v5325, 0.0
        %v5390 = vmax.f32 %v5326, 0.0
        %v5391 = vmax.f32 %v5327, 0.0
        %v5392 = vmax.f32 %v5328, 0.0
        %v5393 = vmax.f32 %v5329, 0.0
        %v5394 = vmax.f32 %v5330, 0.0
        %v5395 = vmax.f32 %v5331, 0.0
        %v5396 = vmax.f32 %v5332, 0.0
        %v5397 = vmax.f32 %v5333, 0.0
        %v5398 = vmax.f32 %v5334, 0.0
        %v5399 = vmax.f32 %v5335, 0.0
        %v5400 = vmax.f32 %v5336, 0.0
        %v5401 = vmax.f32 %v5337, 0.0
        %v5402 = vmax.f32 %v5338, 0.0
        %v5403 = vmax.f32 %v5339, 0.0
        %v5404 = vmax.f32 %v5340, 0.0
        %v5405 = vmax.f32 %v5341, 0.0
        %v5406 = vmax.f32 %v5342, 0.0
        %v5407 = vmax.f32 %v5343, 0.0
        %v5408 = vmax.f32 %v5344, 0.0
        %v5409 = vmax.f32 %v5345, 0.0
        %5410 = vst.msk [vmem:[%s1060 + $0x1] sm:$0xff] %vm907, %v5346
        %5411 = vst.msk [vmem:[%s1060 + $0x9] sm:$0xff] %vm907, %v5347
        %5412 = vst.msk [vmem:[%s1060 + $0x19] sm:$0xff] %vm907, %v5348
        %5413 = vst.msk [vmem:[%s1060 + $0x21] sm:$0xff] %vm907, %v5349
        %5414 = vst.msk [vmem:[%s1060 + $0x31] sm:$0xff] %vm907, %v5350
        %5415 = vst.msk [vmem:[%s1060 + $0x39] sm:$0xff] %vm907, %v5351
        %5416 = vst.msk [vmem:[%s1060 + $0x49] sm:$0xff] %vm907, %v5352
        %5417 = vst.msk [vmem:[%s1060 + $0x51] sm:$0xff] %vm907, %v5353
        %5418 = vst.msk [vmem:[%s1060 + $0x61] sm:$0xff] %vm907, %v5354
        %5419 = vst.msk [vmem:[%s1060 + $0x69] sm:$0xff] %vm907, %v5355
        %5420 = vst.msk [vmem:[%s1060 + $0x79] sm:$0xff] %vm907, %v5356
        %5421 = vst.msk [vmem:[%s1060 + $0x81] sm:$0xff] %vm907, %v5357
        %5422 = vst.msk [vmem:[%s1060 + $0x91] sm:$0xff] %vm907, %v5358
        %5423 = vst.msk [vmem:[%s1060 + $0x99] sm:$0xff] %vm907, %v5359
        %5424 = vst.msk [vmem:[%s1060 + $0xa9] sm:$0xff] %vm907, %v5360
        %5425 = vst.msk [vmem:[%s1060 + $0xb1] sm:$0xff] %vm907, %v5361
        %5426 = vst.msk [vmem:[%s1060 + $0xc1] sm:$0xff] %vm907, %v5362
        %5427 = vst.msk [vmem:[%s1060 + $0xc9] sm:$0xff] %vm907, %v5363
        %5428 = vst.msk [vmem:[%s1060 + $0xd9] sm:$0xff] %vm907, %v5364
        %5429 = vst.msk [vmem:[%s1060 + $0xe1] sm:$0xff] %vm907, %v5365
        %5430 = vst.msk [vmem:[%s1060 + $0xf1] sm:$0xff] %vm907, %v5366
        %5431 = vst.msk [vmem:[%s1060 + $0xf9] sm:$0xff] %vm907, %v5367
        %5432 = vst.msk [vmem:[%s1060 + $0x109] sm:$0xff] %vm907, %v5368
        %5433 = vst.msk [vmem:[%s1060 + $0x111] sm:$0xff] %vm907, %v5369
        %5434 = vst.msk [vmem:[%s1060 + $0x121] sm:$0xff] %vm907, %v5370
        %5435 = vst.msk [vmem:[%s1060 + $0x129] sm:$0xff] %vm907, %v5371
        %5436 = vst.msk [vmem:[%s1060 + $0x139] sm:$0xff] %vm907, %v5372
        %5437 = vst.msk [vmem:[%s1060 + $0x141] sm:$0xff] %vm907, %v5373
        %5438 = vst.msk [vmem:[%s1060 + $0x151] sm:$0xff] %vm907, %v5374
        %5439 = vst.msk [vmem:[%s1060 + $0x159] sm:$0xff] %vm907, %v5375
        %5440 = vst.msk [vmem:[%s1060 + $0x169] sm:$0xff] %vm907, %v5376
        %5441 = vst.msk [vmem:[%s1060 + $0x171] sm:$0xff] %vm907, %v5377
        %5442 = vst.msk [vmem:[%s1060 + $0x1b1] sm:$0xff] %vm907, %v5378
        %5443 = vst.msk [vmem:[%s1060 + $0x1b9] sm:$0xff] %vm907, %v5379
        %5444 = vst.msk [vmem:[%s1060 + $0x1c9] sm:$0xff] %vm907, %v5380
        %5445 = vst.msk [vmem:[%s1060 + $0x1d1] sm:$0xff] %vm907, %v5381
        %5446 = vst.msk [vmem:[%s1060 + $0x1e1] sm:$0xff] %vm907, %v5382
        %5447 = vst.msk [vmem:[%s1060 + $0x1e9] sm:$0xff] %vm907, %v5383
        %5448 = vst.msk [vmem:[%s1060 + $0x1f9] sm:$0xff] %vm907, %v5384
        %5449 = vst.msk [vmem:[%s1060 + $0x201] sm:$0xff] %vm907, %v5385
        %5450 = vst.msk [vmem:[%s1060 + $0x211] sm:$0xff] %vm907, %v5386
        %5451 = vst.msk [vmem:[%s1060 + $0x219] sm:$0xff] %vm907, %v5387
        %5452 = vst.msk [vmem:[%s1060 + $0x229] sm:$0xff] %vm907, %v5388
        %5453 = vst.msk [vmem:[%s1060 + $0x231] sm:$0xff] %vm907, %v5389
        %5454 = vst.msk [vmem:[%s1060 + $0x241] sm:$0xff] %vm907, %v5390
        %5455 = vst.msk [vmem:[%s1060 + $0x249] sm:$0xff] %vm907, %v5391
        %5456 = vst.msk [vmem:[%s1060 + $0x259] sm:$0xff] %vm907, %v5392
        %5457 = vst.msk [vmem:[%s1060 + $0x261] sm:$0xff] %vm907, %v5393
        %5458 = vst.msk [vmem:[%s1060 + $0x271] sm:$0xff] %vm907, %v5394
        %5459 = vst.msk [vmem:[%s1060 + $0x279] sm:$0xff] %vm907, %v5395
        %5460 = vst.msk [vmem:[%s1060 + $0x289] sm:$0xff] %vm907, %v5396
        %5461 = vst.msk [vmem:[%s1060 + $0x291] sm:$0xff] %vm907, %v5397
        %5462 = vst.msk [vmem:[%s1060 + $0x2a1] sm:$0xff] %vm907, %v5398
        %5463 = vst.msk [vmem:[%s1060 + $0x2a9] sm:$0xff] %vm907, %v5399
        %5464 = vst.msk [vmem:[%s1060 + $0x2b9] sm:$0xff] %vm907, %v5400
        %5465 = vst.msk [vmem:[%s1060 + $0x2c1] sm:$0xff] %vm907, %v5401
        %5466 = vst.msk [vmem:[%s1060 + $0x2d1] sm:$0xff] %vm907, %v5402
        %5467 = vst.msk [vmem:[%s1060 + $0x2d9] sm:$0xff] %vm907, %v5403
        %5468 = vst.msk [vmem:[%s1060 + $0x2e9] sm:$0xff] %vm907, %v5404
        %5469 = vst.msk [vmem:[%s1060 + $0x2f1] sm:$0xff] %vm907, %v5405
        %5470 = vst.msk [vmem:[%s1060 + $0x301] sm:$0xff] %vm907, %v5406
        %5471 = vst.msk [vmem:[%s1060 + $0x309] sm:$0xff] %vm907, %v5407
        %5472 = vst.msk [vmem:[%s1060 + $0x319] sm:$0xff] %vm907, %v5408
        %5473 = vst.msk [vmem:[%s1060 + $0x321] sm:$0xff] %vm907, %v5409
      $region48: #{dncnn_complex_forward.1} parent=35 // pred_fallthru
        _
      %p5474 = scmp.eq.s32.totalorder %s15, 19
      // Predicated region
      $region49: #{dncnn_complex_forward.1} parent=35 // pred_check
        %p5475 = pneg %p5474
      $region50: #{dncnn_complex_forward.1} parent=35 // pred_check_branch
        %5477 = sbr.rel (%p5475) target = $region52
      $region51: #{dncnn_complex_forward.1} parent=35 // pred_region
        %v5478 = vld [vmem:[%s0] sm:$0xff]
        %v5479 = vld [vmem:[%s0 + $0x8] sm:$0xff]
        %v5480 = vld [vmem:[%s0 + $0x10] sm:$0xff]
        %v5481 = vld [vmem:[%s0 + $0x18] sm:$0xff]
        %v5482 = vld [vmem:[%s0 + $0x20] sm:$0xff]
        %v5483 = vld [vmem:[%s0 + $0x28] sm:$0xff]
        %v5484 = vld [vmem:[%s0 + $0x30] sm:$0xff]
        %v5485 = vld [vmem:[%s0 + $0x38] sm:$0xff]
        %v5486 = vld [vmem:[%s0 + $0x40] sm:$0xff]
        %v5487 = vld [vmem:[%s0 + $0x48] sm:$0xff]
        %v5488 = vld [vmem:[%s0 + $0x50] sm:$0xff]
        %v5489 = vld [vmem:[%s0 + $0x58] sm:$0xff]
        %v5490 = vld [vmem:[%s0 + $0x60] sm:$0xff]
        %v5491 = vld [vmem:[%s0 + $0x68] sm:$0xff]
        %v5492 = vld [vmem:[%s0 + $0x70] sm:$0xff]
        %v5493 = vld [vmem:[%s0 + $0x78] sm:$0xff]
        %v5494 = vld [vmem:[%s0 + $0x80] sm:$0xff]
        %v5495 = vld [vmem:[%s0 + $0x88] sm:$0xff]
        %v5496 = vld [vmem:[%s0 + $0x90] sm:$0xff]
        %v5497 = vld [vmem:[%s0 + $0x98] sm:$0xff]
        %v5498 = vld [vmem:[%s0 + $0xa0] sm:$0xff]
        %v5499 = vld [vmem:[%s0 + $0xa8] sm:$0xff]
        %v5500 = vld [vmem:[%s0 + $0xb0] sm:$0xff]
        %v5501 = vld [vmem:[%s0 + $0xb8] sm:$0xff]
        %v5502 = vld [vmem:[%s0 + $0xc0] sm:$0xff]
        %v5503 = vld [vmem:[%s0 + $0xc8] sm:$0xff]
        %v5504 = vld [vmem:[%s0 + $0xd0] sm:$0xff]
        %v5505 = vld [vmem:[%s0 + $0xd8] sm:$0xff]
        %v5506 = vld [vmem:[%s0 + $0xe0] sm:$0xff]
        %v5507 = vld [vmem:[%s0 + $0xe8] sm:$0xff]
        %v5508 = vld [vmem:[%s0 + $0xf0] sm:$0xff]
        %v5509 = vld [vmem:[%s0 + $0xf8] sm:$0xff]
        %v5510 = vld [vmem:[%s0 + $0x100] sm:$0xff]
        %v5511 = vld [vmem:[%s0 + $0x108] sm:$0xff]
        %v5512 = vld [vmem:[%s0 + $0x110] sm:$0xff]
        %v5513 = vld [vmem:[%s0 + $0x118] sm:$0xff]
        %v5514 = vld [vmem:[%s0 + $0x120] sm:$0xff]
        %v5515 = vld [vmem:[%s0 + $0x128] sm:$0xff]
        %v5516 = vld [vmem:[%s0 + $0x130] sm:$0xff]
        %v5517 = vld [vmem:[%s0 + $0x138] sm:$0xff]
        %v5518 = vld [vmem:[%s0 + $0x140] sm:$0xff]
        %v5519 = vld [vmem:[%s0 + $0x148] sm:$0xff]
        %v5520 = vld [vmem:[%s0 + $0x150] sm:$0xff]
        %v5521 = vld [vmem:[%s0 + $0x158] sm:$0xff]
        %v5522 = vld [vmem:[%s0 + $0x160] sm:$0xff]
        %v5523 = vld [vmem:[%s0 + $0x168] sm:$0xff]
        %v5524 = vld [vmem:[%s0 + $0x170] sm:$0xff]
        %v5525 = vld [vmem:[%s0 + $0x178] sm:$0xff]
        %v5526 = vld [vmem:[%s0 + $0x180] sm:$0xff]
        %v5527 = vld [vmem:[%s0 + $0x188] sm:$0xff]
        %v5528 = vld [vmem:[%s0 + $0x190] sm:$0xff]
        %v5529 = vld [vmem:[%s0 + $0x198] sm:$0xff]
        %v5530 = vld [vmem:[%s0 + $0x1a0] sm:$0xff]
        %v5531 = vld [vmem:[%s0 + $0x1a8] sm:$0xff]
        %v5532 = vld [vmem:[%s0 + $0x1b0] sm:$0xff]
        %v5533 = vld [vmem:[%s0 + $0x1b8] sm:$0xff]
        %v5534 = vld [vmem:[%s0 + $0x1c0] sm:$0xff]
        %v5535 = vld [vmem:[%s0 + $0x1c8] sm:$0xff]
        %v5536 = vld [vmem:[%s0 + $0x1d0] sm:$0xff]
        %v5537 = vld [vmem:[%s0 + $0x1d8] sm:$0xff]
        %v5538 = vld [vmem:[%s0 + $0x1e0] sm:$0xff]
        %v5539 = vld [vmem:[%s0 + $0x1e8] sm:$0xff]
        %v5540 = vld [vmem:[%s0 + $0x1f0] sm:$0xff]
        %v5541 = vld [vmem:[%s0 + $0x1f8] sm:$0xff]
        %v5542 = vsub.f32 %v5478, %v3706
        %v5543 = vsub.f32 %v5479, %v3707
        %v5544 = vsub.f32 %v5480, %v3708
        %v5545 = vsub.f32 %v5481, %v3709
        %v5546 = vsub.f32 %v5482, %v3710
        %v5547 = vsub.f32 %v5483, %v3711
        %v5548 = vsub.f32 %v5484, %v3712
        %v5549 = vsub.f32 %v5485, %v3713
        %v5550 = vsub.f32 %v5486, %v3714
        %v5551 = vsub.f32 %v5487, %v3715
        %v5552 = vsub.f32 %v5488, %v3716
        %v5553 = vsub.f32 %v5489, %v3717
        %v5554 = vsub.f32 %v5490, %v3718
        %v5555 = vsub.f32 %v5491, %v3719
        %v5556 = vsub.f32 %v5492, %v3720
        %v5557 = vsub.f32 %v5493, %v3721
        %v5558 = vsub.f32 %v5494, %v3722
        %v5559 = vsub.f32 %v5495, %v3723
        %v5560 = vsub.f32 %v5496, %v3724
        %v5561 = vsub.f32 %v5497, %v3725
        %v5562 = vsub.f32 %v5498, %v3726
        %v5563 = vsub.f32 %v5499, %v3727
        %v5564 = vsub.f32 %v5500, %v3728
        %v5565 = vsub.f32 %v5501, %v3729
        %v5566 = vsub.f32 %v5502, %v3730
        %v5567 = vsub.f32 %v5503, %v3731
        %v5568 = vsub.f32 %v5504, %v3732
        %v5569 = vsub.f32 %v5505, %v3733
        %v5570 = vsub.f32 %v5506, %v3734
        %v5571 = vsub.f32 %v5507, %v3735
        %v5572 = vsub.f32 %v5508, %v3736
        %v5573 = vsub.f32 %v5509, %v3737
        %v5574 = vsub.f32 %v5510, %v3738
        %v5575 = vsub.f32 %v5511, %v3739
        %v5576 = vsub.f32 %v5512, %v3740
        %v5577 = vsub.f32 %v5513, %v3741
        %v5578 = vsub.f32 %v5514, %v3742
        %v5579 = vsub.f32 %v5515, %v3743
        %v5580 = vsub.f32 %v5516, %v3744
        %v5581 = vsub.f32 %v5517, %v3745
        %v5582 = vsub.f32 %v5518, %v3746
        %v5583 = vsub.f32 %v5519, %v3747
        %v5584 = vsub.f32 %v5520, %v3748
        %v5585 = vsub.f32 %v5521, %v3749
        %v5586 = vsub.f32 %v5522, %v3750
        %v5587 = vsub.f32 %v5523, %v3751
        %v5588 = vsub.f32 %v5524, %v3752
        %v5589 = vsub.f32 %v5525, %v3753
        %v5590 = vsub.f32 %v5526, %v3754
        %v5591 = vsub.f32 %v5527, %v3755
        %v5592 = vsub.f32 %v5528, %v3756
        %v5593 = vsub.f32 %v5529, %v3757
        %v5594 = vsub.f32 %v5530, %v3758
        %v5595 = vsub.f32 %v5531, %v3759
        %v5596 = vsub.f32 %v5532, %v3760
        %v5597 = vsub.f32 %v5533, %v3761
        %v5598 = vsub.f32 %v5534, %v3762
        %v5599 = vsub.f32 %v5535, %v3763
        %v5600 = vsub.f32 %v5536, %v3764
        %v5601 = vsub.f32 %v5537, %v3765
        %v5602 = vsub.f32 %v5538, %v3766
        %v5603 = vsub.f32 %v5539, %v3767
        %v5604 = vsub.f32 %v5540, %v3768
        %v5605 = vsub.f32 %v5541, %v3769
        %vm5606 = vcmask 15360
        %5607 = vst.msk [vmem:[%s4] sm:$0xff] %vm5606, %v5542
        %5608 = vst.msk [vmem:[%s4 + $0x8] sm:$0xff] %vm5606, %v5543
        %5609 = vst.msk [vmem:[%s4 + $0x10] sm:$0xff] %vm5606, %v5544
        %5610 = vst.msk [vmem:[%s4 + $0x18] sm:$0xff] %vm5606, %v5545
        %5611 = vst.msk [vmem:[%s4 + $0x20] sm:$0xff] %vm5606, %v5546
        %5612 = vst.msk [vmem:[%s4 + $0x28] sm:$0xff] %vm5606, %v5547
        %5613 = vst.msk [vmem:[%s4 + $0x30] sm:$0xff] %vm5606, %v5548
        %5614 = vst.msk [vmem:[%s4 + $0x38] sm:$0xff] %vm5606, %v5549
        %5615 = vst.msk [vmem:[%s4 + $0x40] sm:$0xff] %vm5606, %v5550
        %5616 = vst.msk [vmem:[%s4 + $0x48] sm:$0xff] %vm5606, %v5551
        %5617 = vst.msk [vmem:[%s4 + $0x50] sm:$0xff] %vm5606, %v5552
        %5618 = vst.msk [vmem:[%s4 + $0x58] sm:$0xff] %vm5606, %v5553
        %5619 = vst.msk [vmem:[%s4 + $0x60] sm:$0xff] %vm5606, %v5554
        %5620 = vst.msk [vmem:[%s4 + $0x68] sm:$0xff] %vm5606, %v5555
        %5621 = vst.msk [vmem:[%s4 + $0x70] sm:$0xff] %vm5606, %v5556
        %5622 = vst.msk [vmem:[%s4 + $0x78] sm:$0xff] %vm5606, %v5557
        %5623 = vst.msk [vmem:[%s4 + $0x80] sm:$0xff] %vm5606, %v5558
        %5624 = vst.msk [vmem:[%s4 + $0x88] sm:$0xff] %vm5606, %v5559
        %5625 = vst.msk [vmem:[%s4 + $0x90] sm:$0xff] %vm5606, %v5560
        %5626 = vst.msk [vmem:[%s4 + $0x98] sm:$0xff] %vm5606, %v5561
        %5627 = vst.msk [vmem:[%s4 + $0xa0] sm:$0xff] %vm5606, %v5562
        %5628 = vst.msk [vmem:[%s4 + $0xa8] sm:$0xff] %vm5606, %v5563
        %5629 = vst.msk [vmem:[%s4 + $0xb0] sm:$0xff] %vm5606, %v5564
        %5630 = vst.msk [vmem:[%s4 + $0xb8] sm:$0xff] %vm5606, %v5565
        %5631 = vst.msk [vmem:[%s4 + $0xc0] sm:$0xff] %vm5606, %v5566
        %5632 = vst.msk [vmem:[%s4 + $0xc8] sm:$0xff] %vm5606, %v5567
        %5633 = vst.msk [vmem:[%s4 + $0xd0] sm:$0xff] %vm5606, %v5568
        %5634 = vst.msk [vmem:[%s4 + $0xd8] sm:$0xff] %vm5606, %v5569
        %5635 = vst.msk [vmem:[%s4 + $0xe0] sm:$0xff] %vm5606, %v5570
        %5636 = vst.msk [vmem:[%s4 + $0xe8] sm:$0xff] %vm5606, %v5571
        %5637 = vst.msk [vmem:[%s4 + $0xf0] sm:$0xff] %vm5606, %v5572
        %5638 = vst.msk [vmem:[%s4 + $0xf8] sm:$0xff] %vm5606, %v5573
        %5639 = vst.msk [vmem:[%s4 + $0x100] sm:$0xff] %vm5606, %v5574
        %5640 = vst.msk [vmem:[%s4 + $0x108] sm:$0xff] %vm5606, %v5575
        %5641 = vst.msk [vmem:[%s4 + $0x110] sm:$0xff] %vm5606, %v5576
        %5642 = vst.msk [vmem:[%s4 + $0x118] sm:$0xff] %vm5606, %v5577
        %5643 = vst.msk [vmem:[%s4 + $0x120] sm:$0xff] %vm5606, %v5578
        %5644 = vst.msk [vmem:[%s4 + $0x128] sm:$0xff] %vm5606, %v5579
        %5645 = vst.msk [vmem:[%s4 + $0x130] sm:$0xff] %vm5606, %v5580
        %5646 = vst.msk [vmem:[%s4 + $0x138] sm:$0xff] %vm5606, %v5581
        %5647 = vst.msk [vmem:[%s4 + $0x140] sm:$0xff] %vm5606, %v5582
        %5648 = vst.msk [vmem:[%s4 + $0x148] sm:$0xff] %vm5606, %v5583
        %5649 = vst.msk [vmem:[%s4 + $0x150] sm:$0xff] %vm5606, %v5584
        %5650 = vst.msk [vmem:[%s4 + $0x158] sm:$0xff] %vm5606, %v5585
        %5651 = vst.msk [vmem:[%s4 + $0x160] sm:$0xff] %vm5606, %v5586
        %5652 = vst.msk [vmem:[%s4 + $0x168] sm:$0xff] %vm5606, %v5587
        %5653 = vst.msk [vmem:[%s4 + $0x170] sm:$0xff] %vm5606, %v5588
        %5654 = vst.msk [vmem:[%s4 + $0x178] sm:$0xff] %vm5606, %v5589
        %5655 = vst.msk [vmem:[%s4 + $0x180] sm:$0xff] %vm5606, %v5590
        %5656 = vst.msk [vmem:[%s4 + $0x188] sm:$0xff] %vm5606, %v5591
        %5657 = vst.msk [vmem:[%s4 + $0x190] sm:$0xff] %vm5606, %v5592
        %5658 = vst.msk [vmem:[%s4 + $0x198] sm:$0xff] %vm5606, %v5593
        %5659 = vst.msk [vmem:[%s4 + $0x1a0] sm:$0xff] %vm5606, %v5594
        %5660 = vst.msk [vmem:[%s4 + $0x1a8] sm:$0xff] %vm5606, %v5595
        %5661 = vst.msk [vmem:[%s4 + $0x1b0] sm:$0xff] %vm5606, %v5596
        %5662 = vst.msk [vmem:[%s4 + $0x1b8] sm:$0xff] %vm5606, %v5597
        %5663 = vst.msk [vmem:[%s4 + $0x1c0] sm:$0xff] %vm5606, %v5598
        %5664 = vst.msk [vmem:[%s4 + $0x1c8] sm:$0xff] %vm5606, %v5599
        %5665 = vst.msk [vmem:[%s4 + $0x1d0] sm:$0xff] %vm5606, %v5600
        %5666 = vst.msk [vmem:[%s4 + $0x1d8] sm:$0xff] %vm5606, %v5601
        %5667 = vst.msk [vmem:[%s4 + $0x1e0] sm:$0xff] %vm5606, %v5602
        %5668 = vst.msk [vmem:[%s4 + $0x1e8] sm:$0xff] %vm5606, %v5603
        %5669 = vst.msk [vmem:[%s4 + $0x1f0] sm:$0xff] %vm5606, %v5604
        %5670 = vst.msk [vmem:[%s4 + $0x1f8] sm:$0xff] %vm5606, %v5605
      $region52: #{dncnn_complex_forward.1} parent=35 // pred_fallthru
        _
      // Predicated region
      $region53: #{dncnn_complex_forward.1} parent=35 // pred_check
        %p5671 = pneg %p127
      $region54: #{dncnn_complex_forward.1} parent=35 // pred_check_branch
        %5673 = sbr.rel (%p5671) target = $region56
      $region55: #{dncnn_complex_forward.1} parent=35 // pred_region
        _
      $region56: #{dncnn_complex_forward.1} parent=35 // pred_fallthru
        _
      // Predicated region
      $region57: #{dncnn_complex_forward.1} parent=35 // pred_check
        %p5674 = pneg %p127
      $region58: #{dncnn_complex_forward.1} parent=35 // pred_check_branch
        %5676 = sbr.rel (%p5674) target = $region60
      $region59: #{dncnn_complex_forward.1} parent=35 // pred_region
        _
      $region60: #{dncnn_complex_forward.1} parent=35 // pred_fallthru
        _
    $region36: #{dncnn_complex_forward.1} parent=5 // pred_fallthru
      _
    %p5677 = scmp.le.s32.totalorder 2, %s10
    // Predicated region
    $region61: #{dncnn_complex_forward.1} parent=5 // pred_check
      %p5678 = pneg %p5677
    $region62: #{dncnn_complex_forward.1} parent=5 // pred_check_branch
      %5680 = sbr.rel (%p5678) target = $region64
    $region63: #{dncnn_complex_forward.1} parent=5 // pred_region
      %s5681 = ssub.s32 %s10, 2
    $region64: #{dncnn_complex_forward.1} parent=5 // pred_fallthru
      _
  $region6: #{dncnn_complex_forward.1} parent=0 // loop_footer
    %s14 = sadd.s32 1, %s10
  $region7: #{dncnn_complex_forward.1} parent=0 // loop_footer_branch
    %9 = sbr.rel target = $region3
  $region8: #{dncnn_complex_forward.1} parent=0 // loop_exit
    _

</llo_original>
